<compile_context>
chip_gen: v7x
topology: tpu7x:2x2x1
jax: 0.10.0
libtpu: 0.0.40
codegen_flags: <defaults>
</compile_context>

<pallas_src>
import numpy as np
import jax
import jax.numpy as jnp
from jax.experimental import pallas as pl
from jax.experimental.pallas import tpu as pltpu

HIDDEN = 100        # PyTorch hidden_size
HP = 128            # lane-padded hidden
INPUT_SIZE = 14
OUTPUT_SIZE = 1
SEQ_LEN = 8

# gate slot layout inside the padded 4*HP gate axis: [i | f | o | g]
# PyTorch's row-block order in the LSTM weights is [i, f, g, o].
GATE_ORDER = (0, 1, 3, 2)   # slot s takes torch gate GATE_ORDER[s]


def lstm_kernel(x_ref, wih0_ref, b0_ref, rf_ref, b1_ref, wfc_ref, bfc_ref, y_ref):
    hp = HP
    seq = x_ref.shape[0]

    # Hoisted layer-0 input projection for all timesteps (off the serial chain).
    gx = (jnp.dot(x_ref[...], wih0_ref[...],
                  preferred_element_type=jnp.float32) + b0_ref[...])
    b1 = b1_ref[...]

    # Loop-carried state lives purely in vregs (~5 vregs total).
    rec0 = jnp.zeros((1, 4 * hp), jnp.float32)   # h0(t-1) @ Whh0^T ; zero at t=0
    h1 = jnp.zeros((1, hp), jnp.float32)
    c0 = jnp.zeros((1, hp), jnp.float32)
    c1 = jnp.zeros((1, hp), jnp.float32)

    # Fully unrolled time loop (seq is a small static constant) so the LLO
    # scheduler can overlap layer-0(t+1) with layer-1(t).
    for t in range(seq):
        # ---- layer 0 gates for step t (recurrent term came from last step's fused dot)
        g0 = gx[t:t + 1, :] + rec0
        s0 = jax.nn.sigmoid(g0[:, :3 * hp])      # [i | f | o] in one EUP pass
        u0 = jnp.tanh(g0[:, 3 * hp:])            # g gate
        c0 = s0[:, hp:2 * hp] * c0 + s0[:, :hp] * u0
        h0 = s0[:, 2 * hp:] * jnp.tanh(c0)

        # ---- single fused recurrent MXU dot (bf16 in, f32 acc):
        #   [h0(t) | h1(t-1)] @ [[Whh0^T, Wih1^T], [0, Whh1^T]]
        lhs = jnp.concatenate([h0, h1], axis=1).astype(jnp.bfloat16)
        fo = jnp.dot(lhs, rf_ref[...], preferred_element_type=jnp.float32)
        rec0 = fo[:, :4 * hp]                    # layer-0 recurrent part for step t+1
        g1 = fo[:, 4 * hp:] + b1                 # layer-1 gates for step t
        s1 = jax.nn.sigmoid(g1[:, :3 * hp])
        u1 = jnp.tanh(g1[:, 3 * hp:])
        c1 = s1[:, hp:2 * hp] * c1 + s1[:, :hp] * u1
        h1 = s1[:, 2 * hp:] * jnp.tanh(c1)

    # final Linear(hidden -> 1) on the last timestep's h1 (== output[-1])
    y_ref[...] = (jnp.sum(h1 * wfc_ref[...], axis=1, keepdims=True) + bfc_ref[...])


def lstm_forward(x, wih0_p, b0_p, rf_p, b1_p, wfc_p, bfc_p):
    vmem = pl.BlockSpec(memory_space=pltpu.MemorySpace.VMEM)
    return pl.pallas_call(
        lstm_kernel,
        out_shape=jax.ShapeDtypeStruct((1, 1), jnp.float32),
        in_specs=[vmem] * 7,
        out_specs=vmem,
    )(x, wih0_p, b0_p, rf_p, b1_p, wfc_p, bfc_p)


# ---------- parameter construction / padding helpers (plain numpy glue) ----------
def pad_ih(W, H, HP):
    # W: (4H, D) torch-order -> (D, 4*HP) with gate slot order [i, f, o, g]
    D = W.shape[1]
    out = np.zeros((D, 4 * HP), np.float32)
    for s, g in enumerate(GATE_ORDER):
        out[:, s * HP:s * HP + H] = np.asarray(W[g * H:(g + 1) * H, :]).T
    return out


def pad_hh(W, H, HP):
    # W: (4H, H) torch-order -> (HP, 4*HP) with gate slot order [i, f, o, g]
    out = np.zeros((HP, 4 * HP), np.float32)
    for s, g in enumerate(GATE_ORDER):
        out[:H, s * HP:s * HP + H] = np.asarray(W[g * H:(g + 1) * H, :]).T
    return out


def pad_bias(b, H, HP):
    out = np.zeros((1, 4 * HP), np.float32)
    for s, g in enumerate(GATE_ORDER):
        out[0, s * HP:s * HP + H] = np.asarray(b[g * H:(g + 1) * H])
    return out


def ref_forward(x, p):
    # pure-JAX f32 reference mirroring torch nn.LSTM(num_layers=2) + nn.Linear
    H = HIDDEN
    h0 = jnp.zeros((1, H)); c0 = jnp.zeros((1, H))
    h1 = jnp.zeros((1, H)); c1 = jnp.zeros((1, H))
    for t in range(x.shape[0]):
        xt = x[t:t + 1]
        g = xt @ p['W_ih0'].T + h0 @ p['W_hh0'].T + p['b_ih0'] + p['b_hh0']
        i, f, gg, o = jnp.split(g, 4, axis=1)
        c0 = jax.nn.sigmoid(f) * c0 + jax.nn.sigmoid(i) * jnp.tanh(gg)
        h0 = jax.nn.sigmoid(o) * jnp.tanh(c0)
        g = h0 @ p['W_ih1'].T + h1 @ p['W_hh1'].T + p['b_ih1'] + p['b_hh1']
        i, f, gg, o = jnp.split(g, 4, axis=1)
        c1 = jax.nn.sigmoid(f) * c1 + jax.nn.sigmoid(i) * jnp.tanh(gg)
        h1 = jax.nn.sigmoid(o) * jnp.tanh(c1)
    out = h1 @ p['W_fc'].T + p['b_fc']
    return out[0]   # shape (1,) == output[-1]


if __name__ == "__main__":
    key = jax.random.PRNGKey(0)
    ks = jax.random.split(key, 12)
    H, I = HIDDEN, INPUT_SIZE
    k_lstm = 1.0 / np.sqrt(H)
    k_fc = 1.0 / np.sqrt(H)

    def u(k, shape, bound):
        return jax.random.uniform(k, shape, jnp.float32, -bound, bound)

    params = {
        'W_ih0': u(ks[0], (4 * H, I), k_lstm),
        'W_hh0': u(ks[1], (4 * H, H), k_lstm),
        'b_ih0': u(ks[2], (4 * H,), k_lstm),
        'b_hh0': u(ks[3], (4 * H,), k_lstm),
        'W_ih1': u(ks[4], (4 * H, H), k_lstm),
        'W_hh1': u(ks[5], (4 * H, H), k_lstm),
        'b_ih1': u(ks[6], (4 * H,), k_lstm),
        'b_hh1': u(ks[7], (4 * H,), k_lstm),
        'W_fc':  u(ks[8], (OUTPUT_SIZE, H), k_fc),
        'b_fc':  u(ks[9], (OUTPUT_SIZE,), k_fc),
    }

    # padded / transposed / gate-reordered weights for the kernel
    wih0_p = jnp.asarray(pad_ih(params['W_ih0'], H, HP))                       # (I, 4*HP) f32
    b0_p = jnp.asarray(pad_bias(np.asarray(params['b_ih0'] + params['b_hh0']), H, HP))

    # fused recurrent weight: [[Whh0^T, Wih1^T], [0, Whh1^T]]  -> bf16 for the MXU
    rf_np = np.zeros((2 * HP, 8 * HP), np.float32)
    rf_np[:HP, :4 * HP] = pad_hh(params['W_hh0'], H, HP)
    rf_np[:HP, 4 * HP:] = pad_hh(params['W_ih1'], H, HP)   # layer-1 input is hidden-sized
    rf_np[HP:, 4 * HP:] = pad_hh(params['W_hh1'], H, HP)
    rf_p = jnp.asarray(rf_np, dtype=jnp.bfloat16)

    b1_p = jnp.asarray(pad_bias(np.asarray(params['b_ih1'] + params['b_hh1']), H, HP))
    wfc_p = jnp.zeros((1, HP), jnp.float32).at[0, :H].set(params['W_fc'][0])
    bfc_p = params['b_fc'].reshape(1, 1).astype(jnp.float32)

    x = jax.random.normal(ks[10], (SEQ_LEN, I), jnp.float32)

    y = lstm_forward(x, wih0_p, b0_p, rf_p, b1_p, wfc_p, bfc_p)
    y = jax.block_until_ready(y)
    y_kernel = y.reshape(OUTPUT_SIZE)              # == output[-1], shape (1,)

    y_ref = ref_forward(x, params)
    # bf16 recurrent MXU inputs (f32 accumulation) -> relaxed tolerance vs f32 ref.
    np.testing.assert_allclose(np.asarray(y_kernel), np.asarray(y_ref),
                               rtol=2e-2, atol=2e-2)
    print("KERNEL_OK")
</pallas_src>

<mosaic_0001>
module attributes {stable_mosaic.version = 11 : i64} {
  func.func @lstm_kernel(%arg0: memref<8x14xf32, #tpu.memory_space<vmem>>, %arg1: memref<14x512xf32, #tpu.memory_space<vmem>>, %arg2: memref<1x512xf32, #tpu.memory_space<vmem>>, %arg3: memref<256x1024xbf16, #tpu.memory_space<vmem>>, %arg4: memref<1x512xf32, #tpu.memory_space<vmem>>, %arg5: memref<1x128xf32, #tpu.memory_space<vmem>>, %arg6: memref<1x1xf32, #tpu.memory_space<vmem>>, %arg7: memref<1x1xf32, #tpu.memory_space<vmem>>) attributes {dimension_semantics = [], scalar_prefetch = 0 : i64, scratch_operands = 0 : i64, tpu.core_type = #tpu.core_type<tc>} {
    %c0 = arith.constant 0 : index
    %c0_0 = arith.constant 0 : index
    %0 = vector.load %arg0[%c0, %c0_0] : memref<8x14xf32, #tpu.memory_space<vmem>>, vector<8x14xf32>
    %c0_1 = arith.constant 0 : index
    %c0_2 = arith.constant 0 : index
    %1 = vector.load %arg1[%c0_1, %c0_2] : memref<14x512xf32, #tpu.memory_space<vmem>>, vector<14x512xf32>
    %cst = arith.constant dense<0.000000e+00> : vector<8x512xf32>
    %2 = tpu.matmul %0, %1, %cst {dimension_numbers = #tpu.dot_dimension_numbers<[1], [0], [0], [1], [0, 0, 1, 1], [], []>} : vector<8x14xf32>, vector<14x512xf32>, vector<8x512xf32> -> vector<8x512xf32>
    %c0_3 = arith.constant 0 : index
    %c0_4 = arith.constant 0 : index
    %3 = vector.load %arg2[%c0_3, %c0_4] : memref<1x512xf32, #tpu.memory_space<vmem>>, vector<1x512xf32>
    %4 = vector.broadcast %3 : vector<1x512xf32> to vector<8x512xf32>
    %5 = arith.addf %2, %4 : vector<8x512xf32>
    %c0_5 = arith.constant 0 : index
    %c0_6 = arith.constant 0 : index
    %6 = vector.load %arg4[%c0_5, %c0_6] : memref<1x512xf32, #tpu.memory_space<vmem>>, vector<1x512xf32>
    %cst_7 = arith.constant 0.000000e+00 : f32
    %7 = vector.broadcast %cst_7 : f32 to vector<1x512xf32>
    %cst_8 = arith.constant 0.000000e+00 : f32
    %8 = vector.broadcast %cst_8 : f32 to vector<1x128xf32>
    %cst_9 = arith.constant 0.000000e+00 : f32
    %9 = vector.broadcast %cst_9 : f32 to vector<1x128xf32>
    %cst_10 = arith.constant 0.000000e+00 : f32
    %10 = vector.broadcast %cst_10 : f32 to vector<1x128xf32>
    %11 = vector.extract_strided_slice %5 {offsets = [0, 0], sizes = [1, 512], strides = [1, 1]} : vector<8x512xf32> to vector<1x512xf32>
    %12 = arith.addf %11, %7 : vector<1x512xf32>
    %13 = vector.extract_strided_slice %12 {offsets = [0, 0], sizes = [1, 384], strides = [1, 1]} : vector<1x512xf32> to vector<1x384xf32>
    %14 = arith.negf %13 : vector<1x384xf32>
    %15 = math.exp %14 : vector<1x384xf32>
    %cst_11 = arith.constant 1.000000e+00 : f32
    %16 = vector.broadcast %cst_11 : f32 to vector<1x384xf32>
    %17 = arith.addf %16, %15 : vector<1x384xf32>
    %18 = arith.divf %16, %17 : vector<1x384xf32>
    %19 = vector.extract_strided_slice %12 {offsets = [0, 384], sizes = [1, 128], strides = [1, 1]} : vector<1x512xf32> to vector<1x128xf32>
    %20 = math.tanh %19 : vector<1x128xf32>
    %21 = vector.extract_strided_slice %18 {offsets = [0, 128], sizes = [1, 128], strides = [1, 1]} : vector<1x384xf32> to vector<1x128xf32>
    %22 = arith.mulf %21, %9 : vector<1x128xf32>
    %23 = vector.extract_strided_slice %18 {offsets = [0, 0], sizes = [1, 128], strides = [1, 1]} : vector<1x384xf32> to vector<1x128xf32>
    %24 = arith.mulf %23, %20 : vector<1x128xf32>
    %25 = arith.addf %22, %24 : vector<1x128xf32>
    %26 = vector.extract_strided_slice %18 {offsets = [0, 256], sizes = [1, 128], strides = [1, 1]} : vector<1x384xf32> to vector<1x128xf32>
    %27 = math.tanh %25 : vector<1x128xf32>
    %28 = arith.mulf %26, %27 : vector<1x128xf32>
    %29 = tpu.concatenate %28, %8 in 1 : vector<1x128xf32>, vector<1x128xf32> -> vector<1x256xf32>
    %30 = arith.truncf %29 : vector<1x256xf32> to vector<1x256xbf16>
    %c0_12 = arith.constant 0 : index
    %c0_13 = arith.constant 0 : index
    %31 = vector.load %arg3[%c0_12, %c0_13] : memref<256x1024xbf16, #tpu.memory_space<vmem>>, vector<256x1024xbf16>
    %cst_14 = arith.constant dense<0.000000e+00> : vector<1x1024xf32>
    %32 = tpu.matmul %30, %31, %cst_14 {dimension_numbers = #tpu.dot_dimension_numbers<[1], [0], [0], [1], [0, 0, 1, 1], [], []>} : vector<1x256xbf16>, vector<256x1024xbf16>, vector<1x1024xf32> -> vector<1x1024xf32>
    %33 = vector.extract_strided_slice %32 {offsets = [0, 0], sizes = [1, 512], strides = [1, 1]} : vector<1x1024xf32> to vector<1x512xf32>
    %34 = vector.extract_strided_slice %32 {offsets = [0, 512], sizes = [1, 512], strides = [1, 1]} : vector<1x1024xf32> to vector<1x512xf32>
    %35 = arith.addf %34, %6 : vector<1x512xf32>
    %36 = vector.extract_strided_slice %35 {offsets = [0, 0], sizes = [1, 384], strides = [1, 1]} : vector<1x512xf32> to vector<1x384xf32>
    %37 = arith.negf %36 : vector<1x384xf32>
    %38 = math.exp %37 : vector<1x384xf32>
    %cst_15 = arith.constant 1.000000e+00 : f32
    %39 = vector.broadcast %cst_15 : f32 to vector<1x384xf32>
    %40 = arith.addf %39, %38 : vector<1x384xf32>
    %41 = arith.divf %39, %40 : vector<1x384xf32>
    %42 = vector.extract_strided_slice %35 {offsets = [0, 384], sizes = [1, 128], strides = [1, 1]} : vector<1x512xf32> to vector<1x128xf32>
    %43 = math.tanh %42 : vector<1x128xf32>
    %44 = vector.extract_strided_slice %41 {offsets = [0, 128], sizes = [1, 128], strides = [1, 1]} : vector<1x384xf32> to vector<1x128xf32>
    %45 = arith.mulf %44, %10 : vector<1x128xf32>
    %46 = vector.extract_strided_slice %41 {offsets = [0, 0], sizes = [1, 128], strides = [1, 1]} : vector<1x384xf32> to vector<1x128xf32>
    %47 = arith.mulf %46, %43 : vector<1x128xf32>
    %48 = arith.addf %45, %47 : vector<1x128xf32>
    %49 = vector.extract_strided_slice %41 {offsets = [0, 256], sizes = [1, 128], strides = [1, 1]} : vector<1x384xf32> to vector<1x128xf32>
    %50 = math.tanh %48 : vector<1x128xf32>
    %51 = arith.mulf %49, %50 : vector<1x128xf32>
    %52 = vector.extract_strided_slice %5 {offsets = [1, 0], sizes = [1, 512], strides = [1, 1]} : vector<8x512xf32> to vector<1x512xf32>
    %53 = arith.addf %52, %33 : vector<1x512xf32>
    %54 = vector.extract_strided_slice %53 {offsets = [0, 0], sizes = [1, 384], strides = [1, 1]} : vector<1x512xf32> to vector<1x384xf32>
    %55 = arith.negf %54 : vector<1x384xf32>
    %56 = math.exp %55 : vector<1x384xf32>
    %cst_16 = arith.constant 1.000000e+00 : f32
    %57 = vector.broadcast %cst_16 : f32 to vector<1x384xf32>
    %58 = arith.addf %57, %56 : vector<1x384xf32>
    %59 = arith.divf %57, %58 : vector<1x384xf32>
    %60 = vector.extract_strided_slice %53 {offsets = [0, 384], sizes = [1, 128], strides = [1, 1]} : vector<1x512xf32> to vector<1x128xf32>
    %61 = math.tanh %60 : vector<1x128xf32>
    %62 = vector.extract_strided_slice %59 {offsets = [0, 128], sizes = [1, 128], strides = [1, 1]} : vector<1x384xf32> to vector<1x128xf32>
    %63 = arith.mulf %62, %25 : vector<1x128xf32>
    %64 = vector.extract_strided_slice %59 {offsets = [0, 0], sizes = [1, 128], strides = [1, 1]} : vector<1x384xf32> to vector<1x128xf32>
    %65 = arith.mulf %64, %61 : vector<1x128xf32>
    %66 = arith.addf %63, %65 : vector<1x128xf32>
    %67 = vector.extract_strided_slice %59 {offsets = [0, 256], sizes = [1, 128], strides = [1, 1]} : vector<1x384xf32> to vector<1x128xf32>
    %68 = math.tanh %66 : vector<1x128xf32>
    %69 = arith.mulf %67, %68 : vector<1x128xf32>
    %70 = tpu.concatenate %69, %51 in 1 : vector<1x128xf32>, vector<1x128xf32> -> vector<1x256xf32>
    %71 = arith.truncf %70 : vector<1x256xf32> to vector<1x256xbf16>
    %c0_17 = arith.constant 0 : index
    %c0_18 = arith.constant 0 : index
    %72 = vector.load %arg3[%c0_17, %c0_18] : memref<256x1024xbf16, #tpu.memory_space<vmem>>, vector<256x1024xbf16>
    %cst_19 = arith.constant dense<0.000000e+00> : vector<1x1024xf32>
    %73 = tpu.matmul %71, %72, %cst_19 {dimension_numbers = #tpu.dot_dimension_numbers<[1], [0], [0], [1], [0, 0, 1, 1], [], []>} : vector<1x256xbf16>, vector<256x1024xbf16>, vector<1x1024xf32> -> vector<1x1024xf32>
    %74 = vector.extract_strided_slice %73 {offsets = [0, 0], sizes = [1, 512], strides = [1, 1]} : vector<1x1024xf32> to vector<1x512xf32>
    %75 = vector.extract_strided_slice %73 {offsets = [0, 512], sizes = [1, 512], strides = [1, 1]} : vector<1x1024xf32> to vector<1x512xf32>
    %76 = arith.addf %75, %6 : vector<1x512xf32>
    %77 = vector.extract_strided_slice %76 {offsets = [0, 0], sizes = [1, 384], strides = [1, 1]} : vector<1x512xf32> to vector<1x384xf32>
    %78 = arith.negf %77 : vector<1x384xf32>
    %79 = math.exp %78 : vector<1x384xf32>
    %cst_20 = arith.constant 1.000000e+00 : f32
    %80 = vector.broadcast %cst_20 : f32 to vector<1x384xf32>
    %81 = arith.addf %80, %79 : vector<1x384xf32>
    %82 = arith.divf %80, %81 : vector<1x384xf32>
    %83 = vector.extract_strided_slice %76 {offsets = [0, 384], sizes = [1, 128], strides = [1, 1]} : vector<1x512xf32> to vector<1x128xf32>
    %84 = math.tanh %83 : vector<1x128xf32>
    %85 = vector.extract_strided_slice %82 {offsets = [0, 128], sizes = [1, 128], strides = [1, 1]} : vector<1x384xf32> to vector<1x128xf32>
    %86 = arith.mulf %85, %48 : vector<1x128xf32>
    %87 = vector.extract_strided_slice %82 {offsets = [0, 0], sizes = [1, 128], strides = [1, 1]} : vector<1x384xf32> to vector<1x128xf32>
    %88 = arith.mulf %87, %84 : vector<1x128xf32>
    %89 = arith.addf %86, %88 : vector<1x128xf32>
    %90 = vector.extract_strided_slice %82 {offsets = [0, 256], sizes = [1, 128], strides = [1, 1]} : vector<1x384xf32> to vector<1x128xf32>
    %91 = math.tanh %89 : vector<1x128xf32>
    %92 = arith.mulf %90, %91 : vector<1x128xf32>
    %93 = vector.extract_strided_slice %5 {offsets = [2, 0], sizes = [1, 512], strides = [1, 1]} : vector<8x512xf32> to vector<1x512xf32>
    %94 = arith.addf %93, %74 : vector<1x512xf32>
    %95 = vector.extract_strided_slice %94 {offsets = [0, 0], sizes = [1, 384], strides = [1, 1]} : vector<1x512xf32> to vector<1x384xf32>
    %96 = arith.negf %95 : vector<1x384xf32>
    %97 = math.exp %96 : vector<1x384xf32>
    %cst_21 = arith.constant 1.000000e+00 : f32
    %98 = vector.broadcast %cst_21 : f32 to vector<1x384xf32>
    %99 = arith.addf %98, %97 : vector<1x384xf32>
    %100 = arith.divf %98, %99 : vector<1x384xf32>
    %101 = vector.extract_strided_slice %94 {offsets = [0, 384], sizes = [1, 128], strides = [1, 1]} : vector<1x512xf32> to vector<1x128xf32>
    %102 = math.tanh %101 : vector<1x128xf32>
    %103 = vector.extract_strided_slice %100 {offsets = [0, 128], sizes = [1, 128], strides = [1, 1]} : vector<1x384xf32> to vector<1x128xf32>
    %104 = arith.mulf %103, %66 : vector<1x128xf32>
    %105 = vector.extract_strided_slice %100 {offsets = [0, 0], sizes = [1, 128], strides = [1, 1]} : vector<1x384xf32> to vector<1x128xf32>
    %106 = arith.mulf %105, %102 : vector<1x128xf32>
    %107 = arith.addf %104, %106 : vector<1x128xf32>
    %108 = vector.extract_strided_slice %100 {offsets = [0, 256], sizes = [1, 128], strides = [1, 1]} : vector<1x384xf32> to vector<1x128xf32>
    %109 = math.tanh %107 : vector<1x128xf32>
    %110 = arith.mulf %108, %109 : vector<1x128xf32>
    %111 = tpu.concatenate %110, %92 in 1 : vector<1x128xf32>, vector<1x128xf32> -> vector<1x256xf32>
    %112 = arith.truncf %111 : vector<1x256xf32> to vector<1x256xbf16>
    %c0_22 = arith.constant 0 : index
    %c0_23 = arith.constant 0 : index
    %113 = vector.load %arg3[%c0_22, %c0_23] : memref<256x1024xbf16, #tpu.memory_space<vmem>>, vector<256x1024xbf16>
    %cst_24 = arith.constant dense<0.000000e+00> : vector<1x1024xf32>
    %114 = tpu.matmul %112, %113, %cst_24 {dimension_numbers = #tpu.dot_dimension_numbers<[1], [0], [0], [1], [0, 0, 1, 1], [], []>} : vector<1x256xbf16>, vector<256x1024xbf16>, vector<1x1024xf32> -> vector<1x1024xf32>
    %115 = vector.extract_strided_slice %114 {offsets = [0, 0], sizes = [1, 512], strides = [1, 1]} : vector<1x1024xf32> to vector<1x512xf32>
    %116 = vector.extract_strided_slice %114 {offsets = [0, 512], sizes = [1, 512], strides = [1, 1]} : vector<1x1024xf32> to vector<1x512xf32>
    %117 = arith.addf %116, %6 : vector<1x512xf32>
    %118 = vector.extract_strided_slice %117 {offsets = [0, 0], sizes = [1, 384], strides = [1, 1]} : vector<1x512xf32> to vector<1x384xf32>
    %119 = arith.negf %118 : vector<1x384xf32>
    %120 = math.exp %119 : vector<1x384xf32>
    %cst_25 = arith.constant 1.000000e+00 : f32
    %121 = vector.broadcast %cst_25 : f32 to vector<1x384xf32>
    %122 = arith.addf %121, %120 : vector<1x384xf32>
    %123 = arith.divf %121, %122 : vector<1x384xf32>
    %124 = vector.extract_strided_slice %117 {offsets = [0, 384], sizes = [1, 128], strides = [1, 1]} : vector<1x512xf32> to vector<1x128xf32>
    %125 = math.tanh %124 : vector<1x128xf32>
    %126 = vector.extract_strided_slice %123 {offsets = [0, 128], sizes = [1, 128], strides = [1, 1]} : vector<1x384xf32> to vector<1x128xf32>
    %127 = arith.mulf %126, %89 : vector<1x128xf32>
    %128 = vector.extract_strided_slice %123 {offsets = [0, 0], sizes = [1, 128], strides = [1, 1]} : vector<1x384xf32> to vector<1x128xf32>
    %129 = arith.mulf %128, %125 : vector<1x128xf32>
    %130 = arith.addf %127, %129 : vector<1x128xf32>
    %131 = vector.extract_strided_slice %123 {offsets = [0, 256], sizes = [1, 128], strides = [1, 1]} : vector<1x384xf32> to vector<1x128xf32>
    %132 = math.tanh %130 : vector<1x128xf32>
    %133 = arith.mulf %131, %132 : vector<1x128xf32>
    %134 = vector.extract_strided_slice %5 {offsets = [3, 0], sizes = [1, 512], strides = [1, 1]} : vector<8x512xf32> to vector<1x512xf32>
    %135 = arith.addf %134, %115 : vector<1x512xf32>
    %136 = vector.extract_strided_slice %135 {offsets = [0, 0], sizes = [1, 384], strides = [1, 1]} : vector<1x512xf32> to vector<1x384xf32>
    %137 = arith.negf %136 : vector<1x384xf32>
    %138 = math.exp %137 : vector<1x384xf32>
    %cst_26 = arith.constant 1.000000e+00 : f32
    %139 = vector.broadcast %cst_26 : f32 to vector<1x384xf32>
    %140 = arith.addf %139, %138 : vector<1x384xf32>
    %141 = arith.divf %139, %140 : vector<1x384xf32>
    %142 = vector.extract_strided_slice %135 {offsets = [0, 384], sizes = [1, 128], strides = [1, 1]} : vector<1x512xf32> to vector<1x128xf32>
    %143 = math.tanh %142 : vector<1x128xf32>
    %144 = vector.extract_strided_slice %141 {offsets = [0, 128], sizes = [1, 128], strides = [1, 1]} : vector<1x384xf32> to vector<1x128xf32>
    %145 = arith.mulf %144, %107 : vector<1x128xf32>
    %146 = vector.extract_strided_slice %141 {offsets = [0, 0], sizes = [1, 128], strides = [1, 1]} : vector<1x384xf32> to vector<1x128xf32>
    %147 = arith.mulf %146, %143 : vector<1x128xf32>
    %148 = arith.addf %145, %147 : vector<1x128xf32>
    %149 = vector.extract_strided_slice %141 {offsets = [0, 256], sizes = [1, 128], strides = [1, 1]} : vector<1x384xf32> to vector<1x128xf32>
    %150 = math.tanh %148 : vector<1x128xf32>
    %151 = arith.mulf %149, %150 : vector<1x128xf32>
    %152 = tpu.concatenate %151, %133 in 1 : vector<1x128xf32>, vector<1x128xf32> -> vector<1x256xf32>
    %153 = arith.truncf %152 : vector<1x256xf32> to vector<1x256xbf16>
    %c0_27 = arith.constant 0 : index
    %c0_28 = arith.constant 0 : index
    %154 = vector.load %arg3[%c0_27, %c0_28] : memref<256x1024xbf16, #tpu.memory_space<vmem>>, vector<256x1024xbf16>
    %cst_29 = arith.constant dense<0.000000e+00> : vector<1x1024xf32>
    %155 = tpu.matmul %153, %154, %cst_29 {dimension_numbers = #tpu.dot_dimension_numbers<[1], [0], [0], [1], [0, 0, 1, 1], [], []>} : vector<1x256xbf16>, vector<256x1024xbf16>, vector<1x1024xf32> -> vector<1x1024xf32>
    %156 = vector.extract_strided_slice %155 {offsets = [0, 0], sizes = [1, 512], strides = [1, 1]} : vector<1x1024xf32> to vector<1x512xf32>
    %157 = vector.extract_strided_slice %155 {offsets = [0, 512], sizes = [1, 512], strides = [1, 1]} : vector<1x1024xf32> to vector<1x512xf32>
    %158 = arith.addf %157, %6 : vector<1x512xf32>
    %159 = vector.extract_strided_slice %158 {offsets = [0, 0], sizes = [1, 384], strides = [1, 1]} : vector<1x512xf32> to vector<1x384xf32>
    %160 = arith.negf %159 : vector<1x384xf32>
    %161 = math.exp %160 : vector<1x384xf32>
    %cst_30 = arith.constant 1.000000e+00 : f32
    %162 = vector.broadcast %cst_30 : f32 to vector<1x384xf32>
    %163 = arith.addf %162, %161 : vector<1x384xf32>
    %164 = arith.divf %162, %163 : vector<1x384xf32>
    %165 = vector.extract_strided_slice %158 {offsets = [0, 384], sizes = [1, 128], strides = [1, 1]} : vector<1x512xf32> to vector<1x128xf32>
    %166 = math.tanh %165 : vector<1x128xf32>
    %167 = vector.extract_strided_slice %164 {offsets = [0, 128], sizes = [1, 128], strides = [1, 1]} : vector<1x384xf32> to vector<1x128xf32>
    %168 = arith.mulf %167, %130 : vector<1x128xf32>
    %169 = vector.extract_strided_slice %164 {offsets = [0, 0], sizes = [1, 128], strides = [1, 1]} : vector<1x384xf32> to vector<1x128xf32>
    %170 = arith.mulf %169, %166 : vector<1x128xf32>
    %171 = arith.addf %168, %170 : vector<1x128xf32>
    %172 = vector.extract_strided_slice %164 {offsets = [0, 256], sizes = [1, 128], strides = [1, 1]} : vector<1x384xf32> to vector<1x128xf32>
    %173 = math.tanh %171 : vector<1x128xf32>
    %174 = arith.mulf %172, %173 : vector<1x128xf32>
    %175 = vector.extract_strided_slice %5 {offsets = [4, 0], sizes = [1, 512], strides = [1, 1]} : vector<8x512xf32> to vector<1x512xf32>
    %176 = arith.addf %175, %156 : vector<1x512xf32>
    %177 = vector.extract_strided_slice %176 {offsets = [0, 0], sizes = [1, 384], strides = [1, 1]} : vector<1x512xf32> to vector<1x384xf32>
    %178 = arith.negf %177 : vector<1x384xf32>
    %179 = math.exp %178 : vector<1x384xf32>
    %cst_31 = arith.constant 1.000000e+00 : f32
    %180 = vector.broadcast %cst_31 : f32 to vector<1x384xf32>
    %181 = arith.addf %180, %179 : vector<1x384xf32>
    %182 = arith.divf %180, %181 : vector<1x384xf32>
    %183 = vector.extract_strided_slice %176 {offsets = [0, 384], sizes = [1, 128], strides = [1, 1]} : vector<1x512xf32> to vector<1x128xf32>
    %184 = math.tanh %183 : vector<1x128xf32>
    %185 = vector.extract_strided_slice %182 {offsets = [0, 128], sizes = [1, 128], strides = [1, 1]} : vector<1x384xf32> to vector<1x128xf32>
    %186 = arith.mulf %185, %148 : vector<1x128xf32>
    %187 = vector.extract_strided_slice %182 {offsets = [0, 0], sizes = [1, 128], strides = [1, 1]} : vector<1x384xf32> to vector<1x128xf32>
    %188 = arith.mulf %187, %184 : vector<1x128xf32>
    %189 = arith.addf %186, %188 : vector<1x128xf32>
    %190 = vector.extract_strided_slice %182 {offsets = [0, 256], sizes = [1, 128], strides = [1, 1]} : vector<1x384xf32> to vector<1x128xf32>
    %191 = math.tanh %189 : vector<1x128xf32>
    %192 = arith.mulf %190, %191 : vector<1x128xf32>
    %193 = tpu.concatenate %192, %174 in 1 : vector<1x128xf32>, vector<1x128xf32> -> vector<1x256xf32>
    %194 = arith.truncf %193 : vector<1x256xf32> to vector<1x256xbf16>
    %c0_32 = arith.constant 0 : index
    %c0_33 = arith.constant 0 : index
    %195 = vector.load %arg3[%c0_32, %c0_33] : memref<256x1024xbf16, #tpu.memory_space<vmem>>, vector<256x1024xbf16>
    %cst_34 = arith.constant dense<0.000000e+00> : vector<1x1024xf32>
    %196 = tpu.matmul %194, %195, %cst_34 {dimension_numbers = #tpu.dot_dimension_numbers<[1], [0], [0], [1], [0, 0, 1, 1], [], []>} : vector<1x256xbf16>, vector<256x1024xbf16>, vector<1x1024xf32> -> vector<1x1024xf32>
    %197 = vector.extract_strided_slice %196 {offsets = [0, 0], sizes = [1, 512], strides = [1, 1]} : vector<1x1024xf32> to vector<1x512xf32>
    %198 = vector.extract_strided_slice %196 {offsets = [0, 512], sizes = [1, 512], strides = [1, 1]} : vector<1x1024xf32> to vector<1x512xf32>
    %199 = arith.addf %198, %6 : vector<1x512xf32>
    %200 = vector.extract_strided_slice %199 {offsets = [0, 0], sizes = [1, 384], strides = [1, 1]} : vector<1x512xf32> to vector<1x384xf32>
    %201 = arith.negf %200 : vector<1x384xf32>
    %202 = math.exp %201 : vector<1x384xf32>
    %cst_35 = arith.constant 1.000000e+00 : f32
    %203 = vector.broadcast %cst_35 : f32 to vector<1x384xf32>
    %204 = arith.addf %203, %202 : vector<1x384xf32>
    %205 = arith.divf %203, %204 : vector<1x384xf32>
    %206 = vector.extract_strided_slice %199 {offsets = [0, 384], sizes = [1, 128], strides = [1, 1]} : vector<1x512xf32> to vector<1x128xf32>
    %207 = math.tanh %206 : vector<1x128xf32>
    %208 = vector.extract_strided_slice %205 {offsets = [0, 128], sizes = [1, 128], strides = [1, 1]} : vector<1x384xf32> to vector<1x128xf32>
    %209 = arith.mulf %208, %171 : vector<1x128xf32>
    %210 = vector.extract_strided_slice %205 {offsets = [0, 0], sizes = [1, 128], strides = [1, 1]} : vector<1x384xf32> to vector<1x128xf32>
    %211 = arith.mulf %210, %207 : vector<1x128xf32>
    %212 = arith.addf %209, %211 : vector<1x128xf32>
    %213 = vector.extract_strided_slice %205 {offsets = [0, 256], sizes = [1, 128], strides = [1, 1]} : vector<1x384xf32> to vector<1x128xf32>
    %214 = math.tanh %212 : vector<1x128xf32>
    %215 = arith.mulf %213, %214 : vector<1x128xf32>
    %216 = vector.extract_strided_slice %5 {offsets = [5, 0], sizes = [1, 512], strides = [1, 1]} : vector<8x512xf32> to vector<1x512xf32>
    %217 = arith.addf %216, %197 : vector<1x512xf32>
    %218 = vector.extract_strided_slice %217 {offsets = [0, 0], sizes = [1, 384], strides = [1, 1]} : vector<1x512xf32> to vector<1x384xf32>
    %219 = arith.negf %218 : vector<1x384xf32>
    %220 = math.exp %219 : vector<1x384xf32>
    %cst_36 = arith.constant 1.000000e+00 : f32
    %221 = vector.broadcast %cst_36 : f32 to vector<1x384xf32>
    %222 = arith.addf %221, %220 : vector<1x384xf32>
    %223 = arith.divf %221, %222 : vector<1x384xf32>
    %224 = vector.extract_strided_slice %217 {offsets = [0, 384], sizes = [1, 128], strides = [1, 1]} : vector<1x512xf32> to vector<1x128xf32>
    %225 = math.tanh %224 : vector<1x128xf32>
    %226 = vector.extract_strided_slice %223 {offsets = [0, 128], sizes = [1, 128], strides = [1, 1]} : vector<1x384xf32> to vector<1x128xf32>
    %227 = arith.mulf %226, %189 : vector<1x128xf32>
    %228 = vector.extract_strided_slice %223 {offsets = [0, 0], sizes = [1, 128], strides = [1, 1]} : vector<1x384xf32> to vector<1x128xf32>
    %229 = arith.mulf %228, %225 : vector<1x128xf32>
    %230 = arith.addf %227, %229 : vector<1x128xf32>
    %231 = vector.extract_strided_slice %223 {offsets = [0, 256], sizes = [1, 128], strides = [1, 1]} : vector<1x384xf32> to vector<1x128xf32>
    %232 = math.tanh %230 : vector<1x128xf32>
    %233 = arith.mulf %231, %232 : vector<1x128xf32>
    %234 = tpu.concatenate %233, %215 in 1 : vector<1x128xf32>, vector<1x128xf32> -> vector<1x256xf32>
    %235 = arith.truncf %234 : vector<1x256xf32> to vector<1x256xbf16>
    %c0_37 = arith.constant 0 : index
    %c0_38 = arith.constant 0 : index
    %236 = vector.load %arg3[%c0_37, %c0_38] : memref<256x1024xbf16, #tpu.memory_space<vmem>>, vector<256x1024xbf16>
    %cst_39 = arith.constant dense<0.000000e+00> : vector<1x1024xf32>
    %237 = tpu.matmul %235, %236, %cst_39 {dimension_numbers = #tpu.dot_dimension_numbers<[1], [0], [0], [1], [0, 0, 1, 1], [], []>} : vector<1x256xbf16>, vector<256x1024xbf16>, vector<1x1024xf32> -> vector<1x1024xf32>
    %238 = vector.extract_strided_slice %237 {offsets = [0, 0], sizes = [1, 512], strides = [1, 1]} : vector<1x1024xf32> to vector<1x512xf32>
    %239 = vector.extract_strided_slice %237 {offsets = [0, 512], sizes = [1, 512], strides = [1, 1]} : vector<1x1024xf32> to vector<1x512xf32>
    %240 = arith.addf %239, %6 : vector<1x512xf32>
    %241 = vector.extract_strided_slice %240 {offsets = [0, 0], sizes = [1, 384], strides = [1, 1]} : vector<1x512xf32> to vector<1x384xf32>
    %242 = arith.negf %241 : vector<1x384xf32>
    %243 = math.exp %242 : vector<1x384xf32>
    %cst_40 = arith.constant 1.000000e+00 : f32
    %244 = vector.broadcast %cst_40 : f32 to vector<1x384xf32>
    %245 = arith.addf %244, %243 : vector<1x384xf32>
    %246 = arith.divf %244, %245 : vector<1x384xf32>
    %247 = vector.extract_strided_slice %240 {offsets = [0, 384], sizes = [1, 128], strides = [1, 1]} : vector<1x512xf32> to vector<1x128xf32>
    %248 = math.tanh %247 : vector<1x128xf32>
    %249 = vector.extract_strided_slice %246 {offsets = [0, 128], sizes = [1, 128], strides = [1, 1]} : vector<1x384xf32> to vector<1x128xf32>
    %250 = arith.mulf %249, %212 : vector<1x128xf32>
    %251 = vector.extract_strided_slice %246 {offsets = [0, 0], sizes = [1, 128], strides = [1, 1]} : vector<1x384xf32> to vector<1x128xf32>
    %252 = arith.mulf %251, %248 : vector<1x128xf32>
    %253 = arith.addf %250, %252 : vector<1x128xf32>
    %254 = vector.extract_strided_slice %246 {offsets = [0, 256], sizes = [1, 128], strides = [1, 1]} : vector<1x384xf32> to vector<1x128xf32>
    %255 = math.tanh %253 : vector<1x128xf32>
    %256 = arith.mulf %254, %255 : vector<1x128xf32>
    %257 = vector.extract_strided_slice %5 {offsets = [6, 0], sizes = [1, 512], strides = [1, 1]} : vector<8x512xf32> to vector<1x512xf32>
    %258 = arith.addf %257, %238 : vector<1x512xf32>
    %259 = vector.extract_strided_slice %258 {offsets = [0, 0], sizes = [1, 384], strides = [1, 1]} : vector<1x512xf32> to vector<1x384xf32>
    %260 = arith.negf %259 : vector<1x384xf32>
    %261 = math.exp %260 : vector<1x384xf32>
    %cst_41 = arith.constant 1.000000e+00 : f32
    %262 = vector.broadcast %cst_41 : f32 to vector<1x384xf32>
    %263 = arith.addf %262, %261 : vector<1x384xf32>
    %264 = arith.divf %262, %263 : vector<1x384xf32>
    %265 = vector.extract_strided_slice %258 {offsets = [0, 384], sizes = [1, 128], strides = [1, 1]} : vector<1x512xf32> to vector<1x128xf32>
    %266 = math.tanh %265 : vector<1x128xf32>
    %267 = vector.extract_strided_slice %264 {offsets = [0, 128], sizes = [1, 128], strides = [1, 1]} : vector<1x384xf32> to vector<1x128xf32>
    %268 = arith.mulf %267, %230 : vector<1x128xf32>
    %269 = vector.extract_strided_slice %264 {offsets = [0, 0], sizes = [1, 128], strides = [1, 1]} : vector<1x384xf32> to vector<1x128xf32>
    %270 = arith.mulf %269, %266 : vector<1x128xf32>
    %271 = arith.addf %268, %270 : vector<1x128xf32>
    %272 = vector.extract_strided_slice %264 {offsets = [0, 256], sizes = [1, 128], strides = [1, 1]} : vector<1x384xf32> to vector<1x128xf32>
    %273 = math.tanh %271 : vector<1x128xf32>
    %274 = arith.mulf %272, %273 : vector<1x128xf32>
    %275 = tpu.concatenate %274, %256 in 1 : vector<1x128xf32>, vector<1x128xf32> -> vector<1x256xf32>
    %276 = arith.truncf %275 : vector<1x256xf32> to vector<1x256xbf16>
    %c0_42 = arith.constant 0 : index
    %c0_43 = arith.constant 0 : index
    %277 = vector.load %arg3[%c0_42, %c0_43] : memref<256x1024xbf16, #tpu.memory_space<vmem>>, vector<256x1024xbf16>
    %cst_44 = arith.constant dense<0.000000e+00> : vector<1x1024xf32>
    %278 = tpu.matmul %276, %277, %cst_44 {dimension_numbers = #tpu.dot_dimension_numbers<[1], [0], [0], [1], [0, 0, 1, 1], [], []>} : vector<1x256xbf16>, vector<256x1024xbf16>, vector<1x1024xf32> -> vector<1x1024xf32>
    %279 = vector.extract_strided_slice %278 {offsets = [0, 0], sizes = [1, 512], strides = [1, 1]} : vector<1x1024xf32> to vector<1x512xf32>
    %280 = vector.extract_strided_slice %278 {offsets = [0, 512], sizes = [1, 512], strides = [1, 1]} : vector<1x1024xf32> to vector<1x512xf32>
    %281 = arith.addf %280, %6 : vector<1x512xf32>
    %282 = vector.extract_strided_slice %281 {offsets = [0, 0], sizes = [1, 384], strides = [1, 1]} : vector<1x512xf32> to vector<1x384xf32>
    %283 = arith.negf %282 : vector<1x384xf32>
    %284 = math.exp %283 : vector<1x384xf32>
    %cst_45 = arith.constant 1.000000e+00 : f32
    %285 = vector.broadcast %cst_45 : f32 to vector<1x384xf32>
    %286 = arith.addf %285, %284 : vector<1x384xf32>
    %287 = arith.divf %285, %286 : vector<1x384xf32>
    %288 = vector.extract_strided_slice %281 {offsets = [0, 384], sizes = [1, 128], strides = [1, 1]} : vector<1x512xf32> to vector<1x128xf32>
    %289 = math.tanh %288 : vector<1x128xf32>
    %290 = vector.extract_strided_slice %287 {offsets = [0, 128], sizes = [1, 128], strides = [1, 1]} : vector<1x384xf32> to vector<1x128xf32>
    %291 = arith.mulf %290, %253 : vector<1x128xf32>
    %292 = vector.extract_strided_slice %287 {offsets = [0, 0], sizes = [1, 128], strides = [1, 1]} : vector<1x384xf32> to vector<1x128xf32>
    %293 = arith.mulf %292, %289 : vector<1x128xf32>
    %294 = arith.addf %291, %293 : vector<1x128xf32>
    %295 = vector.extract_strided_slice %287 {offsets = [0, 256], sizes = [1, 128], strides = [1, 1]} : vector<1x384xf32> to vector<1x128xf32>
    %296 = math.tanh %294 : vector<1x128xf32>
    %297 = arith.mulf %295, %296 : vector<1x128xf32>
    %298 = vector.extract_strided_slice %5 {offsets = [7, 0], sizes = [1, 512], strides = [1, 1]} : vector<8x512xf32> to vector<1x512xf32>
    %299 = arith.addf %298, %279 : vector<1x512xf32>
    %300 = vector.extract_strided_slice %299 {offsets = [0, 0], sizes = [1, 384], strides = [1, 1]} : vector<1x512xf32> to vector<1x384xf32>
    %301 = arith.negf %300 : vector<1x384xf32>
    %302 = math.exp %301 : vector<1x384xf32>
    %cst_46 = arith.constant 1.000000e+00 : f32
    %303 = vector.broadcast %cst_46 : f32 to vector<1x384xf32>
    %304 = arith.addf %303, %302 : vector<1x384xf32>
    %305 = arith.divf %303, %304 : vector<1x384xf32>
    %306 = vector.extract_strided_slice %299 {offsets = [0, 384], sizes = [1, 128], strides = [1, 1]} : vector<1x512xf32> to vector<1x128xf32>
    %307 = math.tanh %306 : vector<1x128xf32>
    %308 = vector.extract_strided_slice %305 {offsets = [0, 128], sizes = [1, 128], strides = [1, 1]} : vector<1x384xf32> to vector<1x128xf32>
    %309 = arith.mulf %308, %271 : vector<1x128xf32>
    %310 = vector.extract_strided_slice %305 {offsets = [0, 0], sizes = [1, 128], strides = [1, 1]} : vector<1x384xf32> to vector<1x128xf32>
    %311 = arith.mulf %310, %307 : vector<1x128xf32>
    %312 = arith.addf %309, %311 : vector<1x128xf32>
    %313 = vector.extract_strided_slice %305 {offsets = [0, 256], sizes = [1, 128], strides = [1, 1]} : vector<1x384xf32> to vector<1x128xf32>
    %314 = math.tanh %312 : vector<1x128xf32>
    %315 = arith.mulf %313, %314 : vector<1x128xf32>
    %316 = tpu.concatenate %315, %297 in 1 : vector<1x128xf32>, vector<1x128xf32> -> vector<1x256xf32>
    %317 = arith.truncf %316 : vector<1x256xf32> to vector<1x256xbf16>
    %c0_47 = arith.constant 0 : index
    %c0_48 = arith.constant 0 : index
    %318 = vector.load %arg3[%c0_47, %c0_48] : memref<256x1024xbf16, #tpu.memory_space<vmem>>, vector<256x1024xbf16>
    %cst_49 = arith.constant dense<0.000000e+00> : vector<1x1024xf32>
    %319 = tpu.matmul %317, %318, %cst_49 {dimension_numbers = #tpu.dot_dimension_numbers<[1], [0], [0], [1], [0, 0, 1, 1], [], []>} : vector<1x256xbf16>, vector<256x1024xbf16>, vector<1x1024xf32> -> vector<1x1024xf32>
    %320 = vector.extract_strided_slice %319 {offsets = [0, 512], sizes = [1, 512], strides = [1, 1]} : vector<1x1024xf32> to vector<1x512xf32>
    %321 = arith.addf %320, %6 : vector<1x512xf32>
    %322 = vector.extract_strided_slice %321 {offsets = [0, 0], sizes = [1, 384], strides = [1, 1]} : vector<1x512xf32> to vector<1x384xf32>
    %323 = arith.negf %322 : vector<1x384xf32>
    %324 = math.exp %323 : vector<1x384xf32>
    %cst_50 = arith.constant 1.000000e+00 : f32
    %325 = vector.broadcast %cst_50 : f32 to vector<1x384xf32>
    %326 = arith.addf %325, %324 : vector<1x384xf32>
    %327 = arith.divf %325, %326 : vector<1x384xf32>
    %328 = vector.extract_strided_slice %321 {offsets = [0, 384], sizes = [1, 128], strides = [1, 1]} : vector<1x512xf32> to vector<1x128xf32>
    %329 = math.tanh %328 : vector<1x128xf32>
    %330 = vector.extract_strided_slice %327 {offsets = [0, 128], sizes = [1, 128], strides = [1, 1]} : vector<1x384xf32> to vector<1x128xf32>
    %331 = arith.mulf %330, %294 : vector<1x128xf32>
    %332 = vector.extract_strided_slice %327 {offsets = [0, 0], sizes = [1, 128], strides = [1, 1]} : vector<1x384xf32> to vector<1x128xf32>
    %333 = arith.mulf %332, %329 : vector<1x128xf32>
    %334 = arith.addf %331, %333 : vector<1x128xf32>
    %335 = vector.extract_strided_slice %327 {offsets = [0, 256], sizes = [1, 128], strides = [1, 1]} : vector<1x384xf32> to vector<1x128xf32>
    %336 = math.tanh %334 : vector<1x128xf32>
    %337 = arith.mulf %335, %336 : vector<1x128xf32>
    %c0_51 = arith.constant 0 : index
    %c0_52 = arith.constant 0 : index
    %338 = vector.load %arg5[%c0_51, %c0_52] : memref<1x128xf32, #tpu.memory_space<vmem>>, vector<1x128xf32>
    %339 = arith.mulf %337, %338 : vector<1x128xf32>
    %cst_53 = arith.constant dense<0.000000e+00> : vector<1xf32>
    %340 = vector.multi_reduction <add>, %339, %cst_53 [1] : vector<1x128xf32> to vector<1xf32>
    %341 = vector.shape_cast %340 : vector<1xf32> to vector<1x1xf32>
    %c0_54 = arith.constant 0 : index
    %c0_55 = arith.constant 0 : index
    %342 = vector.load %arg6[%c0_54, %c0_55] : memref<1x1xf32, #tpu.memory_space<vmem>>, vector<1x1xf32>
    %343 = arith.addf %341, %342 : vector<1x1xf32>
    %c0_56 = arith.constant 0 : index
    %c0_57 = arith.constant 0 : index
    %344 = vector.load %arg7[%c0_56, %c0_57] : memref<1x1xf32, #tpu.memory_space<vmem>>, vector<1x1xf32>
    tpu.vector_store %arg7[%c0_56, %c0_57], %343 {strides = array<i32>} : memref<1x1xf32, #tpu.memory_space<vmem>>, vector<1x1xf32>,
    return
  }
}

</mosaic_0001>

<llo_original>
// kernel: tpu_custom_call.1
$region0: #{tpu_custom_call.1}
  #allocation0 [shape = 'u32[]', space=smem, size = 0x4, offset = 0x4, fixed_abs, tag = 'smem constant byte address 0x4 - core index']
  #allocation1 [shape = 'u32[144,128]{1,0:T(1,128)}', space=vmem, size = 0x12000, scoped, tag = 'internal scratch']
  #allocation2 [shape = 'f32[1,1]{1,0:T(1,128)S(1)}', space=vmem, size = 0x200, scoped, tag = 'scoped memory for tpu_custom_call.1']
  %s0 = inlined_call_operand.hbm [shape: f32[8,14], index: 0, kind: input, shape index: {}]
  %s1 = inlined_call_operand.hbm [shape: f32[14,512], index: 1, kind: input, shape index: {}]
  %s2 = inlined_call_operand.vmem [shape: f32[1,512], index: 2, kind: input, shape index: {}]
  %s3 = inlined_call_operand.hbm [shape: bf16[256,1024], index: 3, kind: input, shape index: {}]
  %s4 = inlined_call_operand.vmem [shape: f32[1,512], index: 4, kind: input, shape index: {}]
  %s5 = inlined_call_operand.vmem [shape: f32[1,128], index: 5, kind: input, shape index: {}]
  %s6 = inlined_call_operand.<no memory space> [shape: f32[1,1], index: 6, kind: input, shape index: {}]
  %s7 = inlined_call_operand.hbm [shape: f32[1,1], index: 7, kind: output, shape index: {}]
  %s8 = sld [smem:[#allocation0]]
  $region50: #{tpu_custom_call.1} parent=0
    _
  %s10 = ssub.s32 1, %s8
  %s11 = scalar_select 0, %s10, %s8
  %v12 = vstv %s6
  %13 = vst [vmem:[#allocation2] sm:$0x1] %v12
  $region1: #{tpu_custom_call.1} parent=0
    #allocation3 [shape = 'u8[4096]{0}', space=vmem, size = 0x1000, scoped, tag = 'input window, operand 0, single buffered']
    #allocation4 [shape = 's32[1]{0}', space=sflag, size = 0x4, scoped, tag = 'scoped memory for tpu_custom_call.1']
    #allocation5 [shape = 's32[1]{0}', space=sflag, size = 0x4, scoped, tag = 'scoped memory for tpu_custom_call.1']
    #allocation6 [shape = 'u8[32768]{0}', space=vmem, size = 0x8000, scoped, tag = 'input window, operand 1, single buffered']
    #allocation7 [shape = 's32[1]{0}', space=sflag, size = 0x4, scoped, tag = 'scoped memory for tpu_custom_call.1']
    #allocation8 [shape = 'u8[524288]{0}', space=vmem, size = 0x80000, scoped, tag = 'input window, operand 3, single buffered']
    #allocation9 [shape = 'u8[512]{0}', space=vmem, size = 0x400, scoped, tag = 'output window, operand 0, single buffered']
    %14 = vsyncpa [#allocation4], 0
    %15 = vsyncpa [#allocation7], 0
    %16 = vsyncpa [#allocation5], 0
    // Predicated region
    $region2: #{tpu_custom_call.1} parent=1 // pred_check
      _
    $region3: #{tpu_custom_call.1} parent=1 // pred_check_branch
      %18 = sbr.rel (0) target = $region5
    $region4: #{tpu_custom_call.1} parent=1 // pred_region
      %s20 = ssub.s32 128, 128
      %21 = vsyncadd [#allocation4], %s20
      %s23 = sshll.u32 [#allocation3], 4
      %s24 = int_to_ptr.vmem [resolvable:$true] %s23
      %26 = dma.hbm_to_vmem [thread:$0]  %s0, 128, %s24, [#allocation4]
    $region5: #{tpu_custom_call.1} parent=1 // pred_fallthru
      _
    // Predicated region
    $region6: #{tpu_custom_call.1} parent=1 // pred_check
      _
    $region7: #{tpu_custom_call.1} parent=1 // pred_check_branch
      %28 = sbr.rel (0) target = $region9
    $region8: #{tpu_custom_call.1} parent=1 // pred_region
      %s30 = ssub.s32 1024, 1024
      %31 = vsyncadd [#allocation7], %s30
      %s32 = sshll.u32 [#allocation6], 4
      %s33 = int_to_ptr.vmem [resolvable:$true] %s32
      %38 = dma.hbm_to_vmem [thread:$0]  %s1, 1024, %s33, [#allocation7], 512, 512, 32
    $region9: #{tpu_custom_call.1} parent=1 // pred_fallthru
      _
    // Predicated region
    $region10: #{tpu_custom_call.1} parent=1 // pred_check
      _
    $region11: #{tpu_custom_call.1} parent=1 // pred_check_branch
      %40 = sbr.rel (0) target = $region13
    $region12: #{tpu_custom_call.1} parent=1 // pred_region
      _
    $region13: #{tpu_custom_call.1} parent=1 // pred_fallthru
      _
    // Predicated region
    $region14: #{tpu_custom_call.1} parent=1 // pred_check
      _
    $region15: #{tpu_custom_call.1} parent=1 // pred_check_branch
      %42 = sbr.rel (0) target = $region17
    $region16: #{tpu_custom_call.1} parent=1 // pred_region
      %s44 = ssub.s32 16384, 16384
      %45 = vsyncadd [#allocation7], %s44
      %s46 = sshll.u32 [#allocation8], 4
      %s47 = int_to_ptr.vmem [resolvable:$true] %s46
      %52 = dma.hbm_to_vmem [thread:$0]  %s3, 16384, %s47, [#allocation7], 512, 512, 32
    $region17: #{tpu_custom_call.1} parent=1 // pred_fallthru
      _
    // Predicated region
    $region18: #{tpu_custom_call.1} parent=1 // pred_check
      _
    $region19: #{tpu_custom_call.1} parent=1 // pred_check_branch
      %54 = sbr.rel (0) target = $region21
    $region20: #{tpu_custom_call.1} parent=1 // pred_region
      _
    $region21: #{tpu_custom_call.1} parent=1 // pred_fallthru
      _
    // Predicated region
    $region22: #{tpu_custom_call.1} parent=1 // pred_check
      _
    $region23: #{tpu_custom_call.1} parent=1 // pred_check_branch
      %56 = sbr.rel (0) target = $region25
    $region24: #{tpu_custom_call.1} parent=1 // pred_region
      _
    $region25: #{tpu_custom_call.1} parent=1 // pred_fallthru
      _
    // Predicated region
    $region26: #{tpu_custom_call.1} parent=1 // pred_check
      _
    $region27: #{tpu_custom_call.1} parent=1 // pred_check_branch
      %58 = sbr.rel (0) target = $region29
    $region28: #{tpu_custom_call.1} parent=1 // pred_region
      _
    $region29: #{tpu_custom_call.1} parent=1 // pred_fallthru
      _
    // Predicated region
    $region30: #{tpu_custom_call.1} parent=1 // pred_check
      _
    $region31: #{tpu_custom_call.1} parent=1 // pred_check_branch
      %60 = sbr.rel (0) target = $region33
    $region32: #{tpu_custom_call.1} parent=1 // pred_region
      %61 = dma.done [#allocation4], 128
    $region33: #{tpu_custom_call.1} parent=1 // pred_fallthru
      _
    // Predicated region
    $region34: #{tpu_custom_call.1} parent=1 // pred_check
      _
    $region35: #{tpu_custom_call.1} parent=1 // pred_check_branch
      %63 = sbr.rel (0) target = $region37
    $region36: #{tpu_custom_call.1} parent=1 // pred_region
      %64 = dma.done [#allocation7], 1024
    $region37: #{tpu_custom_call.1} parent=1 // pred_fallthru
      _
    // Predicated region
    $region38: #{tpu_custom_call.1} parent=1 // pred_check
      _
    $region39: #{tpu_custom_call.1} parent=1 // pred_check_branch
      %66 = sbr.rel (0) target = $region41
    $region40: #{tpu_custom_call.1} parent=1 // pred_region
      %67 = dma.done [#allocation7], 16384
    $region41: #{tpu_custom_call.1} parent=1 // pred_fallthru
      _
    %v68 = vld [vmem:[#allocation3] sm:$0xff]
    %v69 = vld [vmem:[#allocation6] sm:$0xff]
    %v70 = vld [vmem:[#allocation6 + $0x8] sm:$0xff]
    %v71 = vld [vmem:[#allocation6 + $0x10] sm:$0xff]
    %v72 = vld [vmem:[#allocation6 + $0x18] sm:$0xff]
    %v73 = vld [vmem:[#allocation6 + $0x20] sm:$0x3f]
    %v74 = vld [vmem:[#allocation6 + $0x28] sm:$0x3f]
    %v75 = vld [vmem:[#allocation6 + $0x30] sm:$0x3f]
    %v76 = vld [vmem:[#allocation6 + $0x38] sm:$0x3f]
    %v77 = vld [vmem:[%s2] sm:$0xf]
    %v79 = vlaneseq
    %v80 = vshrl.u32 %v79, 7
    %v81 = vsub.s32 0, %v80
    %v82 = vrot.slane %v77, %v81
    %v83 = vlaneseq
    %v84 = vshrl.u32 %v83, 7
    %v85 = vsub.s32 1, %v84
    %v86 = vrot.slane %v77, %v85
    %v87 = vlaneseq
    %v88 = vshrl.u32 %v87, 7
    %v89 = vsub.s32 2, %v88
    %v90 = vrot.slane %v77, %v89
    %v91 = vlaneseq
    %v92 = vshrl.u32 %v91, 7
    %v93 = vsub.s32 3, %v92
    %v94 = vrot.slane %v77, %v93
    %vm99 = vcmask 113664
    %v101 = vsel %vm99, %v68, 0
    %vm103 = vcmask 1045504
    %v105 = vsel %vm103, %v73, 0
    %v108 = vsel %vm103, %v74, 0
    %v111 = vsel %vm103, %v75, 0
    %v114 = vsel %vm103, %v76, 0
    %116 = vmatprep.subr.mxu0 %v70
    %117 = vmatpush1.msra.mxu0 %v69
    %118 = vmatprep.subr.mxu0 %v108
    %119 = vmatpush1.msra.mxu0 %v105
    %120 = vmatprep.subr.mxu0 0.0
    %121 = vmatpush1.msra.mxu0 0.0
    %122 = vmatprep.subr.mxu0 0.0
    %123 = vmatpush1.msra.mxu0 0.0
    %124 = vmatprep.subr.mxu0 0.0
    %125 = vmatpush1.msra.mxu0 0.0
    %126 = vmatprep.subr.mxu0 0.0
    %127 = vmatpush1.msra.mxu0 0.0
    %128 = vmatprep.subr.mxu0 0.0
    %129 = vmatpush1.msra.mxu0 0.0
    %130 = vmatprep.subr.mxu0 0.0
    %131 = vmatpush1.msra.mxu0 0.0
    %132 = vmatprep.subr.mxu0 0.0
    %133 = vmatpush1.msra.mxu0 0.0
    %134 = vmatprep.subr.mxu0 0.0
    %135 = vmatpush1.msra.mxu0 0.0
    %136 = vmatprep.subr.mxu0 0.0
    %137 = vmatpush1.msra.mxu0 0.0
    %138 = vmatprep.subr.mxu0 0.0
    %139 = vmatpush1.msra.mxu0 0.0
    %140 = vmatprep.subr.mxu0 0.0
    %141 = vmatpush1.msra.mxu0 0.0
    %142 = vmatprep.subr.mxu0 0.0
    %143 = vmatpush1.msra.mxu0 0.0
    %144 = vmatprep.subr.mxu0 0.0
    %145 = vmatpush1.msra.mxu0 0.0
    %146 = vmatprep.subr.mxu0 0.0
    %147 = vmatpush1.msra.mxu0 0.0
    %148 = vmatprep.subr.mxu0 0.0
    %149 = vmatpush1.msra.mxu0 0.0
    %150 = vmatprep.subr.mxu0 0.0
    %151 = vmatpush1.msra.mxu0 0.0
    %152 = vmatprep.subr.mxu0 0.0
    %153 = vmatpush1.msra.mxu0 0.0
    %154 = vmatprep.subr.mxu0 0.0
    %155 = vmatpush1.msra.mxu0 0.0
    %156 = vmatprep.subr.mxu0 0.0
    %157 = vmatpush1.msra.mxu0 0.0
    %158 = vmatprep.subr.mxu0 0.0
    %159 = vmatpush1.msra.mxu0 0.0
    %160 = vmatprep.subr.mxu0 0.0
    %161 = vmatpush1.msra.mxu0 0.0
    %162 = vmatprep.subr.mxu0 0.0
    %163 = vmatpush1.msra.mxu0 0.0
    %164 = vmatprep.subr.mxu0 0.0
    %165 = vmatpush1.msra.mxu0 0.0
    %166 = vmatprep.subr.mxu0 0.0
    %167 = vmatpush1.msra.mxu0 0.0
    %168 = vmatprep.subr.mxu0 0.0
    %169 = vmatpush1.msra.mxu0 0.0
    %170 = vmatprep.subr.mxu0 0.0
    %171 = vmatpush1.msra.mxu0 0.0
    %172 = vmatprep.subr.mxu0 0.0
    %173 = vmatpush1.msra.mxu0 0.0
    %174 = vmatprep.subr.mxu0 0.0
    %175 = vmatpush1.msra.mxu0 0.0
    %176 = vmatprep.subr.mxu0 0.0
    %177 = vmatpush1.msra.mxu0 0.0
    %178 = vmatprep.subr.mxu0 0.0
    %179 = vmatpush1.msra.mxu0 0.0
    %180 = vmatprep.mubr.f32.mxu0 0.0
    %181 = vmatmul.mubr.f32.gmra.mrb[0].mxu0 %v101
    %v182 = vpop.f32.mrb[0].mxu0
    %v183 = vadd.f32 %v82, %v182
    %v184 = vpop.f32.mrb[0].mxu0
    %v185 = vadd.f32 %v86, %v184
    %186 = vdwg.mxu0
    %187 = vmatprep.subr.mxu0 %v72
    %188 = vmatpush1.msra.mxu0 %v71
    %189 = vmatprep.subr.mxu0 %v114
    %190 = vmatpush1.msra.mxu0 %v111
    %191 = vmatprep.subr.mxu0 0.0
    %192 = vmatpush1.msra.mxu0 0.0
    %193 = vmatprep.subr.mxu0 0.0
    %194 = vmatpush1.msra.mxu0 0.0
    %195 = vmatprep.subr.mxu0 0.0
    %196 = vmatpush1.msra.mxu0 0.0
    %197 = vmatprep.subr.mxu0 0.0
    %198 = vmatpush1.msra.mxu0 0.0
    %199 = vmatprep.subr.mxu0 0.0
    %200 = vmatpush1.msra.mxu0 0.0
    %201 = vmatprep.subr.mxu0 0.0
    %202 = vmatpush1.msra.mxu0 0.0
    %203 = vmatprep.subr.mxu0 0.0
    %204 = vmatpush1.msra.mxu0 0.0
    %205 = vmatprep.subr.mxu0 0.0
    %206 = vmatpush1.msra.mxu0 0.0
    %207 = vmatprep.subr.mxu0 0.0
    %208 = vmatpush1.msra.mxu0 0.0
    %209 = vmatprep.subr.mxu0 0.0
    %210 = vmatpush1.msra.mxu0 0.0
    %211 = vmatprep.subr.mxu0 0.0
    %212 = vmatpush1.msra.mxu0 0.0
    %213 = vmatprep.subr.mxu0 0.0
    %214 = vmatpush1.msra.mxu0 0.0
    %215 = vmatprep.subr.mxu0 0.0
    %216 = vmatpush1.msra.mxu0 0.0
    %217 = vmatprep.subr.mxu0 0.0
    %218 = vmatpush1.msra.mxu0 0.0
    %219 = vmatprep.subr.mxu0 0.0
    %220 = vmatpush1.msra.mxu0 0.0
    %221 = vmatprep.subr.mxu0 0.0
    %222 = vmatpush1.msra.mxu0 0.0
    %223 = vmatprep.subr.mxu0 0.0
    %224 = vmatpush1.msra.mxu0 0.0
    %225 = vmatprep.subr.mxu0 0.0
    %226 = vmatpush1.msra.mxu0 0.0
    %227 = vmatprep.subr.mxu0 0.0
    %228 = vmatpush1.msra.mxu0 0.0
    %229 = vmatprep.subr.mxu0 0.0
    %230 = vmatpush1.msra.mxu0 0.0
    %231 = vmatprep.subr.mxu0 0.0
    %232 = vmatpush1.msra.mxu0 0.0
    %233 = vmatprep.subr.mxu0 0.0
    %234 = vmatpush1.msra.mxu0 0.0
    %235 = vmatprep.subr.mxu0 0.0
    %236 = vmatpush1.msra.mxu0 0.0
    %237 = vmatprep.subr.mxu0 0.0
    %238 = vmatpush1.msra.mxu0 0.0
    %239 = vmatprep.subr.mxu0 0.0
    %240 = vmatpush1.msra.mxu0 0.0
    %241 = vmatprep.subr.mxu0 0.0
    %242 = vmatpush1.msra.mxu0 0.0
    %243 = vmatprep.subr.mxu0 0.0
    %244 = vmatpush1.msra.mxu0 0.0
    %245 = vmatprep.subr.mxu0 0.0
    %246 = vmatpush1.msra.mxu0 0.0
    %247 = vmatprep.subr.mxu0 0.0
    %248 = vmatpush1.msra.mxu0 0.0
    %249 = vmatprep.subr.mxu0 0.0
    %250 = vmatpush1.msra.mxu0 0.0
    %251 = vmatprep.mubr.f32.mxu0 0.0
    %252 = vmatmul.mubr.f32.gmra.mrb[0].mxu0 %v101
    %v253 = vpop.f32.mrb[0].mxu0
    %v254 = vadd.f32 %v90, %v253
    %v255 = vpop.f32.mrb[0].mxu0
    %v256 = vadd.f32 %v94, %v255
    %257 = vdwg.mxu0
    %v258 = vld [vmem:[%s4] sm:$0xf]
    %v259 = vadd.f32 %v183, 0.0
    %v260 = vadd.f32 %v185, 0.0
    %v261 = vadd.f32 %v254, 0.0
    %v262 = vadd.f32 %v256, 0.0
    %v263 = vxor.u32 %v259, 2147483648
    %v264 = vxor.u32 %v260, 2147483648
    %v265 = vxor.u32 %v261, 2147483648
    %v266 = vmul.f32 %v263, 1.442695
    %v267 = vpow.pop %v266
    %v268 = vmul.f32 %v264, 1.442695
    %v269 = vpow.pop %v268
    %v270 = vmul.f32 %v265, 1.442695
    %v271 = vpow.pop %v270
    %v272 = vadd.f32 %v267, 1.0
    %v273 = vadd.f32 %v269, 1.0
    %v274 = vadd.f32 %v271, 1.0
    %v275 = vrcp.pop %v272
    %v276 = vmul.f32 1.0, %v275
    %v277 = vrcp.pop %v273
    %v278 = vmul.f32 1.0, %v277
    %v279 = vrcp.pop %v274
    %v280 = vmul.f32 1.0, %v279
    %v281 = vtanh.pop %v262
    %v282 = vmul.f32 %v278, 0.0
    %v283 = vmul.f32 %v276, %v281
    %v284 = vadd.f32 %v282, %v283
    %v285 = vtanh.pop %v284
    %v286 = vmul.f32 %v280, %v285
    %v287 = vpack.c.bf16 %v286, %v286
    %v288 = vpack.c.bf16 0.0, 0.0
    %v289 = vld [vmem:[#allocation8] sm:$0xff]
    %v290 = vld [vmem:[#allocation8 + $0x8] sm:$0xff]
    %v291 = vld [vmem:[#allocation8 + $0x10] sm:$0xff]
    %v292 = vld [vmem:[#allocation8 + $0x18] sm:$0xff]
    %v293 = vld [vmem:[#allocation8 + $0x20] sm:$0xff]
    %v294 = vld [vmem:[#allocation8 + $0x28] sm:$0xff]
    %v295 = vld [vmem:[#allocation8 + $0x30] sm:$0xff]
    %v296 = vld [vmem:[#allocation8 + $0x38] sm:$0xff]
    %v297 = vld [vmem:[#allocation8 + $0x40] sm:$0xff]
    %v298 = vld [vmem:[#allocation8 + $0x48] sm:$0xff]
    %v299 = vld [vmem:[#allocation8 + $0x50] sm:$0xff]
    %v300 = vld [vmem:[#allocation8 + $0x58] sm:$0xff]
    %v301 = vld [vmem:[#allocation8 + $0x60] sm:$0xff]
    %v302 = vld [vmem:[#allocation8 + $0x68] sm:$0xff]
    %v303 = vld [vmem:[#allocation8 + $0x70] sm:$0xff]
    %v304 = vld [vmem:[#allocation8 + $0x78] sm:$0xff]
    %v305 = vld [vmem:[#allocation8 + $0x80] sm:$0xff]
    %v306 = vld [vmem:[#allocation8 + $0x88] sm:$0xff]
    %v307 = vld [vmem:[#allocation8 + $0x90] sm:$0xff]
    %v308 = vld [vmem:[#allocation8 + $0x98] sm:$0xff]
    %v309 = vld [vmem:[#allocation8 + $0xa0] sm:$0xff]
    %v310 = vld [vmem:[#allocation8 + $0xa8] sm:$0xff]
    %v311 = vld [vmem:[#allocation8 + $0xb0] sm:$0xff]
    %v312 = vld [vmem:[#allocation8 + $0xb8] sm:$0xff]
    %v313 = vld [vmem:[#allocation8 + $0xc0] sm:$0xff]
    %v314 = vld [vmem:[#allocation8 + $0xc8] sm:$0xff]
    %v315 = vld [vmem:[#allocation8 + $0xd0] sm:$0xff]
    %v316 = vld [vmem:[#allocation8 + $0xd8] sm:$0xff]
    %v317 = vld [vmem:[#allocation8 + $0xe0] sm:$0xff]
    %v318 = vld [vmem:[#allocation8 + $0xe8] sm:$0xff]
    %v319 = vld [vmem:[#allocation8 + $0xf0] sm:$0xff]
    %v320 = vld [vmem:[#allocation8 + $0xf8] sm:$0xff]
    %v321 = vld [vmem:[#allocation8 + $0x100] sm:$0xff]
    %v322 = vld [vmem:[#allocation8 + $0x108] sm:$0xff]
    %v323 = vld [vmem:[#allocation8 + $0x110] sm:$0xff]
    %v324 = vld [vmem:[#allocation8 + $0x118] sm:$0xff]
    %v325 = vld [vmem:[#allocation8 + $0x120] sm:$0xff]
    %v326 = vld [vmem:[#allocation8 + $0x128] sm:$0xff]
    %v327 = vld [vmem:[#allocation8 + $0x130] sm:$0xff]
    %v328 = vld [vmem:[#allocation8 + $0x138] sm:$0xff]
    %v329 = vld [vmem:[#allocation8 + $0x140] sm:$0xff]
    %v330 = vld [vmem:[#allocation8 + $0x148] sm:$0xff]
    %v331 = vld [vmem:[#allocation8 + $0x150] sm:$0xff]
    %v332 = vld [vmem:[#allocation8 + $0x158] sm:$0xff]
    %v333 = vld [vmem:[#allocation8 + $0x160] sm:$0xff]
    %v334 = vld [vmem:[#allocation8 + $0x168] sm:$0xff]
    %v335 = vld [vmem:[#allocation8 + $0x170] sm:$0xff]
    %v336 = vld [vmem:[#allocation8 + $0x178] sm:$0xff]
    %v337 = vld [vmem:[#allocation8 + $0x180] sm:$0xff]
    %v338 = vld [vmem:[#allocation8 + $0x188] sm:$0xff]
    %v339 = vld [vmem:[#allocation8 + $0x190] sm:$0xff]
    %v340 = vld [vmem:[#allocation8 + $0x198] sm:$0xff]
    %v341 = vld [vmem:[#allocation8 + $0x1a0] sm:$0xff]
    %v342 = vld [vmem:[#allocation8 + $0x1a8] sm:$0xff]
    %v343 = vld [vmem:[#allocation8 + $0x1b0] sm:$0xff]
    %v344 = vld [vmem:[#allocation8 + $0x1b8] sm:$0xff]
    %v345 = vld [vmem:[#allocation8 + $0x1c0] sm:$0xff]
    %v346 = vld [vmem:[#allocation8 + $0x1c8] sm:$0xff]
    %v347 = vld [vmem:[#allocation8 + $0x1d0] sm:$0xff]
    %v348 = vld [vmem:[#allocation8 + $0x1d8] sm:$0xff]
    %v349 = vld [vmem:[#allocation8 + $0x1e0] sm:$0xff]
    %v350 = vld [vmem:[#allocation8 + $0x1e8] sm:$0xff]
    %v351 = vld [vmem:[#allocation8 + $0x1f0] sm:$0xff]
    %v352 = vld [vmem:[#allocation8 + $0x1f8] sm:$0xff]
    %v353 = vld [vmem:[#allocation8 + $0x200] sm:$0xff]
    %v354 = vld [vmem:[#allocation8 + $0x208] sm:$0xff]
    %v355 = vld [vmem:[#allocation8 + $0x210] sm:$0xff]
    %v356 = vld [vmem:[#allocation8 + $0x218] sm:$0xff]
    %v357 = vld [vmem:[#allocation8 + $0x220] sm:$0xff]
    %v358 = vld [vmem:[#allocation8 + $0x228] sm:$0xff]
    %v359 = vld [vmem:[#allocation8 + $0x230] sm:$0xff]
    %v360 = vld [vmem:[#allocation8 + $0x238] sm:$0xff]
    %v361 = vld [vmem:[#allocation8 + $0x240] sm:$0xff]
    %v362 = vld [vmem:[#allocation8 + $0x248] sm:$0xff]
    %v363 = vld [vmem:[#allocation8 + $0x250] sm:$0xff]
    %v364 = vld [vmem:[#allocation8 + $0x258] sm:$0xff]
    %v365 = vld [vmem:[#allocation8 + $0x260] sm:$0xff]
    %v366 = vld [vmem:[#allocation8 + $0x268] sm:$0xff]
    %v367 = vld [vmem:[#allocation8 + $0x270] sm:$0xff]
    %v368 = vld [vmem:[#allocation8 + $0x278] sm:$0xff]
    %v369 = vld [vmem:[#allocation8 + $0x280] sm:$0xff]
    %v370 = vld [vmem:[#allocation8 + $0x288] sm:$0xff]
    %v371 = vld [vmem:[#allocation8 + $0x290] sm:$0xff]
    %v372 = vld [vmem:[#allocation8 + $0x298] sm:$0xff]
    %v373 = vld [vmem:[#allocation8 + $0x2a0] sm:$0xff]
    %v374 = vld [vmem:[#allocation8 + $0x2a8] sm:$0xff]
    %v375 = vld [vmem:[#allocation8 + $0x2b0] sm:$0xff]
    %v376 = vld [vmem:[#allocation8 + $0x2b8] sm:$0xff]
    %v377 = vld [vmem:[#allocation8 + $0x2c0] sm:$0xff]
    %v378 = vld [vmem:[#allocation8 + $0x2c8] sm:$0xff]
    %v379 = vld [vmem:[#allocation8 + $0x2d0] sm:$0xff]
    %v380 = vld [vmem:[#allocation8 + $0x2d8] sm:$0xff]
    %v381 = vld [vmem:[#allocation8 + $0x2e0] sm:$0xff]
    %v382 = vld [vmem:[#allocation8 + $0x2e8] sm:$0xff]
    %v383 = vld [vmem:[#allocation8 + $0x2f0] sm:$0xff]
    %v384 = vld [vmem:[#allocation8 + $0x2f8] sm:$0xff]
    %v385 = vld [vmem:[#allocation8 + $0x300] sm:$0xff]
    %v386 = vld [vmem:[#allocation8 + $0x308] sm:$0xff]
    %v387 = vld [vmem:[#allocation8 + $0x310] sm:$0xff]
    %v388 = vld [vmem:[#allocation8 + $0x318] sm:$0xff]
    %v389 = vld [vmem:[#allocation8 + $0x320] sm:$0xff]
    %v390 = vld [vmem:[#allocation8 + $0x328] sm:$0xff]
    %v391 = vld [vmem:[#allocation8 + $0x330] sm:$0xff]
    %v392 = vld [vmem:[#allocation8 + $0x338] sm:$0xff]
    %v393 = vld [vmem:[#allocation8 + $0x340] sm:$0xff]
    %v394 = vld [vmem:[#allocation8 + $0x348] sm:$0xff]
    %v395 = vld [vmem:[#allocation8 + $0x350] sm:$0xff]
    %v396 = vld [vmem:[#allocation8 + $0x358] sm:$0xff]
    %v397 = vld [vmem:[#allocation8 + $0x360] sm:$0xff]
    %v398 = vld [vmem:[#allocation8 + $0x368] sm:$0xff]
    %v399 = vld [vmem:[#allocation8 + $0x370] sm:$0xff]
    %v400 = vld [vmem:[#allocation8 + $0x378] sm:$0xff]
    %v401 = vld [vmem:[#allocation8 + $0x380] sm:$0xff]
    %v402 = vld [vmem:[#allocation8 + $0x388] sm:$0xff]
    %v403 = vld [vmem:[#allocation8 + $0x390] sm:$0xff]
    %v404 = vld [vmem:[#allocation8 + $0x398] sm:$0xff]
    %v405 = vld [vmem:[#allocation8 + $0x3a0] sm:$0xff]
    %v406 = vld [vmem:[#allocation8 + $0x3a8] sm:$0xff]
    %v407 = vld [vmem:[#allocation8 + $0x3b0] sm:$0xff]
    %v408 = vld [vmem:[#allocation8 + $0x3b8] sm:$0xff]
    %v409 = vld [vmem:[#allocation8 + $0x3c0] sm:$0xff]
    %v410 = vld [vmem:[#allocation8 + $0x3c8] sm:$0xff]
    %v411 = vld [vmem:[#allocation8 + $0x3d0] sm:$0xff]
    %v412 = vld [vmem:[#allocation8 + $0x3d8] sm:$0xff]
    %v413 = vld [vmem:[#allocation8 + $0x3e0] sm:$0xff]
    %v414 = vld [vmem:[#allocation8 + $0x3e8] sm:$0xff]
    %v415 = vld [vmem:[#allocation8 + $0x3f0] sm:$0xff]
    %v416 = vld [vmem:[#allocation8 + $0x3f8] sm:$0xff]
    %v545 = vunpack.c.l.b16 %v289
    %v546 = vunpack.c.h.b16 %v289
    %v547 = vunpack.c.l.b16 %v290
    %v548 = vunpack.c.h.b16 %v290
    %v549 = vunpack.c.l.b16 %v291
    %v550 = vunpack.c.h.b16 %v291
    %v551 = vunpack.c.l.b16 %v292
    %v552 = vunpack.c.h.b16 %v292
    %v553 = vunpack.c.l.b16 %v293
    %v554 = vunpack.c.h.b16 %v293
    %v555 = vunpack.c.l.b16 %v294
    %v556 = vunpack.c.h.b16 %v294
    %v557 = vunpack.c.l.b16 %v295
    %v558 = vunpack.c.h.b16 %v295
    %v559 = vunpack.c.l.b16 %v296
    %v560 = vunpack.c.h.b16 %v296
    %v561 = vunpack.c.l.b16 %v297
    %v562 = vunpack.c.h.b16 %v297
    %v563 = vunpack.c.l.b16 %v298
    %v564 = vunpack.c.h.b16 %v298
    %v565 = vunpack.c.l.b16 %v299
    %v566 = vunpack.c.h.b16 %v299
    %v567 = vunpack.c.l.b16 %v300
    %v568 = vunpack.c.h.b16 %v300
    %v569 = vunpack.c.l.b16 %v301
    %v570 = vunpack.c.h.b16 %v301
    %v571 = vunpack.c.l.b16 %v302
    %v572 = vunpack.c.h.b16 %v302
    %v573 = vunpack.c.l.b16 %v303
    %v574 = vunpack.c.h.b16 %v303
    %v575 = vunpack.c.l.b16 %v304
    %v576 = vunpack.c.h.b16 %v304
    %v577 = vunpack.c.l.b16 %v305
    %v578 = vunpack.c.h.b16 %v305
    %v579 = vunpack.c.l.b16 %v306
    %v580 = vunpack.c.h.b16 %v306
    %v581 = vunpack.c.l.b16 %v307
    %v582 = vunpack.c.h.b16 %v307
    %v583 = vunpack.c.l.b16 %v308
    %v584 = vunpack.c.h.b16 %v308
    %v585 = vunpack.c.l.b16 %v309
    %v586 = vunpack.c.h.b16 %v309
    %v587 = vunpack.c.l.b16 %v310
    %v588 = vunpack.c.h.b16 %v310
    %v589 = vunpack.c.l.b16 %v311
    %v590 = vunpack.c.h.b16 %v311
    %v591 = vunpack.c.l.b16 %v312
    %v592 = vunpack.c.h.b16 %v312
    %v593 = vunpack.c.l.b16 %v313
    %v594 = vunpack.c.h.b16 %v313
    %v595 = vunpack.c.l.b16 %v314
    %v596 = vunpack.c.h.b16 %v314
    %v597 = vunpack.c.l.b16 %v315
    %v598 = vunpack.c.h.b16 %v315
    %v599 = vunpack.c.l.b16 %v316
    %v600 = vunpack.c.h.b16 %v316
    %v601 = vunpack.c.l.b16 %v317
    %v602 = vunpack.c.h.b16 %v317
    %v603 = vunpack.c.l.b16 %v318
    %v604 = vunpack.c.h.b16 %v318
    %v605 = vunpack.c.l.b16 %v319
    %v606 = vunpack.c.h.b16 %v319
    %v607 = vunpack.c.l.b16 %v320
    %v608 = vunpack.c.h.b16 %v320
    %v609 = vunpack.c.l.b16 %v321
    %v610 = vunpack.c.h.b16 %v321
    %v611 = vunpack.c.l.b16 %v322
    %v612 = vunpack.c.h.b16 %v322
    %v613 = vunpack.c.l.b16 %v323
    %v614 = vunpack.c.h.b16 %v323
    %v615 = vunpack.c.l.b16 %v324
    %v616 = vunpack.c.h.b16 %v324
    %v617 = vunpack.c.l.b16 %v325
    %v618 = vunpack.c.h.b16 %v325
    %v619 = vunpack.c.l.b16 %v326
    %v620 = vunpack.c.h.b16 %v326
    %v621 = vunpack.c.l.b16 %v327
    %v622 = vunpack.c.h.b16 %v327
    %v623 = vunpack.c.l.b16 %v328
    %v624 = vunpack.c.h.b16 %v328
    %v625 = vunpack.c.l.b16 %v329
    %v626 = vunpack.c.h.b16 %v329
    %v627 = vunpack.c.l.b16 %v330
    %v628 = vunpack.c.h.b16 %v330
    %v629 = vunpack.c.l.b16 %v331
    %v630 = vunpack.c.h.b16 %v331
    %v631 = vunpack.c.l.b16 %v332
    %v632 = vunpack.c.h.b16 %v332
    %v633 = vunpack.c.l.b16 %v333
    %v634 = vunpack.c.h.b16 %v333
    %v635 = vunpack.c.l.b16 %v334
    %v636 = vunpack.c.h.b16 %v334
    %v637 = vunpack.c.l.b16 %v335
    %v638 = vunpack.c.h.b16 %v335
    %v639 = vunpack.c.l.b16 %v336
    %v640 = vunpack.c.h.b16 %v336
    %v641 = vunpack.c.l.b16 %v337
    %v642 = vunpack.c.h.b16 %v337
    %v643 = vunpack.c.l.b16 %v338
    %v644 = vunpack.c.h.b16 %v338
    %v645 = vunpack.c.l.b16 %v339
    %v646 = vunpack.c.h.b16 %v339
    %v647 = vunpack.c.l.b16 %v340
    %v648 = vunpack.c.h.b16 %v340
    %v649 = vunpack.c.l.b16 %v341
    %v650 = vunpack.c.h.b16 %v341
    %v651 = vunpack.c.l.b16 %v342
    %v652 = vunpack.c.h.b16 %v342
    %v653 = vunpack.c.l.b16 %v343
    %v654 = vunpack.c.h.b16 %v343
    %v655 = vunpack.c.l.b16 %v344
    %v656 = vunpack.c.h.b16 %v344
    %v657 = vunpack.c.l.b16 %v345
    %v658 = vunpack.c.h.b16 %v345
    %v659 = vunpack.c.l.b16 %v346
    %v660 = vunpack.c.h.b16 %v346
    %v661 = vunpack.c.l.b16 %v347
    %v662 = vunpack.c.h.b16 %v347
    %v663 = vunpack.c.l.b16 %v348
    %v664 = vunpack.c.h.b16 %v348
    %v665 = vunpack.c.l.b16 %v349
    %v666 = vunpack.c.h.b16 %v349
    %v667 = vunpack.c.l.b16 %v350
    %v668 = vunpack.c.h.b16 %v350
    %v669 = vunpack.c.l.b16 %v351
    %v670 = vunpack.c.h.b16 %v351
    %v671 = vunpack.c.l.b16 %v352
    %v672 = vunpack.c.h.b16 %v352
    %v673 = vunpack.c.l.b16 %v353
    %v674 = vunpack.c.h.b16 %v353
    %v675 = vunpack.c.l.b16 %v354
    %v676 = vunpack.c.h.b16 %v354
    %v677 = vunpack.c.l.b16 %v355
    %v678 = vunpack.c.h.b16 %v355
    %v679 = vunpack.c.l.b16 %v356
    %v680 = vunpack.c.h.b16 %v356
    %v681 = vunpack.c.l.b16 %v357
    %v682 = vunpack.c.h.b16 %v357
    %v683 = vunpack.c.l.b16 %v358
    %v684 = vunpack.c.h.b16 %v358
    %v685 = vunpack.c.l.b16 %v359
    %v686 = vunpack.c.h.b16 %v359
    %v687 = vunpack.c.l.b16 %v360
    %v688 = vunpack.c.h.b16 %v360
    %v689 = vunpack.c.l.b16 %v361
    %v690 = vunpack.c.h.b16 %v361
    %v691 = vunpack.c.l.b16 %v362
    %v692 = vunpack.c.h.b16 %v362
    %v693 = vunpack.c.l.b16 %v363
    %v694 = vunpack.c.h.b16 %v363
    %v695 = vunpack.c.l.b16 %v364
    %v696 = vunpack.c.h.b16 %v364
    %v697 = vunpack.c.l.b16 %v365
    %v698 = vunpack.c.h.b16 %v365
    %v699 = vunpack.c.l.b16 %v366
    %v700 = vunpack.c.h.b16 %v366
    %v701 = vunpack.c.l.b16 %v367
    %v702 = vunpack.c.h.b16 %v367
    %v703 = vunpack.c.l.b16 %v368
    %v704 = vunpack.c.h.b16 %v368
    %v705 = vunpack.c.l.b16 %v369
    %v706 = vunpack.c.h.b16 %v369
    %v707 = vunpack.c.l.b16 %v370
    %v708 = vunpack.c.h.b16 %v370
    %v709 = vunpack.c.l.b16 %v371
    %v710 = vunpack.c.h.b16 %v371
    %v711 = vunpack.c.l.b16 %v372
    %v712 = vunpack.c.h.b16 %v372
    %v713 = vunpack.c.l.b16 %v373
    %v714 = vunpack.c.h.b16 %v373
    %v715 = vunpack.c.l.b16 %v374
    %v716 = vunpack.c.h.b16 %v374
    %v717 = vunpack.c.l.b16 %v375
    %v718 = vunpack.c.h.b16 %v375
    %v719 = vunpack.c.l.b16 %v376
    %v720 = vunpack.c.h.b16 %v376
    %v721 = vunpack.c.l.b16 %v377
    %v722 = vunpack.c.h.b16 %v377
    %v723 = vunpack.c.l.b16 %v378
    %v724 = vunpack.c.h.b16 %v378
    %v725 = vunpack.c.l.b16 %v379
    %v726 = vunpack.c.h.b16 %v379
    %v727 = vunpack.c.l.b16 %v380
    %v728 = vunpack.c.h.b16 %v380
    %v729 = vunpack.c.l.b16 %v381
    %v730 = vunpack.c.h.b16 %v381
    %v731 = vunpack.c.l.b16 %v382
    %v732 = vunpack.c.h.b16 %v382
    %v733 = vunpack.c.l.b16 %v383
    %v734 = vunpack.c.h.b16 %v383
    %v735 = vunpack.c.l.b16 %v384
    %v736 = vunpack.c.h.b16 %v384
    %v737 = vunpack.c.l.b16 %v385
    %v738 = vunpack.c.h.b16 %v385
    %v739 = vunpack.c.l.b16 %v386
    %v740 = vunpack.c.h.b16 %v386
    %v741 = vunpack.c.l.b16 %v387
    %v742 = vunpack.c.h.b16 %v387
    %v743 = vunpack.c.l.b16 %v388
    %v744 = vunpack.c.h.b16 %v388
    %v745 = vunpack.c.l.b16 %v389
    %v746 = vunpack.c.h.b16 %v389
    %v747 = vunpack.c.l.b16 %v390
    %v748 = vunpack.c.h.b16 %v390
    %v749 = vunpack.c.l.b16 %v391
    %v750 = vunpack.c.h.b16 %v391
    %v751 = vunpack.c.l.b16 %v392
    %v752 = vunpack.c.h.b16 %v392
    %v753 = vunpack.c.l.b16 %v393
    %v754 = vunpack.c.h.b16 %v393
    %v755 = vunpack.c.l.b16 %v394
    %v756 = vunpack.c.h.b16 %v394
    %v757 = vunpack.c.l.b16 %v395
    %v758 = vunpack.c.h.b16 %v395
    %v759 = vunpack.c.l.b16 %v396
    %v760 = vunpack.c.h.b16 %v396
    %v761 = vunpack.c.l.b16 %v397
    %v762 = vunpack.c.h.b16 %v397
    %v763 = vunpack.c.l.b16 %v398
    %v764 = vunpack.c.h.b16 %v398
    %v765 = vunpack.c.l.b16 %v399
    %v766 = vunpack.c.h.b16 %v399
    %v767 = vunpack.c.l.b16 %v400
    %v768 = vunpack.c.h.b16 %v400
    %v769 = vunpack.c.l.b16 %v401
    %v770 = vunpack.c.h.b16 %v401
    %v771 = vunpack.c.l.b16 %v402
    %v772 = vunpack.c.h.b16 %v402
    %v773 = vunpack.c.l.b16 %v403
    %v774 = vunpack.c.h.b16 %v403
    %v775 = vunpack.c.l.b16 %v404
    %v776 = vunpack.c.h.b16 %v404
    %v777 = vunpack.c.l.b16 %v405
    %v778 = vunpack.c.h.b16 %v405
    %v779 = vunpack.c.l.b16 %v406
    %v780 = vunpack.c.h.b16 %v406
    %v781 = vunpack.c.l.b16 %v407
    %v782 = vunpack.c.h.b16 %v407
    %v783 = vunpack.c.l.b16 %v408
    %v784 = vunpack.c.h.b16 %v408
    %v785 = vunpack.c.l.b16 %v409
    %v786 = vunpack.c.h.b16 %v409
    %v787 = vunpack.c.l.b16 %v410
    %v788 = vunpack.c.h.b16 %v410
    %v789 = vunpack.c.l.b16 %v411
    %v790 = vunpack.c.h.b16 %v411
    %v791 = vunpack.c.l.b16 %v412
    %v792 = vunpack.c.h.b16 %v412
    %v793 = vunpack.c.l.b16 %v413
    %v794 = vunpack.c.h.b16 %v413
    %v795 = vunpack.c.l.b16 %v414
    %v796 = vunpack.c.h.b16 %v414
    %v797 = vunpack.c.l.b16 %v415
    %v798 = vunpack.c.h.b16 %v415
    %v799 = vunpack.c.l.b16 %v416
    %v800 = vunpack.c.h.b16 %v416
    %v801 = vpack.c.b16 %v553, %v545
    %v802 = vpack.c.b16 %v554, %v546
    %v803 = vpack.c.b16 %v555, %v547
    %v804 = vpack.c.b16 %v556, %v548
    %v805 = vpack.c.b16 %v557, %v549
    %v806 = vpack.c.b16 %v558, %v550
    %v807 = vpack.c.b16 %v559, %v551
    %v808 = vpack.c.b16 %v560, %v552
    %v809 = vpack.c.b16 %v569, %v561
    %v810 = vpack.c.b16 %v570, %v562
    %v811 = vpack.c.b16 %v571, %v563
    %v812 = vpack.c.b16 %v572, %v564
    %v813 = vpack.c.b16 %v573, %v565
    %v814 = vpack.c.b16 %v574, %v566
    %v815 = vpack.c.b16 %v575, %v567
    %v816 = vpack.c.b16 %v576, %v568
    %v817 = vpack.c.b16 %v585, %v577
    %v818 = vpack.c.b16 %v586, %v578
    %v819 = vpack.c.b16 %v587, %v579
    %v820 = vpack.c.b16 %v588, %v580
    %v821 = vpack.c.b16 %v589, %v581
    %v822 = vpack.c.b16 %v590, %v582
    %v823 = vpack.c.b16 %v591, %v583
    %v824 = vpack.c.b16 %v592, %v584
    %v825 = vpack.c.b16 %v601, %v593
    %v826 = vpack.c.b16 %v602, %v594
    %v827 = vpack.c.b16 %v603, %v595
    %v828 = vpack.c.b16 %v604, %v596
    %v829 = vpack.c.b16 %v605, %v597
    %v830 = vpack.c.b16 %v606, %v598
    %v831 = vpack.c.b16 %v607, %v599
    %v832 = vpack.c.b16 %v608, %v600
    %v833 = vpack.c.b16 %v617, %v609
    %v834 = vpack.c.b16 %v618, %v610
    %v835 = vpack.c.b16 %v619, %v611
    %v836 = vpack.c.b16 %v620, %v612
    %v837 = vpack.c.b16 %v621, %v613
    %v838 = vpack.c.b16 %v622, %v614
    %v839 = vpack.c.b16 %v623, %v615
    %v840 = vpack.c.b16 %v624, %v616
    %v841 = vpack.c.b16 %v633, %v625
    %v842 = vpack.c.b16 %v634, %v626
    %v843 = vpack.c.b16 %v635, %v627
    %v844 = vpack.c.b16 %v636, %v628
    %v845 = vpack.c.b16 %v637, %v629
    %v846 = vpack.c.b16 %v638, %v630
    %v847 = vpack.c.b16 %v639, %v631
    %v848 = vpack.c.b16 %v640, %v632
    %v849 = vpack.c.b16 %v649, %v641
    %v850 = vpack.c.b16 %v650, %v642
    %v851 = vpack.c.b16 %v651, %v643
    %v852 = vpack.c.b16 %v652, %v644
    %v853 = vpack.c.b16 %v653, %v645
    %v854 = vpack.c.b16 %v654, %v646
    %v855 = vpack.c.b16 %v655, %v647
    %v856 = vpack.c.b16 %v656, %v648
    %v857 = vpack.c.b16 %v665, %v657
    %v858 = vpack.c.b16 %v666, %v658
    %v859 = vpack.c.b16 %v667, %v659
    %v860 = vpack.c.b16 %v668, %v660
    %v861 = vpack.c.b16 %v669, %v661
    %v862 = vpack.c.b16 %v670, %v662
    %v863 = vpack.c.b16 %v671, %v663
    %v864 = vpack.c.b16 %v672, %v664
    %v865 = vpack.c.b16 %v681, %v673
    %v866 = vpack.c.b16 %v682, %v674
    %v867 = vpack.c.b16 %v683, %v675
    %v868 = vpack.c.b16 %v684, %v676
    %v869 = vpack.c.b16 %v685, %v677
    %v870 = vpack.c.b16 %v686, %v678
    %v871 = vpack.c.b16 %v687, %v679
    %v872 = vpack.c.b16 %v688, %v680
    %v873 = vpack.c.b16 %v697, %v689
    %v874 = vpack.c.b16 %v698, %v690
    %v875 = vpack.c.b16 %v699, %v691
    %v876 = vpack.c.b16 %v700, %v692
    %v877 = vpack.c.b16 %v701, %v693
    %v878 = vpack.c.b16 %v702, %v694
    %v879 = vpack.c.b16 %v703, %v695
    %v880 = vpack.c.b16 %v704, %v696
    %v881 = vpack.c.b16 %v713, %v705
    %v882 = vpack.c.b16 %v714, %v706
    %v883 = vpack.c.b16 %v715, %v707
    %v884 = vpack.c.b16 %v716, %v708
    %v885 = vpack.c.b16 %v717, %v709
    %v886 = vpack.c.b16 %v718, %v710
    %v887 = vpack.c.b16 %v719, %v711
    %v888 = vpack.c.b16 %v720, %v712
    %v889 = vpack.c.b16 %v729, %v721
    %v890 = vpack.c.b16 %v730, %v722
    %v891 = vpack.c.b16 %v731, %v723
    %v892 = vpack.c.b16 %v732, %v724
    %v893 = vpack.c.b16 %v733, %v725
    %v894 = vpack.c.b16 %v734, %v726
    %v895 = vpack.c.b16 %v735, %v727
    %v896 = vpack.c.b16 %v736, %v728
    %v897 = vpack.c.b16 %v745, %v737
    %v898 = vpack.c.b16 %v746, %v738
    %v899 = vpack.c.b16 %v747, %v739
    %v900 = vpack.c.b16 %v748, %v740
    %v901 = vpack.c.b16 %v749, %v741
    %v902 = vpack.c.b16 %v750, %v742
    %v903 = vpack.c.b16 %v751, %v743
    %v904 = vpack.c.b16 %v752, %v744
    %v905 = vpack.c.b16 %v761, %v753
    %v906 = vpack.c.b16 %v762, %v754
    %v907 = vpack.c.b16 %v763, %v755
    %v908 = vpack.c.b16 %v764, %v756
    %v909 = vpack.c.b16 %v765, %v757
    %v910 = vpack.c.b16 %v766, %v758
    %v911 = vpack.c.b16 %v767, %v759
    %v912 = vpack.c.b16 %v768, %v760
    %v913 = vpack.c.b16 %v777, %v769
    %v914 = vpack.c.b16 %v778, %v770
    %v915 = vpack.c.b16 %v779, %v771
    %v916 = vpack.c.b16 %v780, %v772
    %v917 = vpack.c.b16 %v781, %v773
    %v918 = vpack.c.b16 %v782, %v774
    %v919 = vpack.c.b16 %v783, %v775
    %v920 = vpack.c.b16 %v784, %v776
    %v921 = vpack.c.b16 %v793, %v785
    %v922 = vpack.c.b16 %v794, %v786
    %v923 = vpack.c.b16 %v795, %v787
    %v924 = vpack.c.b16 %v796, %v788
    %v925 = vpack.c.b16 %v797, %v789
    %v926 = vpack.c.b16 %v798, %v790
    %v927 = vpack.c.b16 %v799, %v791
    %v928 = vpack.c.b16 %v800, %v792
    %1057 = vmatprep.subr.bf16.mxu0 %v802
    %1058 = vmatpush1.bf16.msra.mxu0 %v801
    %1059 = vmatprep.subr.bf16.mxu0 %v810
    %1060 = vmatpush1.bf16.msra.mxu0 %v809
    %1061 = vmatprep.subr.bf16.mxu0 %v818
    %1062 = vmatpush1.bf16.msra.mxu0 %v817
    %1063 = vmatprep.subr.bf16.mxu0 %v826
    %1064 = vmatpush1.bf16.msra.mxu0 %v825
    %1065 = vmatprep.subr.bf16.mxu0 %v834
    %1066 = vmatpush1.bf16.msra.mxu0 %v833
    %1067 = vmatprep.subr.bf16.mxu0 %v842
    %1068 = vmatpush1.bf16.msra.mxu0 %v841
    %1069 = vmatprep.subr.bf16.mxu0 %v850
    %1070 = vmatpush1.bf16.msra.mxu0 %v849
    %1071 = vmatprep.subr.bf16.mxu0 %v858
    %1072 = vmatpush1.bf16.msra.mxu0 %v857
    %1073 = vmatprep.subr.bf16.mxu0 %v866
    %1074 = vmatpush1.bf16.msra.mxu0 %v865
    %1075 = vmatprep.subr.bf16.mxu0 %v874
    %1076 = vmatpush1.bf16.msra.mxu0 %v873
    %1077 = vmatprep.subr.bf16.mxu0 %v882
    %1078 = vmatpush1.bf16.msra.mxu0 %v881
    %1079 = vmatprep.subr.bf16.mxu0 %v890
    %1080 = vmatpush1.bf16.msra.mxu0 %v889
    %1081 = vmatprep.subr.bf16.mxu0 %v898
    %1082 = vmatpush1.bf16.msra.mxu0 %v897
    %1083 = vmatprep.subr.bf16.mxu0 %v906
    %1084 = vmatpush1.bf16.msra.mxu0 %v905
    %1085 = vmatprep.subr.bf16.mxu0 %v914
    %1086 = vmatpush1.bf16.msra.mxu0 %v913
    %1087 = vmatprep.subr.bf16.mxu0 %v922
    %1088 = vmatpush1.bf16.msra.mxu0 %v921
    %1089 = vmatprep.mubr.bf16.mxu0 %v288
    %1090 = vmatmul.mubr.bf16.gmra.mrb[0].mxu0 %v287
    %v1091 = vpop.f32.mrb[0].mxu0
    %v1092 = vadd.f32 0.0, %v1091
    %v1093 = vpop.f32.mrb[0].mxu0
    %v1094 = vadd.f32 0.0, %v1093
    %v1095 = vpop.f32.mrb[0].mxu0
    %v1096 = vpop.f32.mrb[0].mxu0
    %1097 = vdwg.mxu0
    %1098 = vmatprep.subr.bf16.mxu0 %v804
    %1099 = vmatpush1.bf16.msra.mxu0 %v803
    %1100 = vmatprep.subr.bf16.mxu0 %v812
    %1101 = vmatpush1.bf16.msra.mxu0 %v811
    %1102 = vmatprep.subr.bf16.mxu0 %v820
    %1103 = vmatpush1.bf16.msra.mxu0 %v819
    %1104 = vmatprep.subr.bf16.mxu0 %v828
    %1105 = vmatpush1.bf16.msra.mxu0 %v827
    %1106 = vmatprep.subr.bf16.mxu0 %v836
    %1107 = vmatpush1.bf16.msra.mxu0 %v835
    %1108 = vmatprep.subr.bf16.mxu0 %v844
    %1109 = vmatpush1.bf16.msra.mxu0 %v843
    %1110 = vmatprep.subr.bf16.mxu0 %v852
    %1111 = vmatpush1.bf16.msra.mxu0 %v851
    %1112 = vmatprep.subr.bf16.mxu0 %v860
    %1113 = vmatpush1.bf16.msra.mxu0 %v859
    %1114 = vmatprep.subr.bf16.mxu0 %v868
    %1115 = vmatpush1.bf16.msra.mxu0 %v867
    %1116 = vmatprep.subr.bf16.mxu0 %v876
    %1117 = vmatpush1.bf16.msra.mxu0 %v875
    %1118 = vmatprep.subr.bf16.mxu0 %v884
    %1119 = vmatpush1.bf16.msra.mxu0 %v883
    %1120 = vmatprep.subr.bf16.mxu0 %v892
    %1121 = vmatpush1.bf16.msra.mxu0 %v891
    %1122 = vmatprep.subr.bf16.mxu0 %v900
    %1123 = vmatpush1.bf16.msra.mxu0 %v899
    %1124 = vmatprep.subr.bf16.mxu0 %v908
    %1125 = vmatpush1.bf16.msra.mxu0 %v907
    %1126 = vmatprep.subr.bf16.mxu0 %v916
    %1127 = vmatpush1.bf16.msra.mxu0 %v915
    %1128 = vmatprep.subr.bf16.mxu0 %v924
    %1129 = vmatpush1.bf16.msra.mxu0 %v923
    %1130 = vmatprep.mubr.bf16.mxu0 %v288
    %1131 = vmatmul.mubr.bf16.gmra.mrb[0].mxu0 %v287
    %v1132 = vpop.f32.mrb[0].mxu0
    %v1133 = vadd.f32 0.0, %v1132
    %v1134 = vpop.f32.mrb[0].mxu0
    %v1135 = vadd.f32 0.0, %v1134
    %v1136 = vpop.f32.mrb[0].mxu0
    %v1137 = vpop.f32.mrb[0].mxu0
    %1138 = vdwg.mxu0
    %1139 = vmatprep.subr.bf16.mxu0 %v806
    %1140 = vmatpush1.bf16.msra.mxu0 %v805
    %1141 = vmatprep.subr.bf16.mxu0 %v814
    %1142 = vmatpush1.bf16.msra.mxu0 %v813
    %1143 = vmatprep.subr.bf16.mxu0 %v822
    %1144 = vmatpush1.bf16.msra.mxu0 %v821
    %1145 = vmatprep.subr.bf16.mxu0 %v830
    %1146 = vmatpush1.bf16.msra.mxu0 %v829
    %1147 = vmatprep.subr.bf16.mxu0 %v838
    %1148 = vmatpush1.bf16.msra.mxu0 %v837
    %1149 = vmatprep.subr.bf16.mxu0 %v846
    %1150 = vmatpush1.bf16.msra.mxu0 %v845
    %1151 = vmatprep.subr.bf16.mxu0 %v854
    %1152 = vmatpush1.bf16.msra.mxu0 %v853
    %1153 = vmatprep.subr.bf16.mxu0 %v862
    %1154 = vmatpush1.bf16.msra.mxu0 %v861
    %1155 = vmatprep.subr.bf16.mxu0 %v870
    %1156 = vmatpush1.bf16.msra.mxu0 %v869
    %1157 = vmatprep.subr.bf16.mxu0 %v878
    %1158 = vmatpush1.bf16.msra.mxu0 %v877
    %1159 = vmatprep.subr.bf16.mxu0 %v886
    %1160 = vmatpush1.bf16.msra.mxu0 %v885
    %1161 = vmatprep.subr.bf16.mxu0 %v894
    %1162 = vmatpush1.bf16.msra.mxu0 %v893
    %1163 = vmatprep.subr.bf16.mxu0 %v902
    %1164 = vmatpush1.bf16.msra.mxu0 %v901
    %1165 = vmatprep.subr.bf16.mxu0 %v910
    %1166 = vmatpush1.bf16.msra.mxu0 %v909
    %1167 = vmatprep.subr.bf16.mxu0 %v918
    %1168 = vmatpush1.bf16.msra.mxu0 %v917
    %1169 = vmatprep.subr.bf16.mxu0 %v926
    %1170 = vmatpush1.bf16.msra.mxu0 %v925
    %1171 = vmatprep.mubr.bf16.mxu0 %v288
    %1172 = vmatmul.mubr.bf16.gmra.mrb[0].mxu0 %v287
    %v1173 = vpop.f32.mrb[0].mxu0
    %v1174 = vadd.f32 0.0, %v1173
    %v1175 = vpop.f32.mrb[0].mxu0
    %v1176 = vadd.f32 0.0, %v1175
    %v1177 = vpop.f32.mrb[0].mxu0
    %v1178 = vpop.f32.mrb[0].mxu0
    %1179 = vdwg.mxu0
    %1180 = vmatprep.subr.bf16.mxu0 %v808
    %1181 = vmatpush1.bf16.msra.mxu0 %v807
    %1182 = vmatprep.subr.bf16.mxu0 %v816
    %1183 = vmatpush1.bf16.msra.mxu0 %v815
    %1184 = vmatprep.subr.bf16.mxu0 %v824
    %1185 = vmatpush1.bf16.msra.mxu0 %v823
    %1186 = vmatprep.subr.bf16.mxu0 %v832
    %1187 = vmatpush1.bf16.msra.mxu0 %v831
    %1188 = vmatprep.subr.bf16.mxu0 %v840
    %1189 = vmatpush1.bf16.msra.mxu0 %v839
    %1190 = vmatprep.subr.bf16.mxu0 %v848
    %1191 = vmatpush1.bf16.msra.mxu0 %v847
    %1192 = vmatprep.subr.bf16.mxu0 %v856
    %1193 = vmatpush1.bf16.msra.mxu0 %v855
    %1194 = vmatprep.subr.bf16.mxu0 %v864
    %1195 = vmatpush1.bf16.msra.mxu0 %v863
    %1196 = vmatprep.subr.bf16.mxu0 %v872
    %1197 = vmatpush1.bf16.msra.mxu0 %v871
    %1198 = vmatprep.subr.bf16.mxu0 %v880
    %1199 = vmatpush1.bf16.msra.mxu0 %v879
    %1200 = vmatprep.subr.bf16.mxu0 %v888
    %1201 = vmatpush1.bf16.msra.mxu0 %v887
    %1202 = vmatprep.subr.bf16.mxu0 %v896
    %1203 = vmatpush1.bf16.msra.mxu0 %v895
    %1204 = vmatprep.subr.bf16.mxu0 %v904
    %1205 = vmatpush1.bf16.msra.mxu0 %v903
    %1206 = vmatprep.subr.bf16.mxu0 %v912
    %1207 = vmatpush1.bf16.msra.mxu0 %v911
    %1208 = vmatprep.subr.bf16.mxu0 %v920
    %1209 = vmatpush1.bf16.msra.mxu0 %v919
    %1210 = vmatprep.subr.bf16.mxu0 %v928
    %1211 = vmatpush1.bf16.msra.mxu0 %v927
    %1212 = vmatprep.mubr.bf16.mxu0 %v288
    %1213 = vmatmul.mubr.bf16.gmra.mrb[0].mxu0 %v287
    %v1214 = vpop.f32.mrb[0].mxu0
    %v1215 = vadd.f32 0.0, %v1214
    %v1216 = vpop.f32.mrb[0].mxu0
    %v1217 = vadd.f32 0.0, %v1216
    %v1218 = vpop.f32.mrb[0].mxu0
    %v1219 = vpop.f32.mrb[0].mxu0
    %1220 = vdwg.mxu0
    %v1222 = vlaneseq
    %v1223 = vshrl.u32 %v1222, 7
    %v1224 = vsub.s32 0, %v1223
    %v1225 = vrot.slane %v258, %v1224
    %v1226 = vlaneseq
    %v1227 = vshrl.u32 %v1226, 7
    %v1228 = vsub.s32 1, %v1227
    %v1229 = vrot.slane %v258, %v1228
    %v1230 = vlaneseq
    %v1231 = vshrl.u32 %v1230, 7
    %v1232 = vsub.s32 2, %v1231
    %v1233 = vrot.slane %v258, %v1232
    %v1234 = vlaneseq
    %v1235 = vshrl.u32 %v1234, 7
    %v1236 = vsub.s32 3, %v1235
    %v1237 = vrot.slane %v258, %v1236
    %v1242 = vadd.f32 %v1174, %v1225
    %v1243 = vadd.f32 %v1176, %v1229
    %v1244 = vadd.f32 %v1215, %v1233
    %v1245 = vadd.f32 %v1217, %v1237
    %v1246 = vxor.u32 %v1242, 2147483648
    %v1247 = vxor.u32 %v1243, 2147483648
    %v1248 = vxor.u32 %v1244, 2147483648
    %v1249 = vmul.f32 %v1246, 1.442695
    %v1250 = vpow.pop %v1249
    %v1251 = vmul.f32 %v1247, 1.442695
    %v1252 = vpow.pop %v1251
    %v1253 = vmul.f32 %v1248, 1.442695
    %v1254 = vpow.pop %v1253
    %v1255 = vadd.f32 %v1250, 1.0
    %v1256 = vadd.f32 %v1252, 1.0
    %v1257 = vadd.f32 %v1254, 1.0
    %v1258 = vrcp.pop %v1255
    %v1259 = vmul.f32 1.0, %v1258
    %v1260 = vrcp.pop %v1256
    %v1261 = vmul.f32 1.0, %v1260
    %v1262 = vrcp.pop %v1257
    %v1263 = vmul.f32 1.0, %v1262
    %v1264 = vtanh.pop %v1245
    %v1265 = vmul.f32 %v1261, 0.0
    %v1266 = vmul.f32 %v1259, %v1264
    %v1267 = vadd.f32 %v1265, %v1266
    %v1268 = vtanh.pop %v1267
    %v1269 = vmul.f32 %v1263, %v1268
    %v1274 = vrot.slane %v1092, 7
    %v1275 = vrot.slane %v1094, 7
    %v1276 = vrot.slane %v1133, 7
    %v1277 = vrot.slane %v1135, 7
    %v1282 = vadd.f32 %v183, %v1274
    %v1283 = vadd.f32 %v185, %v1275
    %v1284 = vadd.f32 %v254, %v1276
    %v1285 = vadd.f32 %v256, %v1277
    %v1286 = vxor.u32 %v1282, 2147483648
    %v1287 = vxor.u32 %v1283, 2147483648
    %v1288 = vxor.u32 %v1284, 2147483648
    %v1289 = vmul.f32 %v1286, 1.442695
    %v1290 = vpow.pop %v1289
    %v1291 = vmul.f32 %v1287, 1.442695
    %v1292 = vpow.pop %v1291
    %v1293 = vmul.f32 %v1288, 1.442695
    %v1294 = vpow.pop %v1293
    %v1295 = vadd.f32 %v1290, 1.0
    %v1296 = vadd.f32 %v1292, 1.0
    %v1297 = vadd.f32 %v1294, 1.0
    %v1298 = vrcp.pop %v1295
    %v1299 = vmul.f32 1.0, %v1298
    %v1300 = vrcp.pop %v1296
    %v1301 = vmul.f32 1.0, %v1300
    %v1302 = vrcp.pop %v1297
    %v1303 = vmul.f32 1.0, %v1302
    %v1304 = vtanh.pop %v1285
    %v1306 = vrot.slane %v284, 7
    %v1308 = vmul.f32 %v1301, %v1306
    %v1309 = vmul.f32 %v1299, %v1304
    %v1310 = vadd.f32 %v1308, %v1309
    %v1311 = vtanh.pop %v1310
    %v1312 = vmul.f32 %v1303, %v1311
    %v1314 = vrot.slane %v1269, 7
    %v1316 = vpack.c.bf16 %v1312, %v1312
    %v1317 = vpack.c.bf16 %v1314, %v1314
    %v1319 = vshrl.u32 %v1316, 16
    %v1322 = vshrl.u32 %v1317, 16
    %1326 = vmatprep.subr.bf16.mxu0 %v802
    %1327 = vmatpush1.bf16.msra.mxu0 %v801
    %1328 = vmatprep.subr.bf16.mxu0 %v810
    %1329 = vmatpush1.bf16.msra.mxu0 %v809
    %1330 = vmatprep.subr.bf16.mxu0 %v818
    %1331 = vmatpush1.bf16.msra.mxu0 %v817
    %1332 = vmatprep.subr.bf16.mxu0 %v826
    %1333 = vmatpush1.bf16.msra.mxu0 %v825
    %1334 = vmatprep.subr.bf16.mxu0 %v834
    %1335 = vmatpush1.bf16.msra.mxu0 %v833
    %1336 = vmatprep.subr.bf16.mxu0 %v842
    %1337 = vmatpush1.bf16.msra.mxu0 %v841
    %1338 = vmatprep.subr.bf16.mxu0 %v850
    %1339 = vmatpush1.bf16.msra.mxu0 %v849
    %1340 = vmatprep.subr.bf16.mxu0 %v858
    %1341 = vmatpush1.bf16.msra.mxu0 %v857
    %1342 = vmatprep.subr.bf16.mxu0 %v866
    %1343 = vmatpush1.bf16.msra.mxu0 %v865
    %1344 = vmatprep.subr.bf16.mxu0 %v874
    %1345 = vmatpush1.bf16.msra.mxu0 %v873
    %1346 = vmatprep.subr.bf16.mxu0 %v882
    %1347 = vmatpush1.bf16.msra.mxu0 %v881
    %1348 = vmatprep.subr.bf16.mxu0 %v890
    %1349 = vmatpush1.bf16.msra.mxu0 %v889
    %1350 = vmatprep.subr.bf16.mxu0 %v898
    %1351 = vmatpush1.bf16.msra.mxu0 %v897
    %1352 = vmatprep.subr.bf16.mxu0 %v906
    %1353 = vmatpush1.bf16.msra.mxu0 %v905
    %1354 = vmatprep.subr.bf16.mxu0 %v914
    %1355 = vmatpush1.bf16.msra.mxu0 %v913
    %1356 = vmatprep.subr.bf16.mxu0 %v922
    %1357 = vmatpush1.bf16.msra.mxu0 %v921
    %1358 = vmatprep.mubr.bf16.mxu0 %v1322
    %1359 = vmatmul.mubr.bf16.gmra.mrb[0].mxu0 %v1319
    %v1360 = vpop.f32.mrb[0].mxu0
    %v1361 = vadd.f32 0.0, %v1360
    %v1362 = vpop.f32.mrb[0].mxu0
    %v1363 = vadd.f32 0.0, %v1362
    %v1364 = vpop.f32.mrb[0].mxu0
    %v1365 = vpop.f32.mrb[0].mxu0
    %1366 = vdwg.mxu0
    %1367 = vmatprep.subr.bf16.mxu0 %v804
    %1368 = vmatpush1.bf16.msra.mxu0 %v803
    %1369 = vmatprep.subr.bf16.mxu0 %v812
    %1370 = vmatpush1.bf16.msra.mxu0 %v811
    %1371 = vmatprep.subr.bf16.mxu0 %v820
    %1372 = vmatpush1.bf16.msra.mxu0 %v819
    %1373 = vmatprep.subr.bf16.mxu0 %v828
    %1374 = vmatpush1.bf16.msra.mxu0 %v827
    %1375 = vmatprep.subr.bf16.mxu0 %v836
    %1376 = vmatpush1.bf16.msra.mxu0 %v835
    %1377 = vmatprep.subr.bf16.mxu0 %v844
    %1378 = vmatpush1.bf16.msra.mxu0 %v843
    %1379 = vmatprep.subr.bf16.mxu0 %v852
    %1380 = vmatpush1.bf16.msra.mxu0 %v851
    %1381 = vmatprep.subr.bf16.mxu0 %v860
    %1382 = vmatpush1.bf16.msra.mxu0 %v859
    %1383 = vmatprep.subr.bf16.mxu0 %v868
    %1384 = vmatpush1.bf16.msra.mxu0 %v867
    %1385 = vmatprep.subr.bf16.mxu0 %v876
    %1386 = vmatpush1.bf16.msra.mxu0 %v875
    %1387 = vmatprep.subr.bf16.mxu0 %v884
    %1388 = vmatpush1.bf16.msra.mxu0 %v883
    %1389 = vmatprep.subr.bf16.mxu0 %v892
    %1390 = vmatpush1.bf16.msra.mxu0 %v891
    %1391 = vmatprep.subr.bf16.mxu0 %v900
    %1392 = vmatpush1.bf16.msra.mxu0 %v899
    %1393 = vmatprep.subr.bf16.mxu0 %v908
    %1394 = vmatpush1.bf16.msra.mxu0 %v907
    %1395 = vmatprep.subr.bf16.mxu0 %v916
    %1396 = vmatpush1.bf16.msra.mxu0 %v915
    %1397 = vmatprep.subr.bf16.mxu0 %v924
    %1398 = vmatpush1.bf16.msra.mxu0 %v923
    %1399 = vmatprep.mubr.bf16.mxu0 %v1322
    %1400 = vmatmul.mubr.bf16.gmra.mrb[0].mxu0 %v1319
    %v1401 = vpop.f32.mrb[0].mxu0
    %v1402 = vadd.f32 0.0, %v1401
    %v1403 = vpop.f32.mrb[0].mxu0
    %v1404 = vadd.f32 0.0, %v1403
    %v1405 = vpop.f32.mrb[0].mxu0
    %v1406 = vpop.f32.mrb[0].mxu0
    %1407 = vdwg.mxu0
    %1408 = vmatprep.subr.bf16.mxu0 %v806
    %1409 = vmatpush1.bf16.msra.mxu0 %v805
    %1410 = vmatprep.subr.bf16.mxu0 %v814
    %1411 = vmatpush1.bf16.msra.mxu0 %v813
    %1412 = vmatprep.subr.bf16.mxu0 %v822
    %1413 = vmatpush1.bf16.msra.mxu0 %v821
    %1414 = vmatprep.subr.bf16.mxu0 %v830
    %1415 = vmatpush1.bf16.msra.mxu0 %v829
    %1416 = vmatprep.subr.bf16.mxu0 %v838
    %1417 = vmatpush1.bf16.msra.mxu0 %v837
    %1418 = vmatprep.subr.bf16.mxu0 %v846
    %1419 = vmatpush1.bf16.msra.mxu0 %v845
    %1420 = vmatprep.subr.bf16.mxu0 %v854
    %1421 = vmatpush1.bf16.msra.mxu0 %v853
    %1422 = vmatprep.subr.bf16.mxu0 %v862
    %1423 = vmatpush1.bf16.msra.mxu0 %v861
    %1424 = vmatprep.subr.bf16.mxu0 %v870
    %1425 = vmatpush1.bf16.msra.mxu0 %v869
    %1426 = vmatprep.subr.bf16.mxu0 %v878
    %1427 = vmatpush1.bf16.msra.mxu0 %v877
    %1428 = vmatprep.subr.bf16.mxu0 %v886
    %1429 = vmatpush1.bf16.msra.mxu0 %v885
    %1430 = vmatprep.subr.bf16.mxu0 %v894
    %1431 = vmatpush1.bf16.msra.mxu0 %v893
    %1432 = vmatprep.subr.bf16.mxu0 %v902
    %1433 = vmatpush1.bf16.msra.mxu0 %v901
    %1434 = vmatprep.subr.bf16.mxu0 %v910
    %1435 = vmatpush1.bf16.msra.mxu0 %v909
    %1436 = vmatprep.subr.bf16.mxu0 %v918
    %1437 = vmatpush1.bf16.msra.mxu0 %v917
    %1438 = vmatprep.subr.bf16.mxu0 %v926
    %1439 = vmatpush1.bf16.msra.mxu0 %v925
    %1440 = vmatprep.mubr.bf16.mxu0 %v1322
    %1441 = vmatmul.mubr.bf16.gmra.mrb[0].mxu0 %v1319
    %v1442 = vpop.f32.mrb[0].mxu0
    %v1443 = vadd.f32 0.0, %v1442
    %v1444 = vpop.f32.mrb[0].mxu0
    %v1445 = vadd.f32 0.0, %v1444
    %v1446 = vpop.f32.mrb[0].mxu0
    %v1447 = vpop.f32.mrb[0].mxu0
    %1448 = vdwg.mxu0
    %1449 = vmatprep.subr.bf16.mxu0 %v808
    %1450 = vmatpush1.bf16.msra.mxu0 %v807
    %1451 = vmatprep.subr.bf16.mxu0 %v816
    %1452 = vmatpush1.bf16.msra.mxu0 %v815
    %1453 = vmatprep.subr.bf16.mxu0 %v824
    %1454 = vmatpush1.bf16.msra.mxu0 %v823
    %1455 = vmatprep.subr.bf16.mxu0 %v832
    %1456 = vmatpush1.bf16.msra.mxu0 %v831
    %1457 = vmatprep.subr.bf16.mxu0 %v840
    %1458 = vmatpush1.bf16.msra.mxu0 %v839
    %1459 = vmatprep.subr.bf16.mxu0 %v848
    %1460 = vmatpush1.bf16.msra.mxu0 %v847
    %1461 = vmatprep.subr.bf16.mxu0 %v856
    %1462 = vmatpush1.bf16.msra.mxu0 %v855
    %1463 = vmatprep.subr.bf16.mxu0 %v864
    %1464 = vmatpush1.bf16.msra.mxu0 %v863
    %1465 = vmatprep.subr.bf16.mxu0 %v872
    %1466 = vmatpush1.bf16.msra.mxu0 %v871
    %1467 = vmatprep.subr.bf16.mxu0 %v880
    %1468 = vmatpush1.bf16.msra.mxu0 %v879
    %1469 = vmatprep.subr.bf16.mxu0 %v888
    %1470 = vmatpush1.bf16.msra.mxu0 %v887
    %1471 = vmatprep.subr.bf16.mxu0 %v896
    %1472 = vmatpush1.bf16.msra.mxu0 %v895
    %1473 = vmatprep.subr.bf16.mxu0 %v904
    %1474 = vmatpush1.bf16.msra.mxu0 %v903
    %1475 = vmatprep.subr.bf16.mxu0 %v912
    %1476 = vmatpush1.bf16.msra.mxu0 %v911
    %1477 = vmatprep.subr.bf16.mxu0 %v920
    %1478 = vmatpush1.bf16.msra.mxu0 %v919
    %1479 = vmatprep.subr.bf16.mxu0 %v928
    %1480 = vmatpush1.bf16.msra.mxu0 %v927
    %1481 = vmatprep.mubr.bf16.mxu0 %v1322
    %1482 = vmatmul.mubr.bf16.gmra.mrb[0].mxu0 %v1319
    %v1483 = vpop.f32.mrb[0].mxu0
    %v1484 = vadd.f32 0.0, %v1483
    %v1485 = vpop.f32.mrb[0].mxu0
    %v1486 = vadd.f32 0.0, %v1485
    %v1487 = vpop.f32.mrb[0].mxu0
    %v1488 = vpop.f32.mrb[0].mxu0
    %1489 = vdwg.mxu0
    %v1490 = vadd.f32 %v1443, %v1225
    %v1491 = vadd.f32 %v1445, %v1229
    %v1492 = vadd.f32 %v1484, %v1233
    %v1493 = vadd.f32 %v1486, %v1237
    %v1494 = vxor.u32 %v1490, 2147483648
    %v1495 = vxor.u32 %v1491, 2147483648
    %v1496 = vxor.u32 %v1492, 2147483648
    %v1497 = vmul.f32 %v1494, 1.442695
    %v1498 = vpow.pop %v1497
    %v1499 = vmul.f32 %v1495, 1.442695
    %v1500 = vpow.pop %v1499
    %v1501 = vmul.f32 %v1496, 1.442695
    %v1502 = vpow.pop %v1501
    %v1503 = vadd.f32 %v1498, 1.0
    %v1504 = vadd.f32 %v1500, 1.0
    %v1505 = vadd.f32 %v1502, 1.0
    %v1506 = vrcp.pop %v1503
    %v1507 = vmul.f32 1.0, %v1506
    %v1508 = vrcp.pop %v1504
    %v1509 = vmul.f32 1.0, %v1508
    %v1510 = vrcp.pop %v1505
    %v1511 = vmul.f32 1.0, %v1510
    %v1512 = vtanh.pop %v1493
    %v1513 = vmul.f32 %v1509, %v1267
    %v1514 = vmul.f32 %v1507, %v1512
    %v1515 = vadd.f32 %v1513, %v1514
    %v1516 = vtanh.pop %v1515
    %v1517 = vmul.f32 %v1511, %v1516
    %v1522 = vrot.slane %v1361, 6
    %v1523 = vrot.slane %v1363, 6
    %v1524 = vrot.slane %v1402, 6
    %v1525 = vrot.slane %v1404, 6
    %v1530 = vadd.f32 %v183, %v1522
    %v1531 = vadd.f32 %v185, %v1523
    %v1532 = vadd.f32 %v254, %v1524
    %v1533 = vadd.f32 %v256, %v1525
    %v1534 = vxor.u32 %v1530, 2147483648
    %v1535 = vxor.u32 %v1531, 2147483648
    %v1536 = vxor.u32 %v1532, 2147483648
    %v1537 = vmul.f32 %v1534, 1.442695
    %v1538 = vpow.pop %v1537
    %v1539 = vmul.f32 %v1535, 1.442695
    %v1540 = vpow.pop %v1539
    %v1541 = vmul.f32 %v1536, 1.442695
    %v1542 = vpow.pop %v1541
    %v1543 = vadd.f32 %v1538, 1.0
    %v1544 = vadd.f32 %v1540, 1.0
    %v1545 = vadd.f32 %v1542, 1.0
    %v1546 = vrcp.pop %v1543
    %v1547 = vmul.f32 1.0, %v1546
    %v1548 = vrcp.pop %v1544
    %v1549 = vmul.f32 1.0, %v1548
    %v1550 = vrcp.pop %v1545
    %v1551 = vmul.f32 1.0, %v1550
    %v1552 = vtanh.pop %v1533
    %v1554 = vrot.slane %v1310, 7
    %v1556 = vmul.f32 %v1549, %v1554
    %v1557 = vmul.f32 %v1547, %v1552
    %v1558 = vadd.f32 %v1556, %v1557
    %v1559 = vtanh.pop %v1558
    %v1560 = vmul.f32 %v1551, %v1559
    %v1562 = vrot.slane %v1517, 6
    %v1564 = vpack.c.bf16 %v1560, %v1560
    %v1565 = vpack.c.bf16 %v1562, %v1562
    %v1568 = vrot.slane %v1564, 1
    %v1569 = vrot.slane %v1565, 1
    %1572 = vmatprep.subr.bf16.mxu0 %v802
    %1573 = vmatpush1.bf16.msra.mxu0 %v801
    %1574 = vmatprep.subr.bf16.mxu0 %v810
    %1575 = vmatpush1.bf16.msra.mxu0 %v809
    %1576 = vmatprep.subr.bf16.mxu0 %v818
    %1577 = vmatpush1.bf16.msra.mxu0 %v817
    %1578 = vmatprep.subr.bf16.mxu0 %v826
    %1579 = vmatpush1.bf16.msra.mxu0 %v825
    %1580 = vmatprep.subr.bf16.mxu0 %v834
    %1581 = vmatpush1.bf16.msra.mxu0 %v833
    %1582 = vmatprep.subr.bf16.mxu0 %v842
    %1583 = vmatpush1.bf16.msra.mxu0 %v841
    %1584 = vmatprep.subr.bf16.mxu0 %v850
    %1585 = vmatpush1.bf16.msra.mxu0 %v849
    %1586 = vmatprep.subr.bf16.mxu0 %v858
    %1587 = vmatpush1.bf16.msra.mxu0 %v857
    %1588 = vmatprep.subr.bf16.mxu0 %v866
    %1589 = vmatpush1.bf16.msra.mxu0 %v865
    %1590 = vmatprep.subr.bf16.mxu0 %v874
    %1591 = vmatpush1.bf16.msra.mxu0 %v873
    %1592 = vmatprep.subr.bf16.mxu0 %v882
    %1593 = vmatpush1.bf16.msra.mxu0 %v881
    %1594 = vmatprep.subr.bf16.mxu0 %v890
    %1595 = vmatpush1.bf16.msra.mxu0 %v889
    %1596 = vmatprep.subr.bf16.mxu0 %v898
    %1597 = vmatpush1.bf16.msra.mxu0 %v897
    %1598 = vmatprep.subr.bf16.mxu0 %v906
    %1599 = vmatpush1.bf16.msra.mxu0 %v905
    %1600 = vmatprep.subr.bf16.mxu0 %v914
    %1601 = vmatpush1.bf16.msra.mxu0 %v913
    %1602 = vmatprep.subr.bf16.mxu0 %v922
    %1603 = vmatpush1.bf16.msra.mxu0 %v921
    %1604 = vmatprep.mubr.bf16.mxu0 %v1569
    %1605 = vmatmul.mubr.bf16.gmra.mrb[0].mxu0 %v1568
    %v1606 = vpop.f32.mrb[0].mxu0
    %v1607 = vadd.f32 0.0, %v1606
    %v1608 = vpop.f32.mrb[0].mxu0
    %v1609 = vadd.f32 0.0, %v1608
    %v1610 = vpop.f32.mrb[0].mxu0
    %v1611 = vpop.f32.mrb[0].mxu0
    %1612 = vdwg.mxu0
    %1613 = vmatprep.subr.bf16.mxu0 %v804
    %1614 = vmatpush1.bf16.msra.mxu0 %v803
    %1615 = vmatprep.subr.bf16.mxu0 %v812
    %1616 = vmatpush1.bf16.msra.mxu0 %v811
    %1617 = vmatprep.subr.bf16.mxu0 %v820
    %1618 = vmatpush1.bf16.msra.mxu0 %v819
    %1619 = vmatprep.subr.bf16.mxu0 %v828
    %1620 = vmatpush1.bf16.msra.mxu0 %v827
    %1621 = vmatprep.subr.bf16.mxu0 %v836
    %1622 = vmatpush1.bf16.msra.mxu0 %v835
    %1623 = vmatprep.subr.bf16.mxu0 %v844
    %1624 = vmatpush1.bf16.msra.mxu0 %v843
    %1625 = vmatprep.subr.bf16.mxu0 %v852
    %1626 = vmatpush1.bf16.msra.mxu0 %v851
    %1627 = vmatprep.subr.bf16.mxu0 %v860
    %1628 = vmatpush1.bf16.msra.mxu0 %v859
    %1629 = vmatprep.subr.bf16.mxu0 %v868
    %1630 = vmatpush1.bf16.msra.mxu0 %v867
    %1631 = vmatprep.subr.bf16.mxu0 %v876
    %1632 = vmatpush1.bf16.msra.mxu0 %v875
    %1633 = vmatprep.subr.bf16.mxu0 %v884
    %1634 = vmatpush1.bf16.msra.mxu0 %v883
    %1635 = vmatprep.subr.bf16.mxu0 %v892
    %1636 = vmatpush1.bf16.msra.mxu0 %v891
    %1637 = vmatprep.subr.bf16.mxu0 %v900
    %1638 = vmatpush1.bf16.msra.mxu0 %v899
    %1639 = vmatprep.subr.bf16.mxu0 %v908
    %1640 = vmatpush1.bf16.msra.mxu0 %v907
    %1641 = vmatprep.subr.bf16.mxu0 %v916
    %1642 = vmatpush1.bf16.msra.mxu0 %v915
    %1643 = vmatprep.subr.bf16.mxu0 %v924
    %1644 = vmatpush1.bf16.msra.mxu0 %v923
    %1645 = vmatprep.mubr.bf16.mxu0 %v1569
    %1646 = vmatmul.mubr.bf16.gmra.mrb[0].mxu0 %v1568
    %v1647 = vpop.f32.mrb[0].mxu0
    %v1648 = vadd.f32 0.0, %v1647
    %v1649 = vpop.f32.mrb[0].mxu0
    %v1650 = vadd.f32 0.0, %v1649
    %v1651 = vpop.f32.mrb[0].mxu0
    %v1652 = vpop.f32.mrb[0].mxu0
    %1653 = vdwg.mxu0
    %1654 = vmatprep.subr.bf16.mxu0 %v806
    %1655 = vmatpush1.bf16.msra.mxu0 %v805
    %1656 = vmatprep.subr.bf16.mxu0 %v814
    %1657 = vmatpush1.bf16.msra.mxu0 %v813
    %1658 = vmatprep.subr.bf16.mxu0 %v822
    %1659 = vmatpush1.bf16.msra.mxu0 %v821
    %1660 = vmatprep.subr.bf16.mxu0 %v830
    %1661 = vmatpush1.bf16.msra.mxu0 %v829
    %1662 = vmatprep.subr.bf16.mxu0 %v838
    %1663 = vmatpush1.bf16.msra.mxu0 %v837
    %1664 = vmatprep.subr.bf16.mxu0 %v846
    %1665 = vmatpush1.bf16.msra.mxu0 %v845
    %1666 = vmatprep.subr.bf16.mxu0 %v854
    %1667 = vmatpush1.bf16.msra.mxu0 %v853
    %1668 = vmatprep.subr.bf16.mxu0 %v862
    %1669 = vmatpush1.bf16.msra.mxu0 %v861
    %1670 = vmatprep.subr.bf16.mxu0 %v870
    %1671 = vmatpush1.bf16.msra.mxu0 %v869
    %1672 = vmatprep.subr.bf16.mxu0 %v878
    %1673 = vmatpush1.bf16.msra.mxu0 %v877
    %1674 = vmatprep.subr.bf16.mxu0 %v886
    %1675 = vmatpush1.bf16.msra.mxu0 %v885
    %1676 = vmatprep.subr.bf16.mxu0 %v894
    %1677 = vmatpush1.bf16.msra.mxu0 %v893
    %1678 = vmatprep.subr.bf16.mxu0 %v902
    %1679 = vmatpush1.bf16.msra.mxu0 %v901
    %1680 = vmatprep.subr.bf16.mxu0 %v910
    %1681 = vmatpush1.bf16.msra.mxu0 %v909
    %1682 = vmatprep.subr.bf16.mxu0 %v918
    %1683 = vmatpush1.bf16.msra.mxu0 %v917
    %1684 = vmatprep.subr.bf16.mxu0 %v926
    %1685 = vmatpush1.bf16.msra.mxu0 %v925
    %1686 = vmatprep.mubr.bf16.mxu0 %v1569
    %1687 = vmatmul.mubr.bf16.gmra.mrb[0].mxu0 %v1568
    %v1688 = vpop.f32.mrb[0].mxu0
    %v1689 = vadd.f32 0.0, %v1688
    %v1690 = vpop.f32.mrb[0].mxu0
    %v1691 = vadd.f32 0.0, %v1690
    %v1692 = vpop.f32.mrb[0].mxu0
    %v1693 = vpop.f32.mrb[0].mxu0
    %1694 = vdwg.mxu0
    %1695 = vmatprep.subr.bf16.mxu0 %v808
    %1696 = vmatpush1.bf16.msra.mxu0 %v807
    %1697 = vmatprep.subr.bf16.mxu0 %v816
    %1698 = vmatpush1.bf16.msra.mxu0 %v815
    %1699 = vmatprep.subr.bf16.mxu0 %v824
    %1700 = vmatpush1.bf16.msra.mxu0 %v823
    %1701 = vmatprep.subr.bf16.mxu0 %v832
    %1702 = vmatpush1.bf16.msra.mxu0 %v831
    %1703 = vmatprep.subr.bf16.mxu0 %v840
    %1704 = vmatpush1.bf16.msra.mxu0 %v839
    %1705 = vmatprep.subr.bf16.mxu0 %v848
    %1706 = vmatpush1.bf16.msra.mxu0 %v847
    %1707 = vmatprep.subr.bf16.mxu0 %v856
    %1708 = vmatpush1.bf16.msra.mxu0 %v855
    %1709 = vmatprep.subr.bf16.mxu0 %v864
    %1710 = vmatpush1.bf16.msra.mxu0 %v863
    %1711 = vmatprep.subr.bf16.mxu0 %v872
    %1712 = vmatpush1.bf16.msra.mxu0 %v871
    %1713 = vmatprep.subr.bf16.mxu0 %v880
    %1714 = vmatpush1.bf16.msra.mxu0 %v879
    %1715 = vmatprep.subr.bf16.mxu0 %v888
    %1716 = vmatpush1.bf16.msra.mxu0 %v887
    %1717 = vmatprep.subr.bf16.mxu0 %v896
    %1718 = vmatpush1.bf16.msra.mxu0 %v895
    %1719 = vmatprep.subr.bf16.mxu0 %v904
    %1720 = vmatpush1.bf16.msra.mxu0 %v903
    %1721 = vmatprep.subr.bf16.mxu0 %v912
    %1722 = vmatpush1.bf16.msra.mxu0 %v911
    %1723 = vmatprep.subr.bf16.mxu0 %v920
    %1724 = vmatpush1.bf16.msra.mxu0 %v919
    %1725 = vmatprep.subr.bf16.mxu0 %v928
    %1726 = vmatpush1.bf16.msra.mxu0 %v927
    %1727 = vmatprep.mubr.bf16.mxu0 %v1569
    %1728 = vmatmul.mubr.bf16.gmra.mrb[0].mxu0 %v1568
    %v1729 = vpop.f32.mrb[0].mxu0
    %v1730 = vadd.f32 0.0, %v1729
    %v1731 = vpop.f32.mrb[0].mxu0
    %v1732 = vadd.f32 0.0, %v1731
    %v1733 = vpop.f32.mrb[0].mxu0
    %v1734 = vpop.f32.mrb[0].mxu0
    %1735 = vdwg.mxu0
    %v1736 = vadd.f32 %v1689, %v1225
    %v1737 = vadd.f32 %v1691, %v1229
    %v1738 = vadd.f32 %v1730, %v1233
    %v1739 = vadd.f32 %v1732, %v1237
    %v1740 = vxor.u32 %v1736, 2147483648
    %v1741 = vxor.u32 %v1737, 2147483648
    %v1742 = vxor.u32 %v1738, 2147483648
    %v1743 = vmul.f32 %v1740, 1.442695
    %v1744 = vpow.pop %v1743
    %v1745 = vmul.f32 %v1741, 1.442695
    %v1746 = vpow.pop %v1745
    %v1747 = vmul.f32 %v1742, 1.442695
    %v1748 = vpow.pop %v1747
    %v1749 = vadd.f32 %v1744, 1.0
    %v1750 = vadd.f32 %v1746, 1.0
    %v1751 = vadd.f32 %v1748, 1.0
    %v1752 = vrcp.pop %v1749
    %v1753 = vmul.f32 1.0, %v1752
    %v1754 = vrcp.pop %v1750
    %v1755 = vmul.f32 1.0, %v1754
    %v1756 = vrcp.pop %v1751
    %v1757 = vmul.f32 1.0, %v1756
    %v1758 = vtanh.pop %v1739
    %v1759 = vmul.f32 %v1755, %v1515
    %v1760 = vmul.f32 %v1753, %v1758
    %v1761 = vadd.f32 %v1759, %v1760
    %v1762 = vtanh.pop %v1761
    %v1763 = vmul.f32 %v1757, %v1762
    %v1768 = vrot.slane %v1607, 5
    %v1769 = vrot.slane %v1609, 5
    %v1770 = vrot.slane %v1648, 5
    %v1771 = vrot.slane %v1650, 5
    %v1776 = vadd.f32 %v183, %v1768
    %v1777 = vadd.f32 %v185, %v1769
    %v1778 = vadd.f32 %v254, %v1770
    %v1779 = vadd.f32 %v256, %v1771
    %v1780 = vxor.u32 %v1776, 2147483648
    %v1781 = vxor.u32 %v1777, 2147483648
    %v1782 = vxor.u32 %v1778, 2147483648
    %v1783 = vmul.f32 %v1780, 1.442695
    %v1784 = vpow.pop %v1783
    %v1785 = vmul.f32 %v1781, 1.442695
    %v1786 = vpow.pop %v1785
    %v1787 = vmul.f32 %v1782, 1.442695
    %v1788 = vpow.pop %v1787
    %v1789 = vadd.f32 %v1784, 1.0
    %v1790 = vadd.f32 %v1786, 1.0
    %v1791 = vadd.f32 %v1788, 1.0
    %v1792 = vrcp.pop %v1789
    %v1793 = vmul.f32 1.0, %v1792
    %v1794 = vrcp.pop %v1790
    %v1795 = vmul.f32 1.0, %v1794
    %v1796 = vrcp.pop %v1791
    %v1797 = vmul.f32 1.0, %v1796
    %v1798 = vtanh.pop %v1779
    %v1800 = vrot.slane %v1558, 7
    %v1802 = vmul.f32 %v1795, %v1800
    %v1803 = vmul.f32 %v1793, %v1798
    %v1804 = vadd.f32 %v1802, %v1803
    %v1805 = vtanh.pop %v1804
    %v1806 = vmul.f32 %v1797, %v1805
    %v1808 = vrot.slane %v1763, 5
    %v1810 = vpack.c.bf16 %v1806, %v1806
    %v1811 = vpack.c.bf16 %v1808, %v1808
    %v1813 = vshrl.u32 %v1810, 16
    %v1815 = vrot.slane %v1813, 1
    %v1817 = vshrl.u32 %v1811, 16
    %v1819 = vrot.slane %v1817, 1
    %1822 = vmatprep.subr.bf16.mxu0 %v802
    %1823 = vmatpush1.bf16.msra.mxu0 %v801
    %1824 = vmatprep.subr.bf16.mxu0 %v810
    %1825 = vmatpush1.bf16.msra.mxu0 %v809
    %1826 = vmatprep.subr.bf16.mxu0 %v818
    %1827 = vmatpush1.bf16.msra.mxu0 %v817
    %1828 = vmatprep.subr.bf16.mxu0 %v826
    %1829 = vmatpush1.bf16.msra.mxu0 %v825
    %1830 = vmatprep.subr.bf16.mxu0 %v834
    %1831 = vmatpush1.bf16.msra.mxu0 %v833
    %1832 = vmatprep.subr.bf16.mxu0 %v842
    %1833 = vmatpush1.bf16.msra.mxu0 %v841
    %1834 = vmatprep.subr.bf16.mxu0 %v850
    %1835 = vmatpush1.bf16.msra.mxu0 %v849
    %1836 = vmatprep.subr.bf16.mxu0 %v858
    %1837 = vmatpush1.bf16.msra.mxu0 %v857
    %1838 = vmatprep.subr.bf16.mxu0 %v866
    %1839 = vmatpush1.bf16.msra.mxu0 %v865
    %1840 = vmatprep.subr.bf16.mxu0 %v874
    %1841 = vmatpush1.bf16.msra.mxu0 %v873
    %1842 = vmatprep.subr.bf16.mxu0 %v882
    %1843 = vmatpush1.bf16.msra.mxu0 %v881
    %1844 = vmatprep.subr.bf16.mxu0 %v890
    %1845 = vmatpush1.bf16.msra.mxu0 %v889
    %1846 = vmatprep.subr.bf16.mxu0 %v898
    %1847 = vmatpush1.bf16.msra.mxu0 %v897
    %1848 = vmatprep.subr.bf16.mxu0 %v906
    %1849 = vmatpush1.bf16.msra.mxu0 %v905
    %1850 = vmatprep.subr.bf16.mxu0 %v914
    %1851 = vmatpush1.bf16.msra.mxu0 %v913
    %1852 = vmatprep.subr.bf16.mxu0 %v922
    %1853 = vmatpush1.bf16.msra.mxu0 %v921
    %1854 = vmatprep.mubr.bf16.mxu0 %v1819
    %1855 = vmatmul.mubr.bf16.gmra.mrb[0].mxu0 %v1815
    %v1856 = vpop.f32.mrb[0].mxu0
    %v1857 = vadd.f32 0.0, %v1856
    %v1858 = vpop.f32.mrb[0].mxu0
    %v1859 = vadd.f32 0.0, %v1858
    %v1860 = vpop.f32.mrb[0].mxu0
    %v1861 = vpop.f32.mrb[0].mxu0
    %1862 = vdwg.mxu0
    %1863 = vmatprep.subr.bf16.mxu0 %v804
    %1864 = vmatpush1.bf16.msra.mxu0 %v803
    %1865 = vmatprep.subr.bf16.mxu0 %v812
    %1866 = vmatpush1.bf16.msra.mxu0 %v811
    %1867 = vmatprep.subr.bf16.mxu0 %v820
    %1868 = vmatpush1.bf16.msra.mxu0 %v819
    %1869 = vmatprep.subr.bf16.mxu0 %v828
    %1870 = vmatpush1.bf16.msra.mxu0 %v827
    %1871 = vmatprep.subr.bf16.mxu0 %v836
    %1872 = vmatpush1.bf16.msra.mxu0 %v835
    %1873 = vmatprep.subr.bf16.mxu0 %v844
    %1874 = vmatpush1.bf16.msra.mxu0 %v843
    %1875 = vmatprep.subr.bf16.mxu0 %v852
    %1876 = vmatpush1.bf16.msra.mxu0 %v851
    %1877 = vmatprep.subr.bf16.mxu0 %v860
    %1878 = vmatpush1.bf16.msra.mxu0 %v859
    %1879 = vmatprep.subr.bf16.mxu0 %v868
    %1880 = vmatpush1.bf16.msra.mxu0 %v867
    %1881 = vmatprep.subr.bf16.mxu0 %v876
    %1882 = vmatpush1.bf16.msra.mxu0 %v875
    %1883 = vmatprep.subr.bf16.mxu0 %v884
    %1884 = vmatpush1.bf16.msra.mxu0 %v883
    %1885 = vmatprep.subr.bf16.mxu0 %v892
    %1886 = vmatpush1.bf16.msra.mxu0 %v891
    %1887 = vmatprep.subr.bf16.mxu0 %v900
    %1888 = vmatpush1.bf16.msra.mxu0 %v899
    %1889 = vmatprep.subr.bf16.mxu0 %v908
    %1890 = vmatpush1.bf16.msra.mxu0 %v907
    %1891 = vmatprep.subr.bf16.mxu0 %v916
    %1892 = vmatpush1.bf16.msra.mxu0 %v915
    %1893 = vmatprep.subr.bf16.mxu0 %v924
    %1894 = vmatpush1.bf16.msra.mxu0 %v923
    %1895 = vmatprep.mubr.bf16.mxu0 %v1819
    %1896 = vmatmul.mubr.bf16.gmra.mrb[0].mxu0 %v1815
    %v1897 = vpop.f32.mrb[0].mxu0
    %v1898 = vadd.f32 0.0, %v1897
    %v1899 = vpop.f32.mrb[0].mxu0
    %v1900 = vadd.f32 0.0, %v1899
    %v1901 = vpop.f32.mrb[0].mxu0
    %v1902 = vpop.f32.mrb[0].mxu0
    %1903 = vdwg.mxu0
    %1904 = vmatprep.subr.bf16.mxu0 %v806
    %1905 = vmatpush1.bf16.msra.mxu0 %v805
    %1906 = vmatprep.subr.bf16.mxu0 %v814
    %1907 = vmatpush1.bf16.msra.mxu0 %v813
    %1908 = vmatprep.subr.bf16.mxu0 %v822
    %1909 = vmatpush1.bf16.msra.mxu0 %v821
    %1910 = vmatprep.subr.bf16.mxu0 %v830
    %1911 = vmatpush1.bf16.msra.mxu0 %v829
    %1912 = vmatprep.subr.bf16.mxu0 %v838
    %1913 = vmatpush1.bf16.msra.mxu0 %v837
    %1914 = vmatprep.subr.bf16.mxu0 %v846
    %1915 = vmatpush1.bf16.msra.mxu0 %v845
    %1916 = vmatprep.subr.bf16.mxu0 %v854
    %1917 = vmatpush1.bf16.msra.mxu0 %v853
    %1918 = vmatprep.subr.bf16.mxu0 %v862
    %1919 = vmatpush1.bf16.msra.mxu0 %v861
    %1920 = vmatprep.subr.bf16.mxu0 %v870
    %1921 = vmatpush1.bf16.msra.mxu0 %v869
    %1922 = vmatprep.subr.bf16.mxu0 %v878
    %1923 = vmatpush1.bf16.msra.mxu0 %v877
    %1924 = vmatprep.subr.bf16.mxu0 %v886
    %1925 = vmatpush1.bf16.msra.mxu0 %v885
    %1926 = vmatprep.subr.bf16.mxu0 %v894
    %1927 = vmatpush1.bf16.msra.mxu0 %v893
    %1928 = vmatprep.subr.bf16.mxu0 %v902
    %1929 = vmatpush1.bf16.msra.mxu0 %v901
    %1930 = vmatprep.subr.bf16.mxu0 %v910
    %1931 = vmatpush1.bf16.msra.mxu0 %v909
    %1932 = vmatprep.subr.bf16.mxu0 %v918
    %1933 = vmatpush1.bf16.msra.mxu0 %v917
    %1934 = vmatprep.subr.bf16.mxu0 %v926
    %1935 = vmatpush1.bf16.msra.mxu0 %v925
    %1936 = vmatprep.mubr.bf16.mxu0 %v1819
    %1937 = vmatmul.mubr.bf16.gmra.mrb[0].mxu0 %v1815
    %v1938 = vpop.f32.mrb[0].mxu0
    %v1939 = vadd.f32 0.0, %v1938
    %v1940 = vpop.f32.mrb[0].mxu0
    %v1941 = vadd.f32 0.0, %v1940
    %v1942 = vpop.f32.mrb[0].mxu0
    %v1943 = vpop.f32.mrb[0].mxu0
    %1944 = vdwg.mxu0
    %1945 = vmatprep.subr.bf16.mxu0 %v808
    %1946 = vmatpush1.bf16.msra.mxu0 %v807
    %1947 = vmatprep.subr.bf16.mxu0 %v816
    %1948 = vmatpush1.bf16.msra.mxu0 %v815
    %1949 = vmatprep.subr.bf16.mxu0 %v824
    %1950 = vmatpush1.bf16.msra.mxu0 %v823
    %1951 = vmatprep.subr.bf16.mxu0 %v832
    %1952 = vmatpush1.bf16.msra.mxu0 %v831
    %1953 = vmatprep.subr.bf16.mxu0 %v840
    %1954 = vmatpush1.bf16.msra.mxu0 %v839
    %1955 = vmatprep.subr.bf16.mxu0 %v848
    %1956 = vmatpush1.bf16.msra.mxu0 %v847
    %1957 = vmatprep.subr.bf16.mxu0 %v856
    %1958 = vmatpush1.bf16.msra.mxu0 %v855
    %1959 = vmatprep.subr.bf16.mxu0 %v864
    %1960 = vmatpush1.bf16.msra.mxu0 %v863
    %1961 = vmatprep.subr.bf16.mxu0 %v872
    %1962 = vmatpush1.bf16.msra.mxu0 %v871
    %1963 = vmatprep.subr.bf16.mxu0 %v880
    %1964 = vmatpush1.bf16.msra.mxu0 %v879
    %1965 = vmatprep.subr.bf16.mxu0 %v888
    %1966 = vmatpush1.bf16.msra.mxu0 %v887
    %1967 = vmatprep.subr.bf16.mxu0 %v896
    %1968 = vmatpush1.bf16.msra.mxu0 %v895
    %1969 = vmatprep.subr.bf16.mxu0 %v904
    %1970 = vmatpush1.bf16.msra.mxu0 %v903
    %1971 = vmatprep.subr.bf16.mxu0 %v912
    %1972 = vmatpush1.bf16.msra.mxu0 %v911
    %1973 = vmatprep.subr.bf16.mxu0 %v920
    %1974 = vmatpush1.bf16.msra.mxu0 %v919
    %1975 = vmatprep.subr.bf16.mxu0 %v928
    %1976 = vmatpush1.bf16.msra.mxu0 %v927
    %1977 = vmatprep.mubr.bf16.mxu0 %v1819
    %1978 = vmatmul.mubr.bf16.gmra.mrb[0].mxu0 %v1815
    %v1979 = vpop.f32.mrb[0].mxu0
    %v1980 = vadd.f32 0.0, %v1979
    %v1981 = vpop.f32.mrb[0].mxu0
    %v1982 = vadd.f32 0.0, %v1981
    %v1983 = vpop.f32.mrb[0].mxu0
    %v1984 = vpop.f32.mrb[0].mxu0
    %1985 = vdwg.mxu0
    %v1986 = vadd.f32 %v1939, %v1225
    %v1987 = vadd.f32 %v1941, %v1229
    %v1988 = vadd.f32 %v1980, %v1233
    %v1989 = vadd.f32 %v1982, %v1237
    %v1990 = vxor.u32 %v1986, 2147483648
    %v1991 = vxor.u32 %v1987, 2147483648
    %v1992 = vxor.u32 %v1988, 2147483648
    %v1993 = vmul.f32 %v1990, 1.442695
    %v1994 = vpow.pop %v1993
    %v1995 = vmul.f32 %v1991, 1.442695
    %v1996 = vpow.pop %v1995
    %v1997 = vmul.f32 %v1992, 1.442695
    %v1998 = vpow.pop %v1997
    %v1999 = vadd.f32 %v1994, 1.0
    %v2000 = vadd.f32 %v1996, 1.0
    %v2001 = vadd.f32 %v1998, 1.0
    %v2002 = vrcp.pop %v1999
    %v2003 = vmul.f32 1.0, %v2002
    %v2004 = vrcp.pop %v2000
    %v2005 = vmul.f32 1.0, %v2004
    %v2006 = vrcp.pop %v2001
    %v2007 = vmul.f32 1.0, %v2006
    %v2008 = vtanh.pop %v1989
    %v2009 = vmul.f32 %v2005, %v1761
    %v2010 = vmul.f32 %v2003, %v2008
    %v2011 = vadd.f32 %v2009, %v2010
    %v2012 = vtanh.pop %v2011
    %v2013 = vmul.f32 %v2007, %v2012
    %v2018 = vrot.slane %v1857, 4
    %v2019 = vrot.slane %v1859, 4
    %v2020 = vrot.slane %v1898, 4
    %v2021 = vrot.slane %v1900, 4
    %v2026 = vadd.f32 %v183, %v2018
    %v2027 = vadd.f32 %v185, %v2019
    %v2028 = vadd.f32 %v254, %v2020
    %v2029 = vadd.f32 %v256, %v2021
    %v2030 = vxor.u32 %v2026, 2147483648
    %v2031 = vxor.u32 %v2027, 2147483648
    %v2032 = vxor.u32 %v2028, 2147483648
    %v2033 = vmul.f32 %v2030, 1.442695
    %v2034 = vpow.pop %v2033
    %v2035 = vmul.f32 %v2031, 1.442695
    %v2036 = vpow.pop %v2035
    %v2037 = vmul.f32 %v2032, 1.442695
    %v2038 = vpow.pop %v2037
    %v2039 = vadd.f32 %v2034, 1.0
    %v2040 = vadd.f32 %v2036, 1.0
    %v2041 = vadd.f32 %v2038, 1.0
    %v2042 = vrcp.pop %v2039
    %v2043 = vmul.f32 1.0, %v2042
    %v2044 = vrcp.pop %v2040
    %v2045 = vmul.f32 1.0, %v2044
    %v2046 = vrcp.pop %v2041
    %v2047 = vmul.f32 1.0, %v2046
    %v2048 = vtanh.pop %v2029
    %v2050 = vrot.slane %v1804, 7
    %v2052 = vmul.f32 %v2045, %v2050
    %v2053 = vmul.f32 %v2043, %v2048
    %v2054 = vadd.f32 %v2052, %v2053
    %v2055 = vtanh.pop %v2054
    %v2056 = vmul.f32 %v2047, %v2055
    %v2058 = vrot.slane %v2013, 4
    %v2060 = vpack.c.bf16 %v2056, %v2056
    %v2061 = vpack.c.bf16 %v2058, %v2058
    %v2064 = vrot.slane %v2060, 2
    %v2065 = vrot.slane %v2061, 2
    %2068 = vmatprep.subr.bf16.mxu0 %v802
    %2069 = vmatpush1.bf16.msra.mxu0 %v801
    %2070 = vmatprep.subr.bf16.mxu0 %v810
    %2071 = vmatpush1.bf16.msra.mxu0 %v809
    %2072 = vmatprep.subr.bf16.mxu0 %v818
    %2073 = vmatpush1.bf16.msra.mxu0 %v817
    %2074 = vmatprep.subr.bf16.mxu0 %v826
    %2075 = vmatpush1.bf16.msra.mxu0 %v825
    %2076 = vmatprep.subr.bf16.mxu0 %v834
    %2077 = vmatpush1.bf16.msra.mxu0 %v833
    %2078 = vmatprep.subr.bf16.mxu0 %v842
    %2079 = vmatpush1.bf16.msra.mxu0 %v841
    %2080 = vmatprep.subr.bf16.mxu0 %v850
    %2081 = vmatpush1.bf16.msra.mxu0 %v849
    %2082 = vmatprep.subr.bf16.mxu0 %v858
    %2083 = vmatpush1.bf16.msra.mxu0 %v857
    %2084 = vmatprep.subr.bf16.mxu0 %v866
    %2085 = vmatpush1.bf16.msra.mxu0 %v865
    %2086 = vmatprep.subr.bf16.mxu0 %v874
    %2087 = vmatpush1.bf16.msra.mxu0 %v873
    %2088 = vmatprep.subr.bf16.mxu0 %v882
    %2089 = vmatpush1.bf16.msra.mxu0 %v881
    %2090 = vmatprep.subr.bf16.mxu0 %v890
    %2091 = vmatpush1.bf16.msra.mxu0 %v889
    %2092 = vmatprep.subr.bf16.mxu0 %v898
    %2093 = vmatpush1.bf16.msra.mxu0 %v897
    %2094 = vmatprep.subr.bf16.mxu0 %v906
    %2095 = vmatpush1.bf16.msra.mxu0 %v905
    %2096 = vmatprep.subr.bf16.mxu0 %v914
    %2097 = vmatpush1.bf16.msra.mxu0 %v913
    %2098 = vmatprep.subr.bf16.mxu0 %v922
    %2099 = vmatpush1.bf16.msra.mxu0 %v921
    %2100 = vmatprep.mubr.bf16.mxu0 %v2065
    %2101 = vmatmul.mubr.bf16.gmra.mrb[0].mxu0 %v2064
    %v2102 = vpop.f32.mrb[0].mxu0
    %v2103 = vadd.f32 0.0, %v2102
    %v2104 = vpop.f32.mrb[0].mxu0
    %v2105 = vadd.f32 0.0, %v2104
    %v2106 = vpop.f32.mrb[0].mxu0
    %v2107 = vpop.f32.mrb[0].mxu0
    %2108 = vdwg.mxu0
    %2109 = vmatprep.subr.bf16.mxu0 %v804
    %2110 = vmatpush1.bf16.msra.mxu0 %v803
    %2111 = vmatprep.subr.bf16.mxu0 %v812
    %2112 = vmatpush1.bf16.msra.mxu0 %v811
    %2113 = vmatprep.subr.bf16.mxu0 %v820
    %2114 = vmatpush1.bf16.msra.mxu0 %v819
    %2115 = vmatprep.subr.bf16.mxu0 %v828
    %2116 = vmatpush1.bf16.msra.mxu0 %v827
    %2117 = vmatprep.subr.bf16.mxu0 %v836
    %2118 = vmatpush1.bf16.msra.mxu0 %v835
    %2119 = vmatprep.subr.bf16.mxu0 %v844
    %2120 = vmatpush1.bf16.msra.mxu0 %v843
    %2121 = vmatprep.subr.bf16.mxu0 %v852
    %2122 = vmatpush1.bf16.msra.mxu0 %v851
    %2123 = vmatprep.subr.bf16.mxu0 %v860
    %2124 = vmatpush1.bf16.msra.mxu0 %v859
    %2125 = vmatprep.subr.bf16.mxu0 %v868
    %2126 = vmatpush1.bf16.msra.mxu0 %v867
    %2127 = vmatprep.subr.bf16.mxu0 %v876
    %2128 = vmatpush1.bf16.msra.mxu0 %v875
    %2129 = vmatprep.subr.bf16.mxu0 %v884
    %2130 = vmatpush1.bf16.msra.mxu0 %v883
    %2131 = vmatprep.subr.bf16.mxu0 %v892
    %2132 = vmatpush1.bf16.msra.mxu0 %v891
    %2133 = vmatprep.subr.bf16.mxu0 %v900
    %2134 = vmatpush1.bf16.msra.mxu0 %v899
    %2135 = vmatprep.subr.bf16.mxu0 %v908
    %2136 = vmatpush1.bf16.msra.mxu0 %v907
    %2137 = vmatprep.subr.bf16.mxu0 %v916
    %2138 = vmatpush1.bf16.msra.mxu0 %v915
    %2139 = vmatprep.subr.bf16.mxu0 %v924
    %2140 = vmatpush1.bf16.msra.mxu0 %v923
    %2141 = vmatprep.mubr.bf16.mxu0 %v2065
    %2142 = vmatmul.mubr.bf16.gmra.mrb[0].mxu0 %v2064
    %v2143 = vpop.f32.mrb[0].mxu0
    %v2144 = vadd.f32 0.0, %v2143
    %v2145 = vpop.f32.mrb[0].mxu0
    %v2146 = vadd.f32 0.0, %v2145
    %v2147 = vpop.f32.mrb[0].mxu0
    %v2148 = vpop.f32.mrb[0].mxu0
    %2149 = vdwg.mxu0
    %2150 = vmatprep.subr.bf16.mxu0 %v806
    %2151 = vmatpush1.bf16.msra.mxu0 %v805
    %2152 = vmatprep.subr.bf16.mxu0 %v814
    %2153 = vmatpush1.bf16.msra.mxu0 %v813
    %2154 = vmatprep.subr.bf16.mxu0 %v822
    %2155 = vmatpush1.bf16.msra.mxu0 %v821
    %2156 = vmatprep.subr.bf16.mxu0 %v830
    %2157 = vmatpush1.bf16.msra.mxu0 %v829
    %2158 = vmatprep.subr.bf16.mxu0 %v838
    %2159 = vmatpush1.bf16.msra.mxu0 %v837
    %2160 = vmatprep.subr.bf16.mxu0 %v846
    %2161 = vmatpush1.bf16.msra.mxu0 %v845
    %2162 = vmatprep.subr.bf16.mxu0 %v854
    %2163 = vmatpush1.bf16.msra.mxu0 %v853
    %2164 = vmatprep.subr.bf16.mxu0 %v862
    %2165 = vmatpush1.bf16.msra.mxu0 %v861
    %2166 = vmatprep.subr.bf16.mxu0 %v870
    %2167 = vmatpush1.bf16.msra.mxu0 %v869
    %2168 = vmatprep.subr.bf16.mxu0 %v878
    %2169 = vmatpush1.bf16.msra.mxu0 %v877
    %2170 = vmatprep.subr.bf16.mxu0 %v886
    %2171 = vmatpush1.bf16.msra.mxu0 %v885
    %2172 = vmatprep.subr.bf16.mxu0 %v894
    %2173 = vmatpush1.bf16.msra.mxu0 %v893
    %2174 = vmatprep.subr.bf16.mxu0 %v902
    %2175 = vmatpush1.bf16.msra.mxu0 %v901
    %2176 = vmatprep.subr.bf16.mxu0 %v910
    %2177 = vmatpush1.bf16.msra.mxu0 %v909
    %2178 = vmatprep.subr.bf16.mxu0 %v918
    %2179 = vmatpush1.bf16.msra.mxu0 %v917
    %2180 = vmatprep.subr.bf16.mxu0 %v926
    %2181 = vmatpush1.bf16.msra.mxu0 %v925
    %2182 = vmatprep.mubr.bf16.mxu0 %v2065
    %2183 = vmatmul.mubr.bf16.gmra.mrb[0].mxu0 %v2064
    %v2184 = vpop.f32.mrb[0].mxu0
    %v2185 = vadd.f32 0.0, %v2184
    %v2186 = vpop.f32.mrb[0].mxu0
    %v2187 = vadd.f32 0.0, %v2186
    %v2188 = vpop.f32.mrb[0].mxu0
    %v2189 = vpop.f32.mrb[0].mxu0
    %2190 = vdwg.mxu0
    %2191 = vmatprep.subr.bf16.mxu0 %v808
    %2192 = vmatpush1.bf16.msra.mxu0 %v807
    %2193 = vmatprep.subr.bf16.mxu0 %v816
    %2194 = vmatpush1.bf16.msra.mxu0 %v815
    %2195 = vmatprep.subr.bf16.mxu0 %v824
    %2196 = vmatpush1.bf16.msra.mxu0 %v823
    %2197 = vmatprep.subr.bf16.mxu0 %v832
    %2198 = vmatpush1.bf16.msra.mxu0 %v831
    %2199 = vmatprep.subr.bf16.mxu0 %v840
    %2200 = vmatpush1.bf16.msra.mxu0 %v839
    %2201 = vmatprep.subr.bf16.mxu0 %v848
    %2202 = vmatpush1.bf16.msra.mxu0 %v847
    %2203 = vmatprep.subr.bf16.mxu0 %v856
    %2204 = vmatpush1.bf16.msra.mxu0 %v855
    %2205 = vmatprep.subr.bf16.mxu0 %v864
    %2206 = vmatpush1.bf16.msra.mxu0 %v863
    %2207 = vmatprep.subr.bf16.mxu0 %v872
    %2208 = vmatpush1.bf16.msra.mxu0 %v871
    %2209 = vmatprep.subr.bf16.mxu0 %v880
    %2210 = vmatpush1.bf16.msra.mxu0 %v879
    %2211 = vmatprep.subr.bf16.mxu0 %v888
    %2212 = vmatpush1.bf16.msra.mxu0 %v887
    %2213 = vmatprep.subr.bf16.mxu0 %v896
    %2214 = vmatpush1.bf16.msra.mxu0 %v895
    %2215 = vmatprep.subr.bf16.mxu0 %v904
    %2216 = vmatpush1.bf16.msra.mxu0 %v903
    %2217 = vmatprep.subr.bf16.mxu0 %v912
    %2218 = vmatpush1.bf16.msra.mxu0 %v911
    %2219 = vmatprep.subr.bf16.mxu0 %v920
    %2220 = vmatpush1.bf16.msra.mxu0 %v919
    %2221 = vmatprep.subr.bf16.mxu0 %v928
    %2222 = vmatpush1.bf16.msra.mxu0 %v927
    %2223 = vmatprep.mubr.bf16.mxu0 %v2065
    %2224 = vmatmul.mubr.bf16.gmra.mrb[0].mxu0 %v2064
    %v2225 = vpop.f32.mrb[0].mxu0
    %v2226 = vadd.f32 0.0, %v2225
    %v2227 = vpop.f32.mrb[0].mxu0
    %v2228 = vadd.f32 0.0, %v2227
    %v2229 = vpop.f32.mrb[0].mxu0
    %v2230 = vpop.f32.mrb[0].mxu0
    %2231 = vdwg.mxu0
    %v2232 = vadd.f32 %v2185, %v1225
    %v2233 = vadd.f32 %v2187, %v1229
    %v2234 = vadd.f32 %v2226, %v1233
    %v2235 = vadd.f32 %v2228, %v1237
    %v2236 = vxor.u32 %v2232, 2147483648
    %v2237 = vxor.u32 %v2233, 2147483648
    %v2238 = vxor.u32 %v2234, 2147483648
    %v2239 = vmul.f32 %v2236, 1.442695
    %v2240 = vpow.pop %v2239
    %v2241 = vmul.f32 %v2237, 1.442695
    %v2242 = vpow.pop %v2241
    %v2243 = vmul.f32 %v2238, 1.442695
    %v2244 = vpow.pop %v2243
    %v2245 = vadd.f32 %v2240, 1.0
    %v2246 = vadd.f32 %v2242, 1.0
    %v2247 = vadd.f32 %v2244, 1.0
    %v2248 = vrcp.pop %v2245
    %v2249 = vmul.f32 1.0, %v2248
    %v2250 = vrcp.pop %v2246
    %v2251 = vmul.f32 1.0, %v2250
    %v2252 = vrcp.pop %v2247
    %v2253 = vmul.f32 1.0, %v2252
    %v2254 = vtanh.pop %v2235
    %v2255 = vmul.f32 %v2251, %v2011
    %v2256 = vmul.f32 %v2249, %v2254
    %v2257 = vadd.f32 %v2255, %v2256
    %v2258 = vtanh.pop %v2257
    %v2259 = vmul.f32 %v2253, %v2258
    %v2264 = vrot.slane %v2103, 3
    %v2265 = vrot.slane %v2105, 3
    %v2266 = vrot.slane %v2144, 3
    %v2267 = vrot.slane %v2146, 3
    %v2272 = vadd.f32 %v183, %v2264
    %v2273 = vadd.f32 %v185, %v2265
    %v2274 = vadd.f32 %v254, %v2266
    %v2275 = vadd.f32 %v256, %v2267
    %v2276 = vxor.u32 %v2272, 2147483648
    %v2277 = vxor.u32 %v2273, 2147483648
    %v2278 = vxor.u32 %v2274, 2147483648
    %v2279 = vmul.f32 %v2276, 1.442695
    %v2280 = vpow.pop %v2279
    %v2281 = vmul.f32 %v2277, 1.442695
    %v2282 = vpow.pop %v2281
    %v2283 = vmul.f32 %v2278, 1.442695
    %v2284 = vpow.pop %v2283
    %v2285 = vadd.f32 %v2280, 1.0
    %v2286 = vadd.f32 %v2282, 1.0
    %v2287 = vadd.f32 %v2284, 1.0
    %v2288 = vrcp.pop %v2285
    %v2289 = vmul.f32 1.0, %v2288
    %v2290 = vrcp.pop %v2286
    %v2291 = vmul.f32 1.0, %v2290
    %v2292 = vrcp.pop %v2287
    %v2293 = vmul.f32 1.0, %v2292
    %v2294 = vtanh.pop %v2275
    %v2296 = vrot.slane %v2054, 7
    %v2298 = vmul.f32 %v2291, %v2296
    %v2299 = vmul.f32 %v2289, %v2294
    %v2300 = vadd.f32 %v2298, %v2299
    %v2301 = vtanh.pop %v2300
    %v2302 = vmul.f32 %v2293, %v2301
    %v2304 = vrot.slane %v2259, 3
    %v2306 = vpack.c.bf16 %v2302, %v2302
    %v2307 = vpack.c.bf16 %v2304, %v2304
    %v2309 = vshrl.u32 %v2306, 16
    %v2311 = vrot.slane %v2309, 2
    %v2313 = vshrl.u32 %v2307, 16
    %v2315 = vrot.slane %v2313, 2
    %2318 = vmatprep.subr.bf16.mxu0 %v802
    %2319 = vmatpush1.bf16.msra.mxu0 %v801
    %2320 = vmatprep.subr.bf16.mxu0 %v810
    %2321 = vmatpush1.bf16.msra.mxu0 %v809
    %2322 = vmatprep.subr.bf16.mxu0 %v818
    %2323 = vmatpush1.bf16.msra.mxu0 %v817
    %2324 = vmatprep.subr.bf16.mxu0 %v826
    %2325 = vmatpush1.bf16.msra.mxu0 %v825
    %2326 = vmatprep.subr.bf16.mxu0 %v834
    %2327 = vmatpush1.bf16.msra.mxu0 %v833
    %2328 = vmatprep.subr.bf16.mxu0 %v842
    %2329 = vmatpush1.bf16.msra.mxu0 %v841
    %2330 = vmatprep.subr.bf16.mxu0 %v850
    %2331 = vmatpush1.bf16.msra.mxu0 %v849
    %2332 = vmatprep.subr.bf16.mxu0 %v858
    %2333 = vmatpush1.bf16.msra.mxu0 %v857
    %2334 = vmatprep.subr.bf16.mxu0 %v866
    %2335 = vmatpush1.bf16.msra.mxu0 %v865
    %2336 = vmatprep.subr.bf16.mxu0 %v874
    %2337 = vmatpush1.bf16.msra.mxu0 %v873
    %2338 = vmatprep.subr.bf16.mxu0 %v882
    %2339 = vmatpush1.bf16.msra.mxu0 %v881
    %2340 = vmatprep.subr.bf16.mxu0 %v890
    %2341 = vmatpush1.bf16.msra.mxu0 %v889
    %2342 = vmatprep.subr.bf16.mxu0 %v898
    %2343 = vmatpush1.bf16.msra.mxu0 %v897
    %2344 = vmatprep.subr.bf16.mxu0 %v906
    %2345 = vmatpush1.bf16.msra.mxu0 %v905
    %2346 = vmatprep.subr.bf16.mxu0 %v914
    %2347 = vmatpush1.bf16.msra.mxu0 %v913
    %2348 = vmatprep.subr.bf16.mxu0 %v922
    %2349 = vmatpush1.bf16.msra.mxu0 %v921
    %2350 = vmatprep.mubr.bf16.mxu0 %v2315
    %2351 = vmatmul.mubr.bf16.gmra.mrb[0].mxu0 %v2311
    %v2352 = vpop.f32.mrb[0].mxu0
    %v2353 = vadd.f32 0.0, %v2352
    %v2354 = vpop.f32.mrb[0].mxu0
    %v2355 = vadd.f32 0.0, %v2354
    %v2356 = vpop.f32.mrb[0].mxu0
    %v2357 = vpop.f32.mrb[0].mxu0
    %2358 = vdwg.mxu0
    %2359 = vmatprep.subr.bf16.mxu0 %v804
    %2360 = vmatpush1.bf16.msra.mxu0 %v803
    %2361 = vmatprep.subr.bf16.mxu0 %v812
    %2362 = vmatpush1.bf16.msra.mxu0 %v811
    %2363 = vmatprep.subr.bf16.mxu0 %v820
    %2364 = vmatpush1.bf16.msra.mxu0 %v819
    %2365 = vmatprep.subr.bf16.mxu0 %v828
    %2366 = vmatpush1.bf16.msra.mxu0 %v827
    %2367 = vmatprep.subr.bf16.mxu0 %v836
    %2368 = vmatpush1.bf16.msra.mxu0 %v835
    %2369 = vmatprep.subr.bf16.mxu0 %v844
    %2370 = vmatpush1.bf16.msra.mxu0 %v843
    %2371 = vmatprep.subr.bf16.mxu0 %v852
    %2372 = vmatpush1.bf16.msra.mxu0 %v851
    %2373 = vmatprep.subr.bf16.mxu0 %v860
    %2374 = vmatpush1.bf16.msra.mxu0 %v859
    %2375 = vmatprep.subr.bf16.mxu0 %v868
    %2376 = vmatpush1.bf16.msra.mxu0 %v867
    %2377 = vmatprep.subr.bf16.mxu0 %v876
    %2378 = vmatpush1.bf16.msra.mxu0 %v875
    %2379 = vmatprep.subr.bf16.mxu0 %v884
    %2380 = vmatpush1.bf16.msra.mxu0 %v883
    %2381 = vmatprep.subr.bf16.mxu0 %v892
    %2382 = vmatpush1.bf16.msra.mxu0 %v891
    %2383 = vmatprep.subr.bf16.mxu0 %v900
    %2384 = vmatpush1.bf16.msra.mxu0 %v899
    %2385 = vmatprep.subr.bf16.mxu0 %v908
    %2386 = vmatpush1.bf16.msra.mxu0 %v907
    %2387 = vmatprep.subr.bf16.mxu0 %v916
    %2388 = vmatpush1.bf16.msra.mxu0 %v915
    %2389 = vmatprep.subr.bf16.mxu0 %v924
    %2390 = vmatpush1.bf16.msra.mxu0 %v923
    %2391 = vmatprep.mubr.bf16.mxu0 %v2315
    %2392 = vmatmul.mubr.bf16.gmra.mrb[0].mxu0 %v2311
    %v2393 = vpop.f32.mrb[0].mxu0
    %v2394 = vadd.f32 0.0, %v2393
    %v2395 = vpop.f32.mrb[0].mxu0
    %v2396 = vadd.f32 0.0, %v2395
    %v2397 = vpop.f32.mrb[0].mxu0
    %v2398 = vpop.f32.mrb[0].mxu0
    %2399 = vdwg.mxu0
    %2400 = vmatprep.subr.bf16.mxu0 %v806
    %2401 = vmatpush1.bf16.msra.mxu0 %v805
    %2402 = vmatprep.subr.bf16.mxu0 %v814
    %2403 = vmatpush1.bf16.msra.mxu0 %v813
    %2404 = vmatprep.subr.bf16.mxu0 %v822
    %2405 = vmatpush1.bf16.msra.mxu0 %v821
    %2406 = vmatprep.subr.bf16.mxu0 %v830
    %2407 = vmatpush1.bf16.msra.mxu0 %v829
    %2408 = vmatprep.subr.bf16.mxu0 %v838
    %2409 = vmatpush1.bf16.msra.mxu0 %v837
    %2410 = vmatprep.subr.bf16.mxu0 %v846
    %2411 = vmatpush1.bf16.msra.mxu0 %v845
    %2412 = vmatprep.subr.bf16.mxu0 %v854
    %2413 = vmatpush1.bf16.msra.mxu0 %v853
    %2414 = vmatprep.subr.bf16.mxu0 %v862
    %2415 = vmatpush1.bf16.msra.mxu0 %v861
    %2416 = vmatprep.subr.bf16.mxu0 %v870
    %2417 = vmatpush1.bf16.msra.mxu0 %v869
    %2418 = vmatprep.subr.bf16.mxu0 %v878
    %2419 = vmatpush1.bf16.msra.mxu0 %v877
    %2420 = vmatprep.subr.bf16.mxu0 %v886
    %2421 = vmatpush1.bf16.msra.mxu0 %v885
    %2422 = vmatprep.subr.bf16.mxu0 %v894
    %2423 = vmatpush1.bf16.msra.mxu0 %v893
    %2424 = vmatprep.subr.bf16.mxu0 %v902
    %2425 = vmatpush1.bf16.msra.mxu0 %v901
    %2426 = vmatprep.subr.bf16.mxu0 %v910
    %2427 = vmatpush1.bf16.msra.mxu0 %v909
    %2428 = vmatprep.subr.bf16.mxu0 %v918
    %2429 = vmatpush1.bf16.msra.mxu0 %v917
    %2430 = vmatprep.subr.bf16.mxu0 %v926
    %2431 = vmatpush1.bf16.msra.mxu0 %v925
    %2432 = vmatprep.mubr.bf16.mxu0 %v2315
    %2433 = vmatmul.mubr.bf16.gmra.mrb[0].mxu0 %v2311
    %v2434 = vpop.f32.mrb[0].mxu0
    %v2435 = vadd.f32 0.0, %v2434
    %v2436 = vpop.f32.mrb[0].mxu0
    %v2437 = vadd.f32 0.0, %v2436
    %v2438 = vpop.f32.mrb[0].mxu0
    %v2439 = vpop.f32.mrb[0].mxu0
    %2440 = vdwg.mxu0
    %2441 = vmatprep.subr.bf16.mxu0 %v808
    %2442 = vmatpush1.bf16.msra.mxu0 %v807
    %2443 = vmatprep.subr.bf16.mxu0 %v816
    %2444 = vmatpush1.bf16.msra.mxu0 %v815
    %2445 = vmatprep.subr.bf16.mxu0 %v824
    %2446 = vmatpush1.bf16.msra.mxu0 %v823
    %2447 = vmatprep.subr.bf16.mxu0 %v832
    %2448 = vmatpush1.bf16.msra.mxu0 %v831
    %2449 = vmatprep.subr.bf16.mxu0 %v840
    %2450 = vmatpush1.bf16.msra.mxu0 %v839
    %2451 = vmatprep.subr.bf16.mxu0 %v848
    %2452 = vmatpush1.bf16.msra.mxu0 %v847
    %2453 = vmatprep.subr.bf16.mxu0 %v856
    %2454 = vmatpush1.bf16.msra.mxu0 %v855
    %2455 = vmatprep.subr.bf16.mxu0 %v864
    %2456 = vmatpush1.bf16.msra.mxu0 %v863
    %2457 = vmatprep.subr.bf16.mxu0 %v872
    %2458 = vmatpush1.bf16.msra.mxu0 %v871
    %2459 = vmatprep.subr.bf16.mxu0 %v880
    %2460 = vmatpush1.bf16.msra.mxu0 %v879
    %2461 = vmatprep.subr.bf16.mxu0 %v888
    %2462 = vmatpush1.bf16.msra.mxu0 %v887
    %2463 = vmatprep.subr.bf16.mxu0 %v896
    %2464 = vmatpush1.bf16.msra.mxu0 %v895
    %2465 = vmatprep.subr.bf16.mxu0 %v904
    %2466 = vmatpush1.bf16.msra.mxu0 %v903
    %2467 = vmatprep.subr.bf16.mxu0 %v912
    %2468 = vmatpush1.bf16.msra.mxu0 %v911
    %2469 = vmatprep.subr.bf16.mxu0 %v920
    %2470 = vmatpush1.bf16.msra.mxu0 %v919
    %2471 = vmatprep.subr.bf16.mxu0 %v928
    %2472 = vmatpush1.bf16.msra.mxu0 %v927
    %2473 = vmatprep.mubr.bf16.mxu0 %v2315
    %2474 = vmatmul.mubr.bf16.gmra.mrb[0].mxu0 %v2311
    %v2475 = vpop.f32.mrb[0].mxu0
    %v2476 = vadd.f32 0.0, %v2475
    %v2477 = vpop.f32.mrb[0].mxu0
    %v2478 = vadd.f32 0.0, %v2477
    %v2479 = vpop.f32.mrb[0].mxu0
    %v2480 = vpop.f32.mrb[0].mxu0
    %2481 = vdwg.mxu0
    %v2482 = vadd.f32 %v2435, %v1225
    %v2483 = vadd.f32 %v2437, %v1229
    %v2484 = vadd.f32 %v2476, %v1233
    %v2485 = vadd.f32 %v2478, %v1237
    %v2486 = vxor.u32 %v2482, 2147483648
    %v2487 = vxor.u32 %v2483, 2147483648
    %v2488 = vxor.u32 %v2484, 2147483648
    %v2489 = vmul.f32 %v2486, 1.442695
    %v2490 = vpow.pop %v2489
    %v2491 = vmul.f32 %v2487, 1.442695
    %v2492 = vpow.pop %v2491
    %v2493 = vmul.f32 %v2488, 1.442695
    %v2494 = vpow.pop %v2493
    %v2495 = vadd.f32 %v2490, 1.0
    %v2496 = vadd.f32 %v2492, 1.0
    %v2497 = vadd.f32 %v2494, 1.0
    %v2498 = vrcp.pop %v2495
    %v2499 = vmul.f32 1.0, %v2498
    %v2500 = vrcp.pop %v2496
    %v2501 = vmul.f32 1.0, %v2500
    %v2502 = vrcp.pop %v2497
    %v2503 = vmul.f32 1.0, %v2502
    %v2504 = vtanh.pop %v2485
    %v2505 = vmul.f32 %v2501, %v2257
    %v2506 = vmul.f32 %v2499, %v2504
    %v2507 = vadd.f32 %v2505, %v2506
    %v2508 = vtanh.pop %v2507
    %v2509 = vmul.f32 %v2503, %v2508
    %v2514 = vrot.slane %v2353, 2
    %v2515 = vrot.slane %v2355, 2
    %v2516 = vrot.slane %v2394, 2
    %v2517 = vrot.slane %v2396, 2
    %v2522 = vadd.f32 %v183, %v2514
    %v2523 = vadd.f32 %v185, %v2515
    %v2524 = vadd.f32 %v254, %v2516
    %v2525 = vadd.f32 %v256, %v2517
    %v2526 = vxor.u32 %v2522, 2147483648
    %v2527 = vxor.u32 %v2523, 2147483648
    %v2528 = vxor.u32 %v2524, 2147483648
    %v2529 = vmul.f32 %v2526, 1.442695
    %v2530 = vpow.pop %v2529
    %v2531 = vmul.f32 %v2527, 1.442695
    %v2532 = vpow.pop %v2531
    %v2533 = vmul.f32 %v2528, 1.442695
    %v2534 = vpow.pop %v2533
    %v2535 = vadd.f32 %v2530, 1.0
    %v2536 = vadd.f32 %v2532, 1.0
    %v2537 = vadd.f32 %v2534, 1.0
    %v2538 = vrcp.pop %v2535
    %v2539 = vmul.f32 1.0, %v2538
    %v2540 = vrcp.pop %v2536
    %v2541 = vmul.f32 1.0, %v2540
    %v2542 = vrcp.pop %v2537
    %v2543 = vmul.f32 1.0, %v2542
    %v2544 = vtanh.pop %v2525
    %v2546 = vrot.slane %v2300, 7
    %v2548 = vmul.f32 %v2541, %v2546
    %v2549 = vmul.f32 %v2539, %v2544
    %v2550 = vadd.f32 %v2548, %v2549
    %v2551 = vtanh.pop %v2550
    %v2552 = vmul.f32 %v2543, %v2551
    %v2554 = vrot.slane %v2509, 2
    %v2556 = vpack.c.bf16 %v2552, %v2552
    %v2557 = vpack.c.bf16 %v2554, %v2554
    %v2560 = vrot.slane %v2556, 3
    %v2561 = vrot.slane %v2557, 3
    %2564 = vmatprep.subr.bf16.mxu0 %v802
    %2565 = vmatpush1.bf16.msra.mxu0 %v801
    %2566 = vmatprep.subr.bf16.mxu0 %v810
    %2567 = vmatpush1.bf16.msra.mxu0 %v809
    %2568 = vmatprep.subr.bf16.mxu0 %v818
    %2569 = vmatpush1.bf16.msra.mxu0 %v817
    %2570 = vmatprep.subr.bf16.mxu0 %v826
    %2571 = vmatpush1.bf16.msra.mxu0 %v825
    %2572 = vmatprep.subr.bf16.mxu0 %v834
    %2573 = vmatpush1.bf16.msra.mxu0 %v833
    %2574 = vmatprep.subr.bf16.mxu0 %v842
    %2575 = vmatpush1.bf16.msra.mxu0 %v841
    %2576 = vmatprep.subr.bf16.mxu0 %v850
    %2577 = vmatpush1.bf16.msra.mxu0 %v849
    %2578 = vmatprep.subr.bf16.mxu0 %v858
    %2579 = vmatpush1.bf16.msra.mxu0 %v857
    %2580 = vmatprep.subr.bf16.mxu0 %v866
    %2581 = vmatpush1.bf16.msra.mxu0 %v865
    %2582 = vmatprep.subr.bf16.mxu0 %v874
    %2583 = vmatpush1.bf16.msra.mxu0 %v873
    %2584 = vmatprep.subr.bf16.mxu0 %v882
    %2585 = vmatpush1.bf16.msra.mxu0 %v881
    %2586 = vmatprep.subr.bf16.mxu0 %v890
    %2587 = vmatpush1.bf16.msra.mxu0 %v889
    %2588 = vmatprep.subr.bf16.mxu0 %v898
    %2589 = vmatpush1.bf16.msra.mxu0 %v897
    %2590 = vmatprep.subr.bf16.mxu0 %v906
    %2591 = vmatpush1.bf16.msra.mxu0 %v905
    %2592 = vmatprep.subr.bf16.mxu0 %v914
    %2593 = vmatpush1.bf16.msra.mxu0 %v913
    %2594 = vmatprep.subr.bf16.mxu0 %v922
    %2595 = vmatpush1.bf16.msra.mxu0 %v921
    %2596 = vmatprep.mubr.bf16.mxu0 %v2561
    %2597 = vmatmul.mubr.bf16.gmra.mrb[0].mxu0 %v2560
    %v2598 = vpop.f32.mrb[0].mxu0
    %v2599 = vadd.f32 0.0, %v2598
    %v2600 = vpop.f32.mrb[0].mxu0
    %v2601 = vadd.f32 0.0, %v2600
    %v2602 = vpop.f32.mrb[0].mxu0
    %v2603 = vpop.f32.mrb[0].mxu0
    %2604 = vdwg.mxu0
    %2605 = vmatprep.subr.bf16.mxu0 %v804
    %2606 = vmatpush1.bf16.msra.mxu0 %v803
    %2607 = vmatprep.subr.bf16.mxu0 %v812
    %2608 = vmatpush1.bf16.msra.mxu0 %v811
    %2609 = vmatprep.subr.bf16.mxu0 %v820
    %2610 = vmatpush1.bf16.msra.mxu0 %v819
    %2611 = vmatprep.subr.bf16.mxu0 %v828
    %2612 = vmatpush1.bf16.msra.mxu0 %v827
    %2613 = vmatprep.subr.bf16.mxu0 %v836
    %2614 = vmatpush1.bf16.msra.mxu0 %v835
    %2615 = vmatprep.subr.bf16.mxu0 %v844
    %2616 = vmatpush1.bf16.msra.mxu0 %v843
    %2617 = vmatprep.subr.bf16.mxu0 %v852
    %2618 = vmatpush1.bf16.msra.mxu0 %v851
    %2619 = vmatprep.subr.bf16.mxu0 %v860
    %2620 = vmatpush1.bf16.msra.mxu0 %v859
    %2621 = vmatprep.subr.bf16.mxu0 %v868
    %2622 = vmatpush1.bf16.msra.mxu0 %v867
    %2623 = vmatprep.subr.bf16.mxu0 %v876
    %2624 = vmatpush1.bf16.msra.mxu0 %v875
    %2625 = vmatprep.subr.bf16.mxu0 %v884
    %2626 = vmatpush1.bf16.msra.mxu0 %v883
    %2627 = vmatprep.subr.bf16.mxu0 %v892
    %2628 = vmatpush1.bf16.msra.mxu0 %v891
    %2629 = vmatprep.subr.bf16.mxu0 %v900
    %2630 = vmatpush1.bf16.msra.mxu0 %v899
    %2631 = vmatprep.subr.bf16.mxu0 %v908
    %2632 = vmatpush1.bf16.msra.mxu0 %v907
    %2633 = vmatprep.subr.bf16.mxu0 %v916
    %2634 = vmatpush1.bf16.msra.mxu0 %v915
    %2635 = vmatprep.subr.bf16.mxu0 %v924
    %2636 = vmatpush1.bf16.msra.mxu0 %v923
    %2637 = vmatprep.mubr.bf16.mxu0 %v2561
    %2638 = vmatmul.mubr.bf16.gmra.mrb[0].mxu0 %v2560
    %v2639 = vpop.f32.mrb[0].mxu0
    %v2640 = vadd.f32 0.0, %v2639
    %v2641 = vpop.f32.mrb[0].mxu0
    %v2642 = vadd.f32 0.0, %v2641
    %v2643 = vpop.f32.mrb[0].mxu0
    %v2644 = vpop.f32.mrb[0].mxu0
    %2645 = vdwg.mxu0
    %2646 = vmatprep.subr.bf16.mxu0 %v806
    %2647 = vmatpush1.bf16.msra.mxu0 %v805
    %2648 = vmatprep.subr.bf16.mxu0 %v814
    %2649 = vmatpush1.bf16.msra.mxu0 %v813
    %2650 = vmatprep.subr.bf16.mxu0 %v822
    %2651 = vmatpush1.bf16.msra.mxu0 %v821
    %2652 = vmatprep.subr.bf16.mxu0 %v830
    %2653 = vmatpush1.bf16.msra.mxu0 %v829
    %2654 = vmatprep.subr.bf16.mxu0 %v838
    %2655 = vmatpush1.bf16.msra.mxu0 %v837
    %2656 = vmatprep.subr.bf16.mxu0 %v846
    %2657 = vmatpush1.bf16.msra.mxu0 %v845
    %2658 = vmatprep.subr.bf16.mxu0 %v854
    %2659 = vmatpush1.bf16.msra.mxu0 %v853
    %2660 = vmatprep.subr.bf16.mxu0 %v862
    %2661 = vmatpush1.bf16.msra.mxu0 %v861
    %2662 = vmatprep.subr.bf16.mxu0 %v870
    %2663 = vmatpush1.bf16.msra.mxu0 %v869
    %2664 = vmatprep.subr.bf16.mxu0 %v878
    %2665 = vmatpush1.bf16.msra.mxu0 %v877
    %2666 = vmatprep.subr.bf16.mxu0 %v886
    %2667 = vmatpush1.bf16.msra.mxu0 %v885
    %2668 = vmatprep.subr.bf16.mxu0 %v894
    %2669 = vmatpush1.bf16.msra.mxu0 %v893
    %2670 = vmatprep.subr.bf16.mxu0 %v902
    %2671 = vmatpush1.bf16.msra.mxu0 %v901
    %2672 = vmatprep.subr.bf16.mxu0 %v910
    %2673 = vmatpush1.bf16.msra.mxu0 %v909
    %2674 = vmatprep.subr.bf16.mxu0 %v918
    %2675 = vmatpush1.bf16.msra.mxu0 %v917
    %2676 = vmatprep.subr.bf16.mxu0 %v926
    %2677 = vmatpush1.bf16.msra.mxu0 %v925
    %2678 = vmatprep.mubr.bf16.mxu0 %v2561
    %2679 = vmatmul.mubr.bf16.gmra.mrb[0].mxu0 %v2560
    %v2680 = vpop.f32.mrb[0].mxu0
    %v2681 = vadd.f32 0.0, %v2680
    %v2682 = vpop.f32.mrb[0].mxu0
    %v2683 = vadd.f32 0.0, %v2682
    %v2684 = vpop.f32.mrb[0].mxu0
    %v2685 = vpop.f32.mrb[0].mxu0
    %2686 = vdwg.mxu0
    %2687 = vmatprep.subr.bf16.mxu0 %v808
    %2688 = vmatpush1.bf16.msra.mxu0 %v807
    %2689 = vmatprep.subr.bf16.mxu0 %v816
    %2690 = vmatpush1.bf16.msra.mxu0 %v815
    %2691 = vmatprep.subr.bf16.mxu0 %v824
    %2692 = vmatpush1.bf16.msra.mxu0 %v823
    %2693 = vmatprep.subr.bf16.mxu0 %v832
    %2694 = vmatpush1.bf16.msra.mxu0 %v831
    %2695 = vmatprep.subr.bf16.mxu0 %v840
    %2696 = vmatpush1.bf16.msra.mxu0 %v839
    %2697 = vmatprep.subr.bf16.mxu0 %v848
    %2698 = vmatpush1.bf16.msra.mxu0 %v847
    %2699 = vmatprep.subr.bf16.mxu0 %v856
    %2700 = vmatpush1.bf16.msra.mxu0 %v855
    %2701 = vmatprep.subr.bf16.mxu0 %v864
    %2702 = vmatpush1.bf16.msra.mxu0 %v863
    %2703 = vmatprep.subr.bf16.mxu0 %v872
    %2704 = vmatpush1.bf16.msra.mxu0 %v871
    %2705 = vmatprep.subr.bf16.mxu0 %v880
    %2706 = vmatpush1.bf16.msra.mxu0 %v879
    %2707 = vmatprep.subr.bf16.mxu0 %v888
    %2708 = vmatpush1.bf16.msra.mxu0 %v887
    %2709 = vmatprep.subr.bf16.mxu0 %v896
    %2710 = vmatpush1.bf16.msra.mxu0 %v895
    %2711 = vmatprep.subr.bf16.mxu0 %v904
    %2712 = vmatpush1.bf16.msra.mxu0 %v903
    %2713 = vmatprep.subr.bf16.mxu0 %v912
    %2714 = vmatpush1.bf16.msra.mxu0 %v911
    %2715 = vmatprep.subr.bf16.mxu0 %v920
    %2716 = vmatpush1.bf16.msra.mxu0 %v919
    %2717 = vmatprep.subr.bf16.mxu0 %v928
    %2718 = vmatpush1.bf16.msra.mxu0 %v927
    %2719 = vmatprep.mubr.bf16.mxu0 %v2561
    %2720 = vmatmul.mubr.bf16.gmra.mrb[0].mxu0 %v2560
    %v2721 = vpop.f32.mrb[0].mxu0
    %v2722 = vadd.f32 0.0, %v2721
    %v2723 = vpop.f32.mrb[0].mxu0
    %v2724 = vadd.f32 0.0, %v2723
    %v2725 = vpop.f32.mrb[0].mxu0
    %v2726 = vpop.f32.mrb[0].mxu0
    %2727 = vdwg.mxu0
    %v2728 = vadd.f32 %v2681, %v1225
    %v2729 = vadd.f32 %v2683, %v1229
    %v2730 = vadd.f32 %v2722, %v1233
    %v2731 = vadd.f32 %v2724, %v1237
    %v2732 = vxor.u32 %v2728, 2147483648
    %v2733 = vxor.u32 %v2729, 2147483648
    %v2734 = vxor.u32 %v2730, 2147483648
    %v2735 = vmul.f32 %v2732, 1.442695
    %v2736 = vpow.pop %v2735
    %v2737 = vmul.f32 %v2733, 1.442695
    %v2738 = vpow.pop %v2737
    %v2739 = vmul.f32 %v2734, 1.442695
    %v2740 = vpow.pop %v2739
    %v2741 = vadd.f32 %v2736, 1.0
    %v2742 = vadd.f32 %v2738, 1.0
    %v2743 = vadd.f32 %v2740, 1.0
    %v2744 = vrcp.pop %v2741
    %v2745 = vmul.f32 1.0, %v2744
    %v2746 = vrcp.pop %v2742
    %v2747 = vmul.f32 1.0, %v2746
    %v2748 = vrcp.pop %v2743
    %v2749 = vmul.f32 1.0, %v2748
    %v2750 = vtanh.pop %v2731
    %v2751 = vmul.f32 %v2747, %v2507
    %v2752 = vmul.f32 %v2745, %v2750
    %v2753 = vadd.f32 %v2751, %v2752
    %v2754 = vtanh.pop %v2753
    %v2755 = vmul.f32 %v2749, %v2754
    %v2760 = vrot.slane %v2599, 1
    %v2761 = vrot.slane %v2601, 1
    %v2762 = vrot.slane %v2640, 1
    %v2763 = vrot.slane %v2642, 1
    %v2768 = vadd.f32 %v183, %v2760
    %v2769 = vadd.f32 %v185, %v2761
    %v2770 = vadd.f32 %v254, %v2762
    %v2771 = vadd.f32 %v256, %v2763
    %v2772 = vxor.u32 %v2768, 2147483648
    %v2773 = vxor.u32 %v2769, 2147483648
    %v2774 = vxor.u32 %v2770, 2147483648
    %v2775 = vmul.f32 %v2772, 1.442695
    %v2776 = vpow.pop %v2775
    %v2777 = vmul.f32 %v2773, 1.442695
    %v2778 = vpow.pop %v2777
    %v2779 = vmul.f32 %v2774, 1.442695
    %v2780 = vpow.pop %v2779
    %v2781 = vadd.f32 %v2776, 1.0
    %v2782 = vadd.f32 %v2778, 1.0
    %v2783 = vadd.f32 %v2780, 1.0
    %v2784 = vrcp.pop %v2781
    %v2785 = vmul.f32 1.0, %v2784
    %v2786 = vrcp.pop %v2782
    %v2787 = vmul.f32 1.0, %v2786
    %v2788 = vrcp.pop %v2783
    %v2789 = vmul.f32 1.0, %v2788
    %v2790 = vtanh.pop %v2771
    %v2792 = vrot.slane %v2550, 7
    %v2794 = vmul.f32 %v2787, %v2792
    %v2795 = vmul.f32 %v2785, %v2790
    %v2796 = vadd.f32 %v2794, %v2795
    %v2797 = vtanh.pop %v2796
    %v2798 = vmul.f32 %v2789, %v2797
    %v2800 = vrot.slane %v2755, 1
    %v2802 = vpack.c.bf16 %v2798, %v2798
    %v2803 = vpack.c.bf16 %v2800, %v2800
    %v2805 = vshrl.u32 %v2802, 16
    %v2807 = vrot.slane %v2805, 3
    %v2809 = vshrl.u32 %v2803, 16
    %v2811 = vrot.slane %v2809, 3
    %2814 = vmatprep.subr.bf16.mxu0 %v806
    %2815 = vmatpush1.bf16.msra.mxu0 %v805
    %2816 = vmatprep.subr.bf16.mxu0 %v814
    %2817 = vmatpush1.bf16.msra.mxu0 %v813
    %2818 = vmatprep.subr.bf16.mxu0 %v822
    %2819 = vmatpush1.bf16.msra.mxu0 %v821
    %2820 = vmatprep.subr.bf16.mxu0 %v830
    %2821 = vmatpush1.bf16.msra.mxu0 %v829
    %2822 = vmatprep.subr.bf16.mxu0 %v838
    %2823 = vmatpush1.bf16.msra.mxu0 %v837
    %2824 = vmatprep.subr.bf16.mxu0 %v846
    %2825 = vmatpush1.bf16.msra.mxu0 %v845
    %2826 = vmatprep.subr.bf16.mxu0 %v854
    %2827 = vmatpush1.bf16.msra.mxu0 %v853
    %2828 = vmatprep.subr.bf16.mxu0 %v862
    %2829 = vmatpush1.bf16.msra.mxu0 %v861
    %2830 = vmatprep.subr.bf16.mxu0 %v870
    %2831 = vmatpush1.bf16.msra.mxu0 %v869
    %2832 = vmatprep.subr.bf16.mxu0 %v878
    %2833 = vmatpush1.bf16.msra.mxu0 %v877
    %2834 = vmatprep.subr.bf16.mxu0 %v886
    %2835 = vmatpush1.bf16.msra.mxu0 %v885
    %2836 = vmatprep.subr.bf16.mxu0 %v894
    %2837 = vmatpush1.bf16.msra.mxu0 %v893
    %2838 = vmatprep.subr.bf16.mxu0 %v902
    %2839 = vmatpush1.bf16.msra.mxu0 %v901
    %2840 = vmatprep.subr.bf16.mxu0 %v910
    %2841 = vmatpush1.bf16.msra.mxu0 %v909
    %2842 = vmatprep.subr.bf16.mxu0 %v918
    %2843 = vmatpush1.bf16.msra.mxu0 %v917
    %2844 = vmatprep.subr.bf16.mxu0 %v926
    %2845 = vmatpush1.bf16.msra.mxu0 %v925
    %2846 = vmatprep.mubr.bf16.mxu0 %v2811
    %2847 = vmatmul.mubr.bf16.gmra.mrb[0].mxu0 %v2807
    %v2848 = vpop.f32.mrb[0].mxu0
    %v2849 = vadd.f32 0.0, %v2848
    %v2850 = vpop.f32.mrb[0].mxu0
    %v2851 = vadd.f32 0.0, %v2850
    %v2852 = vpop.f32.mrb[0].mxu0
    %v2853 = vpop.f32.mrb[0].mxu0
    %2854 = vdwg.mxu0
    %2855 = vmatprep.subr.bf16.mxu0 %v808
    %2856 = vmatpush1.bf16.msra.mxu0 %v807
    %2857 = vmatprep.subr.bf16.mxu0 %v816
    %2858 = vmatpush1.bf16.msra.mxu0 %v815
    %2859 = vmatprep.subr.bf16.mxu0 %v824
    %2860 = vmatpush1.bf16.msra.mxu0 %v823
    %2861 = vmatprep.subr.bf16.mxu0 %v832
    %2862 = vmatpush1.bf16.msra.mxu0 %v831
    %2863 = vmatprep.subr.bf16.mxu0 %v840
    %2864 = vmatpush1.bf16.msra.mxu0 %v839
    %2865 = vmatprep.subr.bf16.mxu0 %v848
    %2866 = vmatpush1.bf16.msra.mxu0 %v847
    %2867 = vmatprep.subr.bf16.mxu0 %v856
    %2868 = vmatpush1.bf16.msra.mxu0 %v855
    %2869 = vmatprep.subr.bf16.mxu0 %v864
    %2870 = vmatpush1.bf16.msra.mxu0 %v863
    %2871 = vmatprep.subr.bf16.mxu0 %v872
    %2872 = vmatpush1.bf16.msra.mxu0 %v871
    %2873 = vmatprep.subr.bf16.mxu0 %v880
    %2874 = vmatpush1.bf16.msra.mxu0 %v879
    %2875 = vmatprep.subr.bf16.mxu0 %v888
    %2876 = vmatpush1.bf16.msra.mxu0 %v887
    %2877 = vmatprep.subr.bf16.mxu0 %v896
    %2878 = vmatpush1.bf16.msra.mxu0 %v895
    %2879 = vmatprep.subr.bf16.mxu0 %v904
    %2880 = vmatpush1.bf16.msra.mxu0 %v903
    %2881 = vmatprep.subr.bf16.mxu0 %v912
    %2882 = vmatpush1.bf16.msra.mxu0 %v911
    %2883 = vmatprep.subr.bf16.mxu0 %v920
    %2884 = vmatpush1.bf16.msra.mxu0 %v919
    %2885 = vmatprep.subr.bf16.mxu0 %v928
    %2886 = vmatpush1.bf16.msra.mxu0 %v927
    %2887 = vmatprep.mubr.bf16.mxu0 %v2811
    %2888 = vmatmul.mubr.bf16.gmra.mrb[0].mxu0 %v2807
    %v2889 = vpop.f32.mrb[0].mxu0
    %v2890 = vadd.f32 0.0, %v2889
    %v2891 = vpop.f32.mrb[0].mxu0
    %v2892 = vadd.f32 0.0, %v2891
    %v2893 = vpop.f32.mrb[0].mxu0
    %v2894 = vpop.f32.mrb[0].mxu0
    %2895 = vdwg.mxu0
    %v2896 = vadd.f32 %v2849, %v1225
    %v2897 = vadd.f32 %v2851, %v1229
    %v2898 = vadd.f32 %v2890, %v1233
    %v2899 = vadd.f32 %v2892, %v1237
    %v2900 = vxor.u32 %v2896, 2147483648
    %v2901 = vxor.u32 %v2897, 2147483648
    %v2902 = vxor.u32 %v2898, 2147483648
    %v2903 = vmul.f32 %v2900, 1.442695
    %v2904 = vpow.pop %v2903
    %v2905 = vmul.f32 %v2901, 1.442695
    %v2906 = vpow.pop %v2905
    %v2907 = vmul.f32 %v2902, 1.442695
    %v2908 = vpow.pop %v2907
    %v2909 = vadd.f32 %v2904, 1.0
    %v2910 = vadd.f32 %v2906, 1.0
    %v2911 = vadd.f32 %v2908, 1.0
    %v2912 = vrcp.pop %v2909
    %v2913 = vmul.f32 1.0, %v2912
    %v2914 = vrcp.pop %v2910
    %v2915 = vmul.f32 1.0, %v2914
    %v2916 = vrcp.pop %v2911
    %v2917 = vmul.f32 1.0, %v2916
    %v2918 = vtanh.pop %v2899
    %v2919 = vmul.f32 %v2915, %v2753
    %v2920 = vmul.f32 %v2913, %v2918
    %v2921 = vadd.f32 %v2919, %v2920
    %v2922 = vtanh.pop %v2921
    %v2923 = vmul.f32 %v2917, %v2922
    %v2924 = vld [vmem:[%s5] sm:$0x1]
    %v2925 = vmul.f32 %v2923, %v2924
    %vm2926 = vcmask 1040384
    %v2927 = vsel %vm2926, %v2925, 0.0
    %2928 = vadd.xlane.f32.xlu0 %v2927
    %v2929 = vpop.xlane.xlu0 %2928
    %v2930 = vld [vmem:[#allocation2] sm:$0x1]
    %v2931 = vadd.f32 %v2929, %v2930
    %vm2932 = vcmask 0
    %2933 = vst.msk [vmem:[#allocation9] sm:$0x1] %vm2932, %v2931
    // Predicated region
    $region42: #{tpu_custom_call.1} parent=1 // pred_check
      _
    $region43: #{tpu_custom_call.1} parent=1 // pred_check_branch
      %2935 = sbr.rel (0) target = $region45
    $region44: #{tpu_custom_call.1} parent=1 // pred_region
      %s2937 = ssub.s32 16, 16
      %2938 = vsyncadd [#allocation5], %s2937
      %s2940 = sshll.u32 [#allocation9], 4
      %s2941 = int_to_ptr.vmem [resolvable:$true] %s2940
      %2943 = dma.vmem_to_hbm [thread:$0]  %s2941, 16, %s7, [#allocation5]
    $region45: #{tpu_custom_call.1} parent=1 // pred_fallthru
      _
    // Predicated region
    $region46: #{tpu_custom_call.1} parent=1 // pred_check
      _
    $region47: #{tpu_custom_call.1} parent=1 // pred_check_branch
      %2945 = sbr.rel (0) target = $region49
    $region48: #{tpu_custom_call.1} parent=1 // pred_region
      %2946 = dma.done [#allocation5], 16
    $region49: #{tpu_custom_call.1} parent=1 // pred_fallthru
      _
    %2947 = vsyncpa [#allocation4], 1
    %2948 = vsyncpa [#allocation7], 1
    %2949 = vsyncpa [#allocation5], 1

</llo_original>
